<compile_context>
chip_gen: v7x
topology: tpu7x:2x2x1
jax: 0.10.0
libtpu: 0.0.40
codegen_flags: <defaults>
</compile_context>

<pallas_src>
import jax
import jax.numpy as jnp
import numpy as np
from jax.experimental import pallas as pl
from jax.experimental.pallas import tpu as pltpu

# Highest matmul precision so the Pallas kernel and the pure-JAX reference
# agree tightly in f32 (negligible cost at this size).
jax.config.update("jax_default_matmul_precision", "highest")


# ----------------------------------------------------------------------------
# In-kernel helpers (operate on VMEM values, shapes are static).
# ----------------------------------------------------------------------------
def _conv_relu(x, w_ref, b_ref, K, pad):
    """Conv1d(+bias)+ReLU on a (L, Cin) value via one im2col MXU matmul.

    w_ref holds the weight reshaped to (K*Cin, Cout); b_ref is (1, Cout).
    """
    cin = x.shape[1]
    if pad:
        z = jnp.zeros((pad, cin), jnp.float32)
        x = jnp.concatenate([z, x, z], axis=0)
    lout = x.shape[0] - K + 1
    # im2col: K shifted views concatenated on the lane axis -> single matmul.
    cols = jnp.concatenate([x[k:k + lout, :] for k in range(K)], axis=1)
    acc = jnp.dot(cols, w_ref[...], preferred_element_type=jnp.float32)
    return jnp.maximum(acc + b_ref[...], 0.0)


def _maxpool2(a, pad):
    """MaxPool1d(kernel=2, stride=2, padding=pad) on a (L, C) value.

    `a` is post-ReLU (>= 0), so zero padding is equivalent to PyTorch's -inf
    padding.  The stride-2 row selection is done with an exact 0/1 matrix on
    the (idle) MXU -- no VMEM scratch, no strided stores/loads.
    """
    L, C = a.shape
    lpool = (L + 2 * pad - 2) // 2 + 1
    if pad:
        a = jnp.concatenate([jnp.zeros((pad, C), jnp.float32), a], axis=0)
        L = L + pad
    pairs = jnp.maximum(a[:L - 1, :], a[1:, :])          # pairs[j] = max(a[j], a[j+1])
    r = jax.lax.broadcasted_iota(jnp.int32, (lpool, L - 1), 0)
    c = jax.lax.broadcasted_iota(jnp.int32, (lpool, L - 1), 1)
    sel = jnp.where(c == 2 * r, 1.0, 0.0)                # picks pairs[2i] exactly
    return jnp.dot(sel, pairs, preferred_element_type=jnp.float32)


# ----------------------------------------------------------------------------
# Fused kernel: conv1 -> conv2 -> conv3 -> collapsed FC head, one batch
# element per grid step.
# ----------------------------------------------------------------------------
def _cnn_fused_kernel(x_ref, w1_ref, b1_ref, w2_ref, b2_ref, w3_ref, b3_ref,
                      wfc_ref, bfc_ref, o_ref):
    x = x_ref[0]                                                        # (120, 4)
    a1 = _maxpool2(_conv_relu(x, w1_ref, b1_ref, K=5, pad=1), pad=0)    # (59, 32)
    a2 = _maxpool2(_conv_relu(a1, w2_ref, b2_ref, K=3, pad=1), pad=0)   # (29, 64)
    a3 = _maxpool2(_conv_relu(a2, w3_ref, b3_ref, K=3, pad=1), pad=1)   # (15, 128)
    # Collapsed FC head: y = sum(a3 * Wfc) + bfc.  Wfc already contains the
    # fc1@fc2 product AND the channel-major-flatten permutation, laid out in
    # the kernel's (length, channel) order.
    partial = jnp.sum(a3 * wfc_ref[...], axis=0, keepdims=True)         # (1, 128)
    total = jnp.sum(partial, axis=1, keepdims=True)                     # (1, 1)
    o_ref[0] = total + bfc_ref[...]


def cnn_forward(x_ncl, params):
    """x_ncl: (N, C, L) like torch.  Returns (N, 1)."""
    N, cin, L = x_ncl.shape
    x_nlc = jnp.transpose(x_ncl, (0, 2, 1))                 # NCL -> NLC (tiny, once)

    w1, b1 = params["w1"], params["b1"]                     # (K, Cin, Cout) layout
    w2, b2 = params["w2"], params["b2"]
    w3, b3 = params["w3"], params["b3"]
    k1, _, c1 = w1.shape
    k2, _, c2 = w2.shape
    k3, _, c3 = w3.shape
    w1f = w1.reshape(k1 * cin, c1)                          # im2col weight layout
    w2f = w2.reshape(k2 * c1, c2)
    w3f = w3.reshape(k3 * c2, c3)

    # Collapse fc1/fc2 (exact: no nonlinearity between them in forward()) and
    # fold PyTorch's channel-major flatten (index = c*L3 + l) into the weight.
    l3 = params["fc1_w"].shape[1] // c3                     # 15
    w_comb = params["fc1_w"].T @ params["fc2_w"].T          # (c3*l3, 1)
    wfc = w_comb.reshape(c3, l3).T                          # (l3, c3): wfc[l,c] = w_comb[c*l3+l]
    bfc = (params["fc1_b"] @ params["fc2_w"].T + params["fc2_b"]).reshape(1, 1)

    out = pl.pallas_call(
        _cnn_fused_kernel,
        out_shape=jax.ShapeDtypeStruct((N, 1, 1), jnp.float32),
        grid=(N,),
        in_specs=[
            pl.BlockSpec((1, L, cin), lambda n: (n, 0, 0)),
            # Weights/biases: constant index_maps -> resident across batch steps.
            pl.BlockSpec(w1f.shape, lambda n: (0, 0)),
            pl.BlockSpec((1, c1), lambda n: (0, 0)),
            pl.BlockSpec(w2f.shape, lambda n: (0, 0)),
            pl.BlockSpec((1, c2), lambda n: (0, 0)),
            pl.BlockSpec(w3f.shape, lambda n: (0, 0)),
            pl.BlockSpec((1, c3), lambda n: (0, 0)),
            pl.BlockSpec(wfc.shape, lambda n: (0, 0)),
            pl.BlockSpec((1, 1), lambda n: (0, 0)),
        ],
        out_specs=pl.BlockSpec((1, 1, 1), lambda n: (n, 0, 0)),
        compiler_params=pltpu.CompilerParams(dimension_semantics=("parallel",)),
    )(x_nlc, w1f, b1.reshape(1, c1), w2f, b2.reshape(1, c2),
      w3f, b3.reshape(1, c3), wfc, bfc)
    # NOTE: if batch grows well beyond a few elements, block several batch
    # rows per grid step instead of 1 to amortize per-step overhead.
    return out.reshape(N, 1)


# ----------------------------------------------------------------------------
# Pure-JAX reference for correctness checking.
# ----------------------------------------------------------------------------
def ref_forward(x_ncl, params):
    def conv1d(x, w_kio, b, pad):
        w_oik = jnp.transpose(w_kio, (2, 1, 0))              # (O, I, K)
        y = jax.lax.conv_general_dilated(
            x, w_oik, window_strides=(1,), padding=[(pad, pad)],
            dimension_numbers=("NCH", "OIH", "NCH"))
        return y + b[None, :, None]

    def maxpool(x, pad):
        return jax.lax.reduce_window(
            x, -jnp.inf, jax.lax.max, (1, 1, 2), (1, 1, 2),
            padding=[(0, 0), (0, 0), (pad, pad)])

    out = x_ncl
    for w, b, ppad in ((params["w1"], params["b1"], 0),
                       (params["w2"], params["b2"], 0),
                       (params["w3"], params["b3"], 1)):
        out = maxpool(jax.nn.relu(conv1d(out, w, b, 1)), ppad)
    out = out.reshape(out.shape[0], -1)
    out = out @ params["fc1_w"].T + params["fc1_b"]
    out = out @ params["fc2_w"].T + params["fc2_b"]
    return out


if __name__ == "__main__":
    N, N_features, L = 2, 4, 120   # L=120 -> 59 -> 29 -> 15, matching fc1 = 128*15

    key = jax.random.PRNGKey(0)
    ks = jax.random.split(key, 11)

    def uinit(k, shape, fan_in):
        lim = 1.0 / np.sqrt(fan_in)
        return jax.random.uniform(k, shape, jnp.float32, -lim, lim)

    params = {
        # conv weights stored as (K, Cin, Cout) for the NLC kernel layout
        "w1": uinit(ks[0], (5, N_features, 32), N_features * 5),
        "b1": uinit(ks[1], (32,), N_features * 5),
        "w2": uinit(ks[2], (3, 32, 64), 32 * 3),
        "b2": uinit(ks[3], (64,), 32 * 3),
        "w3": uinit(ks[4], (3, 64, 128), 64 * 3),
        "b3": uinit(ks[5], (128,), 64 * 3),
        # fc weights in PyTorch (out_features, in_features) convention
        "fc1_w": uinit(ks[6], (8, 128 * 15), 128 * 15),
        "fc1_b": uinit(ks[7], (8,), 128 * 15),
        "fc2_w": uinit(ks[8], (1, 8), 8),
        "fc2_b": uinit(ks[9], (1,), 8),
    }

    x = jax.random.normal(ks[10], (N, N_features, L), jnp.float32)  # NCL like torch

    y = jax.block_until_ready(cnn_forward(x, params))
    y_ref = jax.block_until_ready(ref_forward(x, params))

    assert y.shape == (N, 1), y.shape
    np.testing.assert_allclose(np.asarray(y), np.asarray(y_ref),
                               rtol=1e-3, atol=1e-3)
    # TODO(synk): training-mode Dropout (p=0.4) not implemented; eval-mode identity used.
    print("KERNEL_OK")
</pallas_src>

<mosaic_0001>
module attributes {stable_mosaic.version = 11 : i64} {
  func.func @_cnn_fused_kernel(%arg0: i32, %arg1: memref<1x120x4xf32, #tpu.memory_space<vmem>>, %arg2: memref<20x32xf32, #tpu.memory_space<vmem>>, %arg3: memref<1x32xf32, #tpu.memory_space<vmem>>, %arg4: memref<96x64xf32, #tpu.memory_space<vmem>>, %arg5: memref<1x64xf32, #tpu.memory_space<vmem>>, %arg6: memref<192x128xf32, #tpu.memory_space<vmem>>, %arg7: memref<1x128xf32, #tpu.memory_space<vmem>>, %arg8: memref<15x128xf32, #tpu.memory_space<vmem>>, %arg9: memref<1x1xf32, #tpu.memory_space<vmem>>, %arg10: memref<1x1x1xf32, #tpu.memory_space<vmem>>) attributes {dimension_semantics = [#tpu.dimension_semantics<parallel>], iteration_bounds = array<i64: 2>, scalar_prefetch = 0 : i64, scratch_operands = 0 : i64, tpu.core_type = #tpu.core_type<tc>, window_params = [{transform_indices = @transform_0, window_bounds = array<i64: 1, 120, 4>}, {pipeline_mode = #tpu.pipeline_mode<synchronous>, transform_indices = @transform_1, window_bounds = array<i64: 20, 32>}, {pipeline_mode = #tpu.pipeline_mode<synchronous>, transform_indices = @transform_2, window_bounds = array<i64: 1, 32>}, {pipeline_mode = #tpu.pipeline_mode<synchronous>, transform_indices = @transform_3, window_bounds = array<i64: 96, 64>}, {pipeline_mode = #tpu.pipeline_mode<synchronous>, transform_indices = @transform_4, window_bounds = array<i64: 1, 64>}, {pipeline_mode = #tpu.pipeline_mode<synchronous>, transform_indices = @transform_5, window_bounds = array<i64: 192, 128>}, {pipeline_mode = #tpu.pipeline_mode<synchronous>, transform_indices = @transform_6, window_bounds = array<i64: 1, 128>}, {pipeline_mode = #tpu.pipeline_mode<synchronous>, transform_indices = @transform_7, window_bounds = array<i64: 15, 128>}, {pipeline_mode = #tpu.pipeline_mode<synchronous>, transform_indices = @transform_8, window_bounds = array<i64: 1, 1>}, {transform_indices = @transform_9, window_bounds = array<i64: 1, 1, 1>}]} {
    %c0 = arith.constant 0 : index
    %c0_0 = arith.constant 0 : index
    %c0_1 = arith.constant 0 : index
    %0 = vector.load %arg1[%c0, %c0_0, %c0_1] : memref<1x120x4xf32, #tpu.memory_space<vmem>>, vector<1x120x4xf32>
    %1 = vector.shape_cast %0 : vector<1x120x4xf32> to vector<120x4xf32>
    %cst = arith.constant 0.000000e+00 : f32
    %2 = vector.broadcast %cst : f32 to vector<1x4xf32>
    %3 = tpu.concatenate %2, %1, %2 in 0 : vector<1x4xf32>, vector<120x4xf32>, vector<1x4xf32> -> vector<122x4xf32>
    %4 = vector.extract_strided_slice %3 {offsets = [0, 0], sizes = [118, 4], strides = [1, 1]} : vector<122x4xf32> to vector<118x4xf32>
    %5 = vector.extract_strided_slice %3 {offsets = [1, 0], sizes = [118, 4], strides = [1, 1]} : vector<122x4xf32> to vector<118x4xf32>
    %6 = vector.extract_strided_slice %3 {offsets = [2, 0], sizes = [118, 4], strides = [1, 1]} : vector<122x4xf32> to vector<118x4xf32>
    %7 = vector.extract_strided_slice %3 {offsets = [3, 0], sizes = [118, 4], strides = [1, 1]} : vector<122x4xf32> to vector<118x4xf32>
    %8 = vector.extract_strided_slice %3 {offsets = [4, 0], sizes = [118, 4], strides = [1, 1]} : vector<122x4xf32> to vector<118x4xf32>
    %9 = tpu.concatenate %4, %5, %6, %7, %8 in 1 : vector<118x4xf32>, vector<118x4xf32>, vector<118x4xf32>, vector<118x4xf32>, vector<118x4xf32> -> vector<118x20xf32>
    %c0_2 = arith.constant 0 : index
    %c0_3 = arith.constant 0 : index
    %10 = vector.load %arg2[%c0_2, %c0_3] : memref<20x32xf32, #tpu.memory_space<vmem>>, vector<20x32xf32>
    %cst_4 = arith.constant dense<0.000000e+00> : vector<118x32xf32>
    %11 = tpu.matmul %9, %10, %cst_4 {dimension_numbers = #tpu.dot_dimension_numbers<[1], [0], [0], [1], [0, 0, 1, 1], [], []>, precision = #tpu.contract_precision<fp32>} : vector<118x20xf32>, vector<20x32xf32>, vector<118x32xf32> -> vector<118x32xf32>
    %c0_5 = arith.constant 0 : index
    %c0_6 = arith.constant 0 : index
    %12 = vector.load %arg3[%c0_5, %c0_6] : memref<1x32xf32, #tpu.memory_space<vmem>>, vector<1x32xf32>
    %13 = vector.broadcast %12 : vector<1x32xf32> to vector<118x32xf32>
    %14 = arith.addf %11, %13 : vector<118x32xf32>
    %cst_7 = arith.constant 0.000000e+00 : f32
    %15 = vector.broadcast %cst_7 : f32 to vector<118x32xf32>
    %16 = arith.maximumf %14, %15 : vector<118x32xf32>
    %17 = vector.extract_strided_slice %16 {offsets = [0, 0], sizes = [117, 32], strides = [1, 1]} : vector<118x32xf32> to vector<117x32xf32>
    %18 = vector.extract_strided_slice %16 {offsets = [1, 0], sizes = [117, 32], strides = [1, 1]} : vector<118x32xf32> to vector<117x32xf32>
    %19 = arith.maximumf %17, %18 : vector<117x32xf32>
    %20 = tpu.iota {dimensions = array<i32: 0>} : vector<59x117xi32>
    %21 = tpu.iota {dimensions = array<i32: 1>} : vector<59x117xi32>
    %c2_i32 = arith.constant 2 : i32
    %22 = vector.broadcast %c2_i32 : i32 to vector<59x117xi32>
    %23 = arith.muli %22, %20 : vector<59x117xi32>
    %24 = arith.cmpi eq, %21, %23 : vector<59x117xi32>
    %cst_8 = arith.constant 1.000000e+00 : f32
    %cst_9 = arith.constant 0.000000e+00 : f32
    %25 = vector.broadcast %cst_8 : f32 to vector<59x117xf32>
    %26 = vector.broadcast %cst_9 : f32 to vector<59x117xf32>
    %27 = arith.select %24, %25, %26 : vector<59x117xi1>, vector<59x117xf32>
    %cst_10 = arith.constant dense<0.000000e+00> : vector<59x32xf32>
    %28 = tpu.matmul %27, %19, %cst_10 {dimension_numbers = #tpu.dot_dimension_numbers<[1], [0], [0], [1], [0, 0, 1, 1], [], []>, precision = #tpu.contract_precision<fp32>} : vector<59x117xf32>, vector<117x32xf32>, vector<59x32xf32> -> vector<59x32xf32>
    %cst_11 = arith.constant 0.000000e+00 : f32
    %29 = vector.broadcast %cst_11 : f32 to vector<1x32xf32>
    %30 = tpu.concatenate %29, %28, %29 in 0 : vector<1x32xf32>, vector<59x32xf32>, vector<1x32xf32> -> vector<61x32xf32>
    %31 = vector.extract_strided_slice %30 {offsets = [0, 0], sizes = [59, 32], strides = [1, 1]} : vector<61x32xf32> to vector<59x32xf32>
    %32 = vector.extract_strided_slice %30 {offsets = [1, 0], sizes = [59, 32], strides = [1, 1]} : vector<61x32xf32> to vector<59x32xf32>
    %33 = vector.extract_strided_slice %30 {offsets = [2, 0], sizes = [59, 32], strides = [1, 1]} : vector<61x32xf32> to vector<59x32xf32>
    %34 = tpu.concatenate %31, %32, %33 in 1 : vector<59x32xf32>, vector<59x32xf32>, vector<59x32xf32> -> vector<59x96xf32>
    %c0_12 = arith.constant 0 : index
    %c0_13 = arith.constant 0 : index
    %35 = vector.load %arg4[%c0_12, %c0_13] : memref<96x64xf32, #tpu.memory_space<vmem>>, vector<96x64xf32>
    %cst_14 = arith.constant dense<0.000000e+00> : vector<59x64xf32>
    %36 = tpu.matmul %34, %35, %cst_14 {dimension_numbers = #tpu.dot_dimension_numbers<[1], [0], [0], [1], [0, 0, 1, 1], [], []>, precision = #tpu.contract_precision<fp32>} : vector<59x96xf32>, vector<96x64xf32>, vector<59x64xf32> -> vector<59x64xf32>
    %c0_15 = arith.constant 0 : index
    %c0_16 = arith.constant 0 : index
    %37 = vector.load %arg5[%c0_15, %c0_16] : memref<1x64xf32, #tpu.memory_space<vmem>>, vector<1x64xf32>
    %38 = vector.broadcast %37 : vector<1x64xf32> to vector<59x64xf32>
    %39 = arith.addf %36, %38 : vector<59x64xf32>
    %cst_17 = arith.constant 0.000000e+00 : f32
    %40 = vector.broadcast %cst_17 : f32 to vector<59x64xf32>
    %41 = arith.maximumf %39, %40 : vector<59x64xf32>
    %42 = vector.extract_strided_slice %41 {offsets = [0, 0], sizes = [58, 64], strides = [1, 1]} : vector<59x64xf32> to vector<58x64xf32>
    %43 = vector.extract_strided_slice %41 {offsets = [1, 0], sizes = [58, 64], strides = [1, 1]} : vector<59x64xf32> to vector<58x64xf32>
    %44 = arith.maximumf %42, %43 : vector<58x64xf32>
    %45 = tpu.iota {dimensions = array<i32: 0>} : vector<29x58xi32>
    %46 = tpu.iota {dimensions = array<i32: 1>} : vector<29x58xi32>
    %c2_i32_18 = arith.constant 2 : i32
    %47 = vector.broadcast %c2_i32_18 : i32 to vector<29x58xi32>
    %48 = arith.muli %47, %45 : vector<29x58xi32>
    %49 = arith.cmpi eq, %46, %48 : vector<29x58xi32>
    %cst_19 = arith.constant 1.000000e+00 : f32
    %cst_20 = arith.constant 0.000000e+00 : f32
    %50 = vector.broadcast %cst_19 : f32 to vector<29x58xf32>
    %51 = vector.broadcast %cst_20 : f32 to vector<29x58xf32>
    %52 = arith.select %49, %50, %51 : vector<29x58xi1>, vector<29x58xf32>
    %cst_21 = arith.constant dense<0.000000e+00> : vector<29x64xf32>
    %53 = tpu.matmul %52, %44, %cst_21 {dimension_numbers = #tpu.dot_dimension_numbers<[1], [0], [0], [1], [0, 0, 1, 1], [], []>, precision = #tpu.contract_precision<fp32>} : vector<29x58xf32>, vector<58x64xf32>, vector<29x64xf32> -> vector<29x64xf32>
    %cst_22 = arith.constant 0.000000e+00 : f32
    %54 = vector.broadcast %cst_22 : f32 to vector<1x64xf32>
    %55 = tpu.concatenate %54, %53, %54 in 0 : vector<1x64xf32>, vector<29x64xf32>, vector<1x64xf32> -> vector<31x64xf32>
    %56 = vector.extract_strided_slice %55 {offsets = [0, 0], sizes = [29, 64], strides = [1, 1]} : vector<31x64xf32> to vector<29x64xf32>
    %57 = vector.extract_strided_slice %55 {offsets = [1, 0], sizes = [29, 64], strides = [1, 1]} : vector<31x64xf32> to vector<29x64xf32>
    %58 = vector.extract_strided_slice %55 {offsets = [2, 0], sizes = [29, 64], strides = [1, 1]} : vector<31x64xf32> to vector<29x64xf32>
    %59 = tpu.concatenate %56, %57, %58 in 1 : vector<29x64xf32>, vector<29x64xf32>, vector<29x64xf32> -> vector<29x192xf32>
    %c0_23 = arith.constant 0 : index
    %c0_24 = arith.constant 0 : index
    %60 = vector.load %arg6[%c0_23, %c0_24] : memref<192x128xf32, #tpu.memory_space<vmem>>, vector<192x128xf32>
    %cst_25 = arith.constant dense<0.000000e+00> : vector<29x128xf32>
    %61 = tpu.matmul %59, %60, %cst_25 {dimension_numbers = #tpu.dot_dimension_numbers<[1], [0], [0], [1], [0, 0, 1, 1], [], []>, precision = #tpu.contract_precision<fp32>} : vector<29x192xf32>, vector<192x128xf32>, vector<29x128xf32> -> vector<29x128xf32>
    %c0_26 = arith.constant 0 : index
    %c0_27 = arith.constant 0 : index
    %62 = vector.load %arg7[%c0_26, %c0_27] : memref<1x128xf32, #tpu.memory_space<vmem>>, vector<1x128xf32>
    %63 = vector.broadcast %62 : vector<1x128xf32> to vector<29x128xf32>
    %64 = arith.addf %61, %63 : vector<29x128xf32>
    %cst_28 = arith.constant 0.000000e+00 : f32
    %65 = vector.broadcast %cst_28 : f32 to vector<29x128xf32>
    %66 = arith.maximumf %64, %65 : vector<29x128xf32>
    %cst_29 = arith.constant 0.000000e+00 : f32
    %67 = vector.broadcast %cst_29 : f32 to vector<1x128xf32>
    %68 = tpu.concatenate %67, %66 in 0 : vector<1x128xf32>, vector<29x128xf32> -> vector<30x128xf32>
    %69 = vector.extract_strided_slice %68 {offsets = [0, 0], sizes = [29, 128], strides = [1, 1]} : vector<30x128xf32> to vector<29x128xf32>
    %70 = vector.extract_strided_slice %68 {offsets = [1, 0], sizes = [29, 128], strides = [1, 1]} : vector<30x128xf32> to vector<29x128xf32>
    %71 = arith.maximumf %69, %70 : vector<29x128xf32>
    %72 = tpu.iota {dimensions = array<i32: 0>} : vector<15x29xi32>
    %73 = tpu.iota {dimensions = array<i32: 1>} : vector<15x29xi32>
    %c2_i32_30 = arith.constant 2 : i32
    %74 = vector.broadcast %c2_i32_30 : i32 to vector<15x29xi32>
    %75 = arith.muli %74, %72 : vector<15x29xi32>
    %76 = arith.cmpi eq, %73, %75 : vector<15x29xi32>
    %cst_31 = arith.constant 1.000000e+00 : f32
    %cst_32 = arith.constant 0.000000e+00 : f32
    %77 = vector.broadcast %cst_31 : f32 to vector<15x29xf32>
    %78 = vector.broadcast %cst_32 : f32 to vector<15x29xf32>
    %79 = arith.select %76, %77, %78 : vector<15x29xi1>, vector<15x29xf32>
    %cst_33 = arith.constant dense<0.000000e+00> : vector<15x128xf32>
    %80 = tpu.matmul %79, %71, %cst_33 {dimension_numbers = #tpu.dot_dimension_numbers<[1], [0], [0], [1], [0, 0, 1, 1], [], []>, precision = #tpu.contract_precision<fp32>} : vector<15x29xf32>, vector<29x128xf32>, vector<15x128xf32> -> vector<15x128xf32>
    %c0_34 = arith.constant 0 : index
    %c0_35 = arith.constant 0 : index
    %81 = vector.load %arg8[%c0_34, %c0_35] : memref<15x128xf32, #tpu.memory_space<vmem>>, vector<15x128xf32>
    %82 = arith.mulf %80, %81 : vector<15x128xf32>
    %cst_36 = arith.constant dense<0.000000e+00> : vector<128xf32>
    %83 = vector.multi_reduction <add>, %82, %cst_36 [0] : vector<15x128xf32> to vector<128xf32>
    %84 = vector.shape_cast %83 : vector<128xf32> to vector<1x128xf32>
    %cst_37 = arith.constant dense<0.000000e+00> : vector<1xf32>
    %85 = vector.multi_reduction <add>, %84, %cst_37 [1] : vector<1x128xf32> to vector<1xf32>
    %86 = vector.shape_cast %85 : vector<1xf32> to vector<1x1xf32>
    %c0_38 = arith.constant 0 : index
    %c0_39 = arith.constant 0 : index
    %87 = vector.load %arg9[%c0_38, %c0_39] : memref<1x1xf32, #tpu.memory_space<vmem>>, vector<1x1xf32>
    %88 = arith.addf %86, %87 : vector<1x1xf32>
    %c0_40 = arith.constant 0 : index
    %c0_41 = arith.constant 0 : index
    %c0_42 = arith.constant 0 : index
    %89 = vector.load %arg10[%c0_40, %c0_41, %c0_42] : memref<1x1x1xf32, #tpu.memory_space<vmem>>, vector<1x1x1xf32>
    %90 = vector.shape_cast %89 : vector<1x1x1xf32> to vector<1x1xf32>
    %91 = vector.shape_cast %88 : vector<1x1xf32> to vector<1x1x1xf32>
    tpu.vector_store %arg10[%c0_40, %c0_41, %c0_42], %91 {strides = array<i32>} : memref<1x1x1xf32, #tpu.memory_space<vmem>>, vector<1x1x1xf32>,
    return
  }
  func.func @transform_0(%arg0: i32) -> (i32, i32, i32) {
    %c0_i32 = arith.constant 0 : i32
    %c0_i32_0 = arith.constant 0 : i32
    %c0_i32_1 = arith.constant 0 : i32
    return %arg0, %c0_i32, %c0_i32_0 : i32, i32, i32
  }
  func.func @transform_1(%arg0: i32) -> (i32, i32) {
    %c0_i32 = arith.constant 0 : i32
    %c0_i32_0 = arith.constant 0 : i32
    %c0_i32_1 = arith.constant 0 : i32
    return %c0_i32, %c0_i32_0 : i32, i32
  }
  func.func @transform_2(%arg0: i32) -> (i32, i32) {
    %c0_i32 = arith.constant 0 : i32
    %c0_i32_0 = arith.constant 0 : i32
    %c0_i32_1 = arith.constant 0 : i32
    return %c0_i32, %c0_i32_0 : i32, i32
  }
  func.func @transform_3(%arg0: i32) -> (i32, i32) {
    %c0_i32 = arith.constant 0 : i32
    %c0_i32_0 = arith.constant 0 : i32
    %c0_i32_1 = arith.constant 0 : i32
    return %c0_i32, %c0_i32_0 : i32, i32
  }
  func.func @transform_4(%arg0: i32) -> (i32, i32) {
    %c0_i32 = arith.constant 0 : i32
    %c0_i32_0 = arith.constant 0 : i32
    %c0_i32_1 = arith.constant 0 : i32
    return %c0_i32, %c0_i32_0 : i32, i32
  }
  func.func @transform_5(%arg0: i32) -> (i32, i32) {
    %c0_i32 = arith.constant 0 : i32
    %c0_i32_0 = arith.constant 0 : i32
    %c0_i32_1 = arith.constant 0 : i32
    return %c0_i32, %c0_i32_0 : i32, i32
  }
  func.func @transform_6(%arg0: i32) -> (i32, i32) {
    %c0_i32 = arith.constant 0 : i32
    %c0_i32_0 = arith.constant 0 : i32
    %c0_i32_1 = arith.constant 0 : i32
    return %c0_i32, %c0_i32_0 : i32, i32
  }
  func.func @transform_7(%arg0: i32) -> (i32, i32) {
    %c0_i32 = arith.constant 0 : i32
    %c0_i32_0 = arith.constant 0 : i32
    %c0_i32_1 = arith.constant 0 : i32
    return %c0_i32, %c0_i32_0 : i32, i32
  }
  func.func @transform_8(%arg0: i32) -> (i32, i32) {
    %c0_i32 = arith.constant 0 : i32
    %c0_i32_0 = arith.constant 0 : i32
    %c0_i32_1 = arith.constant 0 : i32
    return %c0_i32, %c0_i32_0 : i32, i32
  }
  func.func @transform_9(%arg0: i32) -> (i32, i32, i32) {
    %c0_i32 = arith.constant 0 : i32
    %c0_i32_0 = arith.constant 0 : i32
    %c0_i32_1 = arith.constant 0 : i32
    return %arg0, %c0_i32, %c0_i32_0 : i32, i32, i32
  }
}

</mosaic_0001>

<llo_original>
// kernel: tpu_custom_call.1
$region0: #{tpu_custom_call.1}
  #allocation0 [shape = 'u32[]', space=smem, size = 0x4, offset = 0x4, fixed_abs, tag = 'smem constant byte address 0x4 - core index']
  #allocation1 [shape = 'u32[144,128]{1,0:T(1,128)}', space=vmem, size = 0x12000, scoped, tag = 'internal scratch']
  #allocation2 [shape = 'f32[1,1]{1,0:T(1,128)S(1)}', space=vmem, size = 0x200, scoped, tag = 'scoped memory for tpu_custom_call.1']
  %s0 = inlined_call_operand.vmem [shape: f32[2,120,4], index: 0, kind: input, shape index: {}]
  %s1 = inlined_call_operand.vmem [shape: f32[20,32], index: 1, kind: input, shape index: {}]
  %s2 = inlined_call_operand.vmem [shape: f32[1,32], index: 2, kind: input, shape index: {}]
  %s3 = inlined_call_operand.vmem [shape: f32[96,64], index: 3, kind: input, shape index: {}]
  %s4 = inlined_call_operand.vmem [shape: f32[1,64], index: 4, kind: input, shape index: {}]
  %s5 = inlined_call_operand.vmem [shape: f32[192,128], index: 5, kind: input, shape index: {}]
  %s6 = inlined_call_operand.vmem [shape: f32[1,128], index: 6, kind: input, shape index: {}]
  %s7 = inlined_call_operand.vmem [shape: f32[15,128], index: 7, kind: input, shape index: {}]
  %s8 = inlined_call_operand.<no memory space> [shape: f32[1,1], index: 8, kind: input, shape index: {}]
  %s9 = inlined_call_operand.vmem [shape: f32[2,1,1], index: 9, kind: output, shape index: {}]
  %s10 = sld [smem:[#allocation0]]
  $region69: #{tpu_custom_call.1} parent=0
    _
  %s12 = ssub.s32 1, %s10
  %s13 = scalar_select 0, %s12, %s10
  %v14 = vstv %s8
  %15 = vst [vmem:[#allocation2] sm:$0x1] %v14
  loop: start=0, step=1, limit=4
  $region2: #{tpu_custom_call.1} parent=0 // loop_pre_header
    _
  $region3: #{tpu_custom_call.1} parent=0 // loop_header
    %s17 = sphi 0, %s21
    %p18 = scmp.ge.s32.totalorder %s17, 4
    %s27 = sphi 0, %s29
    %s30 = sphi 0, %s27
    %s31 = sphi 0, %s30
    %s47 = sphi 0, %s31
    %s51 = sphi 0, %s51
    %s53 = sphi 0, %s51
    %s54 = sphi 0, %s53
    %s68 = sphi 0, %s54
    %s72 = sphi 0, %s72
    %s74 = sphi 0, %s72
    %s75 = sphi 0, %s74
    %s89 = sphi 0, %s75
    %s93 = sphi 0, %s93
    %s95 = sphi 0, %s93
    %s96 = sphi 0, %s95
    %s110 = sphi 0, %s96
    %s114 = sphi 0, %s114
    %s116 = sphi 0, %s114
    %s117 = sphi 0, %s116
    %s131 = sphi 0, %s117
    %s135 = sphi 0, %s135
    %s137 = sphi 0, %s135
    %s138 = sphi 0, %s137
    %s152 = sphi 0, %s138
    %s156 = sphi 0, %s156
    %s158 = sphi 0, %s156
    %s159 = sphi 0, %s158
    %s173 = sphi 0, %s159
    %s177 = sphi 0, %s177
    %s179 = sphi 0, %s177
    %s180 = sphi 0, %s179
    %s194 = sphi 0, %s180
    %s198 = sphi 0, %s198
    %s200 = sphi 0, %s198
    %s201 = sphi 0, %s200
    %s215 = sphi 0, %s201
    %s221 = sphi 0, %s223
    %s224 = sphi 0, %s221
    %s225 = sphi 0, %s224
    %s241 = sphi 0, %s225
  $region4: #{tpu_custom_call.1} parent=0 // loop_header_branch
    %20 = sbr.rel (%p18) target = $region8
  $region5: #{tpu_custom_call.1} parent=0 // loop_body
    %s22 = ssub.s32 %s17, 1
    %s23 = ssub.s32 %s17, 2
    %s24 = sadd.s32 %s17, 1
    %s25 = ssub.s32 %s17, %s24
    %p26 = scmp.eq.s32.totalorder %s25, 0
    %s28 = sadd.s32 %s27, 1
    %s29 = scalar_select %p26, %s27, %s28
    %p32 = pneg %p26
    %p33 = scmp.eq.s32.totalorder %s17, 1
    %p34 = por %p32, %p33
    %p35 = scmp.ne.s32.totalorder %s27, %s30
    %p36 = scmp.eq.s32.totalorder %s17, 0
    %p37 = por %p35, %p36
    %p38 = scmp.ne.s32.totalorder %s27, %s30
    %p39 = scmp.eq.s32.totalorder %s22, 1
    %p40 = por %p38, %p39
    %p41 = scmp.ne.s32.totalorder %s30, %s31
    %p42 = scmp.eq.s32.totalorder %s22, 0
    %p43 = por %p41, %p42
    %p44 = scmp.ne.s32.totalorder %s30, %s31
    %p45 = scmp.eq.s32.totalorder %s23, 1
    %p46 = por %p44, %p45
    %p48 = scmp.ne.s32.totalorder %s31, %s47
    %p49 = scmp.eq.s32.totalorder %s23, 0
    %p50 = por %p48, %p49
    %s52 = sadd.s32 %s51, 1
    %p55 = scmp.eq.s32.totalorder %s17, 1
    %p56 = scmp.ne.s32.totalorder %s51, %s53
    %p57 = scmp.eq.s32.totalorder %s17, 0
    %p58 = por %p56, %p57
    %p59 = scmp.ne.s32.totalorder %s51, %s53
    %p60 = scmp.eq.s32.totalorder %s22, 1
    %p61 = por %p59, %p60
    %p62 = scmp.ne.s32.totalorder %s53, %s54
    %p63 = scmp.eq.s32.totalorder %s22, 0
    %p64 = por %p62, %p63
    %p65 = scmp.ne.s32.totalorder %s53, %s54
    %p66 = scmp.eq.s32.totalorder %s23, 1
    %p67 = por %p65, %p66
    %p69 = scmp.ne.s32.totalorder %s54, %s68
    %p70 = scmp.eq.s32.totalorder %s23, 0
    %p71 = por %p69, %p70
    %s73 = sadd.s32 %s72, 1
    %p76 = scmp.eq.s32.totalorder %s17, 1
    %p77 = scmp.ne.s32.totalorder %s72, %s74
    %p78 = scmp.eq.s32.totalorder %s17, 0
    %p79 = por %p77, %p78
    %p80 = scmp.ne.s32.totalorder %s72, %s74
    %p81 = scmp.eq.s32.totalorder %s22, 1
    %p82 = por %p80, %p81
    %p83 = scmp.ne.s32.totalorder %s74, %s75
    %p84 = scmp.eq.s32.totalorder %s22, 0
    %p85 = por %p83, %p84
    %p86 = scmp.ne.s32.totalorder %s74, %s75
    %p87 = scmp.eq.s32.totalorder %s23, 1
    %p88 = por %p86, %p87
    %p90 = scmp.ne.s32.totalorder %s75, %s89
    %p91 = scmp.eq.s32.totalorder %s23, 0
    %p92 = por %p90, %p91
    %s94 = sadd.s32 %s93, 1
    %p97 = scmp.eq.s32.totalorder %s17, 1
    %p98 = scmp.ne.s32.totalorder %s93, %s95
    %p99 = scmp.eq.s32.totalorder %s17, 0
    %p100 = por %p98, %p99
    %p101 = scmp.ne.s32.totalorder %s93, %s95
    %p102 = scmp.eq.s32.totalorder %s22, 1
    %p103 = por %p101, %p102
    %p104 = scmp.ne.s32.totalorder %s95, %s96
    %p105 = scmp.eq.s32.totalorder %s22, 0
    %p106 = por %p104, %p105
    %p107 = scmp.ne.s32.totalorder %s95, %s96
    %p108 = scmp.eq.s32.totalorder %s23, 1
    %p109 = por %p107, %p108
    %p111 = scmp.ne.s32.totalorder %s96, %s110
    %p112 = scmp.eq.s32.totalorder %s23, 0
    %p113 = por %p111, %p112
    %s115 = sadd.s32 %s114, 1
    %p118 = scmp.eq.s32.totalorder %s17, 1
    %p119 = scmp.ne.s32.totalorder %s114, %s116
    %p120 = scmp.eq.s32.totalorder %s17, 0
    %p121 = por %p119, %p120
    %p122 = scmp.ne.s32.totalorder %s114, %s116
    %p123 = scmp.eq.s32.totalorder %s22, 1
    %p124 = por %p122, %p123
    %p125 = scmp.ne.s32.totalorder %s116, %s117
    %p126 = scmp.eq.s32.totalorder %s22, 0
    %p127 = por %p125, %p126
    %p128 = scmp.ne.s32.totalorder %s116, %s117
    %p129 = scmp.eq.s32.totalorder %s23, 1
    %p130 = por %p128, %p129
    %p132 = scmp.ne.s32.totalorder %s117, %s131
    %p133 = scmp.eq.s32.totalorder %s23, 0
    %p134 = por %p132, %p133
    %s136 = sadd.s32 %s135, 1
    %p139 = scmp.eq.s32.totalorder %s17, 1
    %p140 = scmp.ne.s32.totalorder %s135, %s137
    %p141 = scmp.eq.s32.totalorder %s17, 0
    %p142 = por %p140, %p141
    %p143 = scmp.ne.s32.totalorder %s135, %s137
    %p144 = scmp.eq.s32.totalorder %s22, 1
    %p145 = por %p143, %p144
    %p146 = scmp.ne.s32.totalorder %s137, %s138
    %p147 = scmp.eq.s32.totalorder %s22, 0
    %p148 = por %p146, %p147
    %p149 = scmp.ne.s32.totalorder %s137, %s138
    %p150 = scmp.eq.s32.totalorder %s23, 1
    %p151 = por %p149, %p150
    %p153 = scmp.ne.s32.totalorder %s138, %s152
    %p154 = scmp.eq.s32.totalorder %s23, 0
    %p155 = por %p153, %p154
    %s157 = sadd.s32 %s156, 1
    %p160 = scmp.eq.s32.totalorder %s17, 1
    %p161 = scmp.ne.s32.totalorder %s156, %s158
    %p162 = scmp.eq.s32.totalorder %s17, 0
    %p163 = por %p161, %p162
    %p164 = scmp.ne.s32.totalorder %s156, %s158
    %p165 = scmp.eq.s32.totalorder %s22, 1
    %p166 = por %p164, %p165
    %p167 = scmp.ne.s32.totalorder %s158, %s159
    %p168 = scmp.eq.s32.totalorder %s22, 0
    %p169 = por %p167, %p168
    %p170 = scmp.ne.s32.totalorder %s158, %s159
    %p171 = scmp.eq.s32.totalorder %s23, 1
    %p172 = por %p170, %p171
    %p174 = scmp.ne.s32.totalorder %s159, %s173
    %p175 = scmp.eq.s32.totalorder %s23, 0
    %p176 = por %p174, %p175
    %s178 = sadd.s32 %s177, 1
    %p181 = scmp.eq.s32.totalorder %s17, 1
    %p182 = scmp.ne.s32.totalorder %s177, %s179
    %p183 = scmp.eq.s32.totalorder %s17, 0
    %p184 = por %p182, %p183
    %p185 = scmp.ne.s32.totalorder %s177, %s179
    %p186 = scmp.eq.s32.totalorder %s22, 1
    %p187 = por %p185, %p186
    %p188 = scmp.ne.s32.totalorder %s179, %s180
    %p189 = scmp.eq.s32.totalorder %s22, 0
    %p190 = por %p188, %p189
    %p191 = scmp.ne.s32.totalorder %s179, %s180
    %p192 = scmp.eq.s32.totalorder %s23, 1
    %p193 = por %p191, %p192
    %p195 = scmp.ne.s32.totalorder %s180, %s194
    %p196 = scmp.eq.s32.totalorder %s23, 0
    %p197 = por %p195, %p196
    %s199 = sadd.s32 %s198, 1
    %p202 = scmp.eq.s32.totalorder %s17, 1
    %p203 = scmp.ne.s32.totalorder %s198, %s200
    %p204 = scmp.eq.s32.totalorder %s17, 0
    %p205 = por %p203, %p204
    %p206 = scmp.ne.s32.totalorder %s198, %s200
    %p207 = scmp.eq.s32.totalorder %s22, 1
    %p208 = por %p206, %p207
    %p209 = scmp.ne.s32.totalorder %s200, %s201
    %p210 = scmp.eq.s32.totalorder %s22, 0
    %p211 = por %p209, %p210
    %p212 = scmp.ne.s32.totalorder %s200, %s201
    %p213 = scmp.eq.s32.totalorder %s23, 1
    %p214 = por %p212, %p213
    %p216 = scmp.ne.s32.totalorder %s201, %s215
    %p217 = scmp.eq.s32.totalorder %s23, 0
    %p218 = por %p216, %p217
    %s219 = ssub.s32 %s17, %s24
    %p220 = scmp.eq.s32.totalorder %s219, 0
    %s222 = sadd.s32 %s221, 1
    %s223 = scalar_select %p220, %s221, %s222
    %p226 = pneg %p220
    %p227 = scmp.eq.s32.totalorder %s17, 1
    %p228 = por %p226, %p227
    %p229 = scmp.ne.s32.totalorder %s221, %s224
    %p230 = scmp.eq.s32.totalorder %s17, 0
    %p231 = por %p229, %p230
    %p232 = scmp.ne.s32.totalorder %s221, %s224
    %p233 = scmp.eq.s32.totalorder %s22, 1
    %p234 = por %p232, %p233
    %p235 = scmp.ne.s32.totalorder %s224, %s225
    %p236 = scmp.eq.s32.totalorder %s22, 0
    %p237 = por %p235, %p236
    %p238 = scmp.ne.s32.totalorder %s224, %s225
    %p239 = scmp.eq.s32.totalorder %s23, 1
    %p240 = por %p238, %p239
    %p242 = scmp.ne.s32.totalorder %s225, %s241
    %p243 = scmp.eq.s32.totalorder %s23, 0
    %p244 = por %p242, %p243
    %p245 = scmp.le.s32.totalorder 1, %s17
    %p246 = scmp.lt.s32.totalorder %s17, 3
    %p247 = pnand %p245, %p246
    %p248 = pneg %p247
    // Predicated region
    $region9: #{tpu_custom_call.1} parent=5 // pred_check
      _
    $region10: #{tpu_custom_call.1} parent=5 // pred_check_branch
      %250 = sbr.rel (%p247) target = $region12
    $region11: #{tpu_custom_call.1} parent=5 // pred_region
      %s251 = ssub.s32 %s17, 1
      // Predicated region
      $region13: #{tpu_custom_call.1} parent=11 // pred_check
        %p252 = pneg %p64
      $region14: #{tpu_custom_call.1} parent=11 // pred_check_branch
        %254 = sbr.rel (%p252) target = $region16
      $region15: #{tpu_custom_call.1} parent=11 // pred_region
        _
      $region16: #{tpu_custom_call.1} parent=11 // pred_fallthru
        _
      // Predicated region
      $region17: #{tpu_custom_call.1} parent=11 // pred_check
        %p255 = pneg %p85
      $region18: #{tpu_custom_call.1} parent=11 // pred_check_branch
        %257 = sbr.rel (%p255) target = $region20
      $region19: #{tpu_custom_call.1} parent=11 // pred_region
        _
      $region20: #{tpu_custom_call.1} parent=11 // pred_fallthru
        _
      // Predicated region
      $region21: #{tpu_custom_call.1} parent=11 // pred_check
        %p258 = pneg %p106
      $region22: #{tpu_custom_call.1} parent=11 // pred_check_branch
        %260 = sbr.rel (%p258) target = $region24
      $region23: #{tpu_custom_call.1} parent=11 // pred_region
        _
      $region24: #{tpu_custom_call.1} parent=11 // pred_fallthru
        _
      // Predicated region
      $region25: #{tpu_custom_call.1} parent=11 // pred_check
        %p261 = pneg %p127
      $region26: #{tpu_custom_call.1} parent=11 // pred_check_branch
        %263 = sbr.rel (%p261) target = $region28
      $region27: #{tpu_custom_call.1} parent=11 // pred_region
        _
      $region28: #{tpu_custom_call.1} parent=11 // pred_fallthru
        _
      // Predicated region
      $region29: #{tpu_custom_call.1} parent=11 // pred_check
        %p264 = pneg %p148
      $region30: #{tpu_custom_call.1} parent=11 // pred_check_branch
        %266 = sbr.rel (%p264) target = $region32
      $region31: #{tpu_custom_call.1} parent=11 // pred_region
        _
      $region32: #{tpu_custom_call.1} parent=11 // pred_fallthru
        _
      // Predicated region
      $region33: #{tpu_custom_call.1} parent=11 // pred_check
        %p267 = pneg %p169
      $region34: #{tpu_custom_call.1} parent=11 // pred_check_branch
        %269 = sbr.rel (%p267) target = $region36
      $region35: #{tpu_custom_call.1} parent=11 // pred_region
        _
      $region36: #{tpu_custom_call.1} parent=11 // pred_fallthru
        _
      // Predicated region
      $region37: #{tpu_custom_call.1} parent=11 // pred_check
        %p270 = pneg %p190
      $region38: #{tpu_custom_call.1} parent=11 // pred_check_branch
        %272 = sbr.rel (%p270) target = $region40
      $region39: #{tpu_custom_call.1} parent=11 // pred_region
        _
      $region40: #{tpu_custom_call.1} parent=11 // pred_fallthru
        _
      // Predicated region
      $region41: #{tpu_custom_call.1} parent=11 // pred_check
        %p273 = pneg %p211
      $region42: #{tpu_custom_call.1} parent=11 // pred_check_branch
        %275 = sbr.rel (%p273) target = $region44
      $region43: #{tpu_custom_call.1} parent=11 // pred_region
        _
      $region44: #{tpu_custom_call.1} parent=11 // pred_fallthru
        _
    $region12: #{tpu_custom_call.1} parent=5 // pred_fallthru
      _
    %p276 = scmp.lt.s32.totalorder %s17, 2
    // Predicated region
    $region45: #{tpu_custom_call.1} parent=5 // pred_check
      %p277 = pneg %p276
    $region46: #{tpu_custom_call.1} parent=5 // pred_check_branch
      %279 = sbr.rel (%p277) target = $region48
    $region47: #{tpu_custom_call.1} parent=5 // pred_region
      // Predicated region
      $region49: #{tpu_custom_call.1} parent=47 // pred_check
        %p280 = pneg %p37
      $region50: #{tpu_custom_call.1} parent=47 // pred_check_branch
        %282 = sbr.rel (%p280) target = $region52
      $region51: #{tpu_custom_call.1} parent=47 // pred_region
        %p283 = scmp.lt.s32.totalorder %s17, 1
        %s284 = scalar_select %p283, %s17, 1
        %s285 = smul.addr %s284, 15
        %s286 = smul.addr %s285, 8
        %s287 = scalar_lea.vmem %s0, %s286
      $region52: #{tpu_custom_call.1} parent=47 // pred_fallthru
        _
    $region48: #{tpu_custom_call.1} parent=5 // pred_fallthru
      _
    %p288 = scmp.le.s32.totalorder 1, %s17
    %p289 = scmp.lt.s32.totalorder %s17, 3
    %p290 = pnand %p288, %p289
    %p291 = pneg %p290
    // Predicated region
    $region53: #{tpu_custom_call.1} parent=5 // pred_check
      _
    $region54: #{tpu_custom_call.1} parent=5 // pred_check_branch
      %293 = sbr.rel (%p290) target = $region56
    $region55: #{tpu_custom_call.1} parent=5 // pred_region
      %s294 = ssub.s32 %s17, 1
      %p295 = scmp.lt.s32.totalorder %s22, 1
      %s296 = scalar_select %p295, %s22, 1
      %s297 = smul.addr %s296, 15
      %s298 = smul.addr %s297, 8
      %s299 = scalar_lea.vmem %s0, %s298
      %p300 = pneg %p43
      %p301 = pneg %p40
      %p302 = pneg %p64
      %p303 = pneg %p61
      %p304 = pneg %p85
      %p305 = pneg %p82
      %p306 = pneg %p106
      %p307 = pneg %p103
      %p308 = pneg %p127
      %p309 = pneg %p124
      %p310 = pneg %p148
      %p311 = pneg %p145
      %p312 = pneg %p169
      %p313 = pneg %p166
      %p314 = pneg %p190
      %p315 = pneg %p187
      %p316 = pneg %p211
      %p317 = pneg %p208
      %p318 = pneg %p237
      %p319 = pneg %p234
      %p320 = scmp.lt.s32.totalorder %s22, 1
      %s321 = scalar_select %p320, %s22, 1
      %s322 = scalar_lea.vmem %s9, %s321
      %p323 = scmp.lt.s32.totalorder %s22, 1
      %s324 = scalar_select %p323, %s22, 1
      %s325 = smul.addr %s324, 15
      %s326 = smul.addr %s325, 8
      %s327 = scalar_lea.vmem %s0, %s326
      %p328 = scmp.lt.s32.totalorder %s22, 1
      %s329 = scalar_select %p328, %s22, 1
      %s330 = scalar_lea.vmem %s9, %s329
      %v331 = vld [vmem:[%s327] sm:$0xff]
      %v332 = vld [vmem:[%s327 + $0x8] sm:$0xff]
      %v333 = vld [vmem:[%s327 + $0x10] sm:$0xff]
      %v334 = vld [vmem:[%s327 + $0x18] sm:$0xff]
      %v335 = vld [vmem:[%s327 + $0x20] sm:$0xff]
      %v336 = vld [vmem:[%s327 + $0x28] sm:$0xff]
      %v337 = vld [vmem:[%s327 + $0x30] sm:$0xff]
      %v338 = vld [vmem:[%s327 + $0x38] sm:$0xff]
      %v339 = vld [vmem:[%s327 + $0x40] sm:$0xff]
      %v340 = vld [vmem:[%s327 + $0x48] sm:$0xff]
      %v341 = vld [vmem:[%s327 + $0x50] sm:$0xff]
      %v342 = vld [vmem:[%s327 + $0x58] sm:$0xff]
      %v343 = vld [vmem:[%s327 + $0x60] sm:$0xff]
      %v344 = vld [vmem:[%s327 + $0x68] sm:$0xff]
      %v345 = vld [vmem:[%s327 + $0x70] sm:$0xff]
      %vm361 = vcmask 1040384
      %v362 = vrot.slane %v331, 7
      %v363 = vrot.slane %v332, 7
      %v364 = vsel %vm361, %v362, %v363
      %v365 = vrot.slane %v333, 7
      %v366 = vsel %vm361, %v363, %v365
      %v367 = vrot.slane %v334, 7
      %v368 = vsel %vm361, %v365, %v367
      %v369 = vrot.slane %v335, 7
      %v370 = vsel %vm361, %v367, %v369
      %v371 = vrot.slane %v336, 7
      %v372 = vsel %vm361, %v369, %v371
      %v373 = vrot.slane %v337, 7
      %v374 = vsel %vm361, %v371, %v373
      %v375 = vrot.slane %v338, 7
      %v376 = vsel %vm361, %v373, %v375
      %v377 = vrot.slane %v339, 7
      %v378 = vsel %vm361, %v375, %v377
      %v379 = vrot.slane %v340, 7
      %v380 = vsel %vm361, %v377, %v379
      %v381 = vrot.slane %v341, 7
      %v382 = vsel %vm361, %v379, %v381
      %v383 = vrot.slane %v342, 7
      %v384 = vsel %vm361, %v381, %v383
      %v385 = vrot.slane %v343, 7
      %v386 = vsel %vm361, %v383, %v385
      %v387 = vrot.slane %v344, 7
      %v388 = vsel %vm361, %v385, %v387
      %v389 = vrot.slane %v345, 7
      %v390 = vsel %vm361, %v387, %v389
      %v407 = vsel %vm361, 0.0, %v362
      %v408 = vsel %vm361, %v389, 0.0
      %vm410 = vcmask 1046528
      %v411 = vrot.slane %v407, 1
      %v412 = vrot.slane %v364, 1
      %v413 = vsel %vm410, %v411, %v412
      %v414 = vrot.slane %v366, 1
      %v415 = vsel %vm410, %v412, %v414
      %v416 = vrot.slane %v368, 1
      %v417 = vsel %vm410, %v414, %v416
      %v418 = vrot.slane %v370, 1
      %v419 = vsel %vm410, %v416, %v418
      %v420 = vrot.slane %v372, 1
      %v421 = vsel %vm410, %v418, %v420
      %v422 = vrot.slane %v374, 1
      %v423 = vsel %vm410, %v420, %v422
      %v424 = vrot.slane %v376, 1
      %v425 = vsel %vm410, %v422, %v424
      %v426 = vrot.slane %v378, 1
      %v427 = vsel %vm410, %v424, %v426
      %v428 = vrot.slane %v380, 1
      %v429 = vsel %vm410, %v426, %v428
      %v430 = vrot.slane %v382, 1
      %v431 = vsel %vm410, %v428, %v430
      %v432 = vrot.slane %v384, 1
      %v433 = vsel %vm410, %v430, %v432
      %v434 = vrot.slane %v386, 1
      %v435 = vsel %vm410, %v432, %v434
      %v436 = vrot.slane %v388, 1
      %v437 = vsel %vm410, %v434, %v436
      %v438 = vrot.slane %v390, 1
      %v439 = vsel %vm410, %v436, %v438
      %440 = vrot.lane.b32.xlu0 %v413, 4
      %v441 = vpop.permute.xlu0 %440
      %442 = vrot.lane.b32.xlu0 %v415, 4
      %v443 = vpop.permute.xlu0 %442
      %444 = vrot.lane.b32.xlu0 %v417, 4
      %v445 = vpop.permute.xlu0 %444
      %446 = vrot.lane.b32.xlu0 %v419, 4
      %v447 = vpop.permute.xlu0 %446
      %448 = vrot.lane.b32.xlu0 %v421, 4
      %v449 = vpop.permute.xlu0 %448
      %450 = vrot.lane.b32.xlu0 %v423, 4
      %v451 = vpop.permute.xlu0 %450
      %452 = vrot.lane.b32.xlu0 %v425, 4
      %v453 = vpop.permute.xlu0 %452
      %454 = vrot.lane.b32.xlu0 %v427, 4
      %v455 = vpop.permute.xlu0 %454
      %456 = vrot.lane.b32.xlu0 %v429, 4
      %v457 = vpop.permute.xlu0 %456
      %458 = vrot.lane.b32.xlu0 %v431, 4
      %v459 = vpop.permute.xlu0 %458
      %460 = vrot.lane.b32.xlu0 %v433, 4
      %v461 = vpop.permute.xlu0 %460
      %462 = vrot.lane.b32.xlu0 %v435, 4
      %v463 = vpop.permute.xlu0 %462
      %464 = vrot.lane.b32.xlu0 %v437, 4
      %v465 = vpop.permute.xlu0 %464
      %466 = vrot.lane.b32.xlu0 %v439, 4
      %v467 = vpop.permute.xlu0 %466
      %468 = vrot.lane.b32.xlu0 %v438, 4
      %v469 = vpop.permute.xlu0 %468
      %vm485 = vcmask 1045504
      %v486 = vrot.slane %v407, 2
      %v487 = vrot.slane %v364, 2
      %v488 = vsel %vm485, %v486, %v487
      %v489 = vrot.slane %v366, 2
      %v490 = vsel %vm485, %v487, %v489
      %v491 = vrot.slane %v368, 2
      %v492 = vsel %vm485, %v489, %v491
      %v493 = vrot.slane %v370, 2
      %v494 = vsel %vm485, %v491, %v493
      %v495 = vrot.slane %v372, 2
      %v496 = vsel %vm485, %v493, %v495
      %v497 = vrot.slane %v374, 2
      %v498 = vsel %vm485, %v495, %v497
      %v499 = vrot.slane %v376, 2
      %v500 = vsel %vm485, %v497, %v499
      %v501 = vrot.slane %v378, 2
      %v502 = vsel %vm485, %v499, %v501
      %v503 = vrot.slane %v380, 2
      %v504 = vsel %vm485, %v501, %v503
      %v505 = vrot.slane %v382, 2
      %v506 = vsel %vm485, %v503, %v505
      %v507 = vrot.slane %v384, 2
      %v508 = vsel %vm485, %v505, %v507
      %v509 = vrot.slane %v386, 2
      %v510 = vsel %vm485, %v507, %v509
      %v511 = vrot.slane %v388, 2
      %v512 = vsel %vm485, %v509, %v511
      %v513 = vrot.slane %v390, 2
      %v514 = vsel %vm485, %v511, %v513
      %515 = vrot.lane.b32.xlu0 %v488, 8
      %v516 = vpop.permute.xlu0 %515
      %517 = vrot.lane.b32.xlu0 %v490, 8
      %v518 = vpop.permute.xlu0 %517
      %519 = vrot.lane.b32.xlu0 %v492, 8
      %v520 = vpop.permute.xlu0 %519
      %521 = vrot.lane.b32.xlu0 %v494, 8
      %v522 = vpop.permute.xlu0 %521
      %523 = vrot.lane.b32.xlu0 %v496, 8
      %v524 = vpop.permute.xlu0 %523
      %525 = vrot.lane.b32.xlu0 %v498, 8
      %v526 = vpop.permute.xlu0 %525
      %527 = vrot.lane.b32.xlu0 %v500, 8
      %v528 = vpop.permute.xlu0 %527
      %529 = vrot.lane.b32.xlu0 %v502, 8
      %v530 = vpop.permute.xlu0 %529
      %531 = vrot.lane.b32.xlu0 %v504, 8
      %v532 = vpop.permute.xlu0 %531
      %533 = vrot.lane.b32.xlu0 %v506, 8
      %v534 = vpop.permute.xlu0 %533
      %535 = vrot.lane.b32.xlu0 %v508, 8
      %v536 = vpop.permute.xlu0 %535
      %537 = vrot.lane.b32.xlu0 %v510, 8
      %v538 = vpop.permute.xlu0 %537
      %539 = vrot.lane.b32.xlu0 %v512, 8
      %v540 = vpop.permute.xlu0 %539
      %541 = vrot.lane.b32.xlu0 %v514, 8
      %v542 = vpop.permute.xlu0 %541
      %543 = vrot.lane.b32.xlu0 %v513, 8
      %v544 = vpop.permute.xlu0 %543
      %vm561 = vcmask 1044480
      %v562 = vrot.slane %v407, 3
      %v563 = vrot.slane %v364, 3
      %v564 = vsel %vm561, %v562, %v563
      %v565 = vrot.slane %v366, 3
      %v566 = vsel %vm561, %v563, %v565
      %v567 = vrot.slane %v368, 3
      %v568 = vsel %vm561, %v565, %v567
      %v569 = vrot.slane %v370, 3
      %v570 = vsel %vm561, %v567, %v569
      %v571 = vrot.slane %v372, 3
      %v572 = vsel %vm561, %v569, %v571
      %v573 = vrot.slane %v374, 3
      %v574 = vsel %vm561, %v571, %v573
      %v575 = vrot.slane %v376, 3
      %v576 = vsel %vm561, %v573, %v575
      %v577 = vrot.slane %v378, 3
      %v578 = vsel %vm561, %v575, %v577
      %v579 = vrot.slane %v380, 3
      %v580 = vsel %vm561, %v577, %v579
      %v581 = vrot.slane %v382, 3
      %v582 = vsel %vm561, %v579, %v581
      %v583 = vrot.slane %v384, 3
      %v584 = vsel %vm561, %v581, %v583
      %v585 = vrot.slane %v386, 3
      %v586 = vsel %vm561, %v583, %v585
      %v587 = vrot.slane %v388, 3
      %v588 = vsel %vm561, %v585, %v587
      %v589 = vrot.slane %v390, 3
      %v590 = vsel %vm561, %v587, %v589
      %v591 = vrot.slane %v408, 3
      %v592 = vsel %vm561, %v589, %v591
      %593 = vrot.lane.b32.xlu0 %v564, 12
      %v594 = vpop.permute.xlu0 %593
      %595 = vrot.lane.b32.xlu0 %v566, 12
      %v596 = vpop.permute.xlu0 %595
      %597 = vrot.lane.b32.xlu0 %v568, 12
      %v598 = vpop.permute.xlu0 %597
      %599 = vrot.lane.b32.xlu0 %v570, 12
      %v600 = vpop.permute.xlu0 %599
      %601 = vrot.lane.b32.xlu0 %v572, 12
      %v602 = vpop.permute.xlu0 %601
      %603 = vrot.lane.b32.xlu0 %v574, 12
      %v604 = vpop.permute.xlu0 %603
      %605 = vrot.lane.b32.xlu0 %v576, 12
      %v606 = vpop.permute.xlu0 %605
      %607 = vrot.lane.b32.xlu0 %v578, 12
      %v608 = vpop.permute.xlu0 %607
      %609 = vrot.lane.b32.xlu0 %v580, 12
      %v610 = vpop.permute.xlu0 %609
      %611 = vrot.lane.b32.xlu0 %v582, 12
      %v612 = vpop.permute.xlu0 %611
      %613 = vrot.lane.b32.xlu0 %v584, 12
      %v614 = vpop.permute.xlu0 %613
      %615 = vrot.lane.b32.xlu0 %v586, 12
      %v616 = vpop.permute.xlu0 %615
      %617 = vrot.lane.b32.xlu0 %v588, 12
      %v618 = vpop.permute.xlu0 %617
      %619 = vrot.lane.b32.xlu0 %v590, 12
      %v620 = vpop.permute.xlu0 %619
      %621 = vrot.lane.b32.xlu0 %v592, 12
      %v622 = vpop.permute.xlu0 %621
      %vm638 = vcmask 1043456
      %v639 = vrot.slane %v407, 4
      %v640 = vrot.slane %v364, 4
      %v641 = vsel %vm638, %v639, %v640
      %v642 = vrot.slane %v366, 4
      %v643 = vsel %vm638, %v640, %v642
      %v644 = vrot.slane %v368, 4
      %v645 = vsel %vm638, %v642, %v644
      %v646 = vrot.slane %v370, 4
      %v647 = vsel %vm638, %v644, %v646
      %v648 = vrot.slane %v372, 4
      %v649 = vsel %vm638, %v646, %v648
      %v650 = vrot.slane %v374, 4
      %v651 = vsel %vm638, %v648, %v650
      %v652 = vrot.slane %v376, 4
      %v653 = vsel %vm638, %v650, %v652
      %v654 = vrot.slane %v378, 4
      %v655 = vsel %vm638, %v652, %v654
      %v656 = vrot.slane %v380, 4
      %v657 = vsel %vm638, %v654, %v656
      %v658 = vrot.slane %v382, 4
      %v659 = vsel %vm638, %v656, %v658
      %v660 = vrot.slane %v384, 4
      %v661 = vsel %vm638, %v658, %v660
      %v662 = vrot.slane %v386, 4
      %v663 = vsel %vm638, %v660, %v662
      %v664 = vrot.slane %v388, 4
      %v665 = vsel %vm638, %v662, %v664
      %v666 = vrot.slane %v390, 4
      %v667 = vsel %vm638, %v664, %v666
      %v668 = vrot.slane %v408, 4
      %v669 = vsel %vm638, %v666, %v668
      %670 = vrot.lane.b32.xlu0 %v641, 16
      %v671 = vpop.permute.xlu0 %670
      %672 = vrot.lane.b32.xlu0 %v643, 16
      %v673 = vpop.permute.xlu0 %672
      %674 = vrot.lane.b32.xlu0 %v645, 16
      %v675 = vpop.permute.xlu0 %674
      %676 = vrot.lane.b32.xlu0 %v647, 16
      %v677 = vpop.permute.xlu0 %676
      %678 = vrot.lane.b32.xlu0 %v649, 16
      %v679 = vpop.permute.xlu0 %678
      %680 = vrot.lane.b32.xlu0 %v651, 16
      %v681 = vpop.permute.xlu0 %680
      %682 = vrot.lane.b32.xlu0 %v653, 16
      %v683 = vpop.permute.xlu0 %682
      %684 = vrot.lane.b32.xlu0 %v655, 16
      %v685 = vpop.permute.xlu0 %684
      %686 = vrot.lane.b32.xlu0 %v657, 16
      %v687 = vpop.permute.xlu0 %686
      %688 = vrot.lane.b32.xlu0 %v659, 16
      %v689 = vpop.permute.xlu0 %688
      %690 = vrot.lane.b32.xlu0 %v661, 16
      %v691 = vpop.permute.xlu0 %690
      %692 = vrot.lane.b32.xlu0 %v663, 16
      %v693 = vpop.permute.xlu0 %692
      %694 = vrot.lane.b32.xlu0 %v665, 16
      %v695 = vpop.permute.xlu0 %694
      %696 = vrot.lane.b32.xlu0 %v667, 16
      %v697 = vpop.permute.xlu0 %696
      %698 = vrot.lane.b32.xlu0 %v669, 16
      %v699 = vpop.permute.xlu0 %698
      %vm715 = vcmask 31744
      %v716 = vsel %vm715, %v407, %v441
      %v717 = vsel %vm715, %v364, %v443
      %v718 = vsel %vm715, %v366, %v445
      %v719 = vsel %vm715, %v368, %v447
      %v720 = vsel %vm715, %v370, %v449
      %v721 = vsel %vm715, %v372, %v451
      %v722 = vsel %vm715, %v374, %v453
      %v723 = vsel %vm715, %v376, %v455
      %v724 = vsel %vm715, %v378, %v457
      %v725 = vsel %vm715, %v380, %v459
      %v726 = vsel %vm715, %v382, %v461
      %v727 = vsel %vm715, %v384, %v463
      %v728 = vsel %vm715, %v386, %v465
      %v729 = vsel %vm715, %v388, %v467
      %v730 = vsel %vm715, %v390, %v469
      %vm731 = vcmask 64512
      %v732 = vsel %vm731, %v716, %v516
      %v733 = vsel %vm731, %v717, %v518
      %v734 = vsel %vm731, %v718, %v520
      %v735 = vsel %vm731, %v719, %v522
      %v736 = vsel %vm731, %v720, %v524
      %v737 = vsel %vm731, %v721, %v526
      %v738 = vsel %vm731, %v722, %v528
      %v739 = vsel %vm731, %v723, %v530
      %v740 = vsel %vm731, %v724, %v532
      %v741 = vsel %vm731, %v725, %v534
      %v742 = vsel %vm731, %v726, %v536
      %v743 = vsel %vm731, %v727, %v538
      %v744 = vsel %vm731, %v728, %v540
      %v745 = vsel %vm731, %v729, %v542
      %v746 = vsel %vm731, %v730, %v544
      %vm747 = vcmask 97280
      %v748 = vsel %vm747, %v732, %v594
      %v749 = vsel %vm747, %v733, %v596
      %v750 = vsel %vm747, %v734, %v598
      %v751 = vsel %vm747, %v735, %v600
      %v752 = vsel %vm747, %v736, %v602
      %v753 = vsel %vm747, %v737, %v604
      %v754 = vsel %vm747, %v738, %v606
      %v755 = vsel %vm747, %v739, %v608
      %v756 = vsel %vm747, %v740, %v610
      %v757 = vsel %vm747, %v741, %v612
      %v758 = vsel %vm747, %v742, %v614
      %v759 = vsel %vm747, %v743, %v616
      %v760 = vsel %vm747, %v744, %v618
      %v761 = vsel %vm747, %v745, %v620
      %v762 = vsel %vm747, %v746, %v622
      %vm763 = vcmask 130048
      %v764 = vsel %vm763, %v748, %v671
      %v765 = vsel %vm763, %v749, %v673
      %v766 = vsel %vm763, %v750, %v675
      %v767 = vsel %vm763, %v751, %v677
      %v768 = vsel %vm763, %v752, %v679
      %v769 = vsel %vm763, %v753, %v681
      %v770 = vsel %vm763, %v754, %v683
      %v771 = vsel %vm763, %v755, %v685
      %v772 = vsel %vm763, %v756, %v687
      %v773 = vsel %vm763, %v757, %v689
      %v774 = vsel %vm763, %v758, %v691
      %v775 = vsel %vm763, %v759, %v693
      %v776 = vsel %vm763, %v760, %v695
      %v777 = vsel %vm763, %v761, %v697
      %v778 = vsel %vm763, %v762, %v699
      %v779 = vld [vmem:[%s1] sm:$0xff]
      %v780 = vld [vmem:[%s1 + $0x8] sm:$0xff]
      %v781 = vld [vmem:[%s1 + $0x10] sm:$0xf]
      %v782 = vld [vmem:[%s2] sm:$0x1]
      %v784 = vlaneseq
      %v785 = vshrl.u32 %v784, 7
      %v786 = vsub.s32 0, %v785
      %v787 = vrot.slane %v782, %v786
      %vm789 = vcmask 162816
      %v791 = vsel %vm789, %v764, 0
      %v794 = vsel %vm789, %v765, 0
      %v797 = vsel %vm789, %v766, 0
      %v800 = vsel %vm789, %v767, 0
      %v803 = vsel %vm789, %v768, 0
      %v806 = vsel %vm789, %v769, 0
      %v809 = vsel %vm789, %v770, 0
      %v812 = vsel %vm789, %v771, 0
      %v815 = vsel %vm789, %v772, 0
      %v818 = vsel %vm789, %v773, 0
      %v821 = vsel %vm789, %v774, 0
      %v824 = vsel %vm789, %v775, 0
      %v827 = vsel %vm789, %v776, 0
      %v830 = vsel %vm789, %v777, 0
      %v833 = vsel %vm789, %v778, 0
      %v836 = vsel %vm638, %v781, 0
      %838 = vmatprep.subr.mxu0 0.0
      %v839 = vand.u32 %v779, 4294901760
      %840 = vmatpush1.msra.mxu0 %v839
      %841 = vmatprep.subr.mxu0 0.0
      %v842 = vand.u32 %v780, 4294901760
      %843 = vmatpush1.msra.mxu0 %v842
      %844 = vmatprep.subr.mxu0 0.0
      %v845 = vand.u32 %v836, 4294901760
      %846 = vmatpush1.msra.mxu0 %v845
      %847 = vmatprep.subr.mxu0 0.0
      %848 = vmatpush1.msra.mxu0 0.0
      %849 = vmatprep.subr.mxu0 0.0
      %850 = vmatpush1.msra.mxu0 0.0
      %851 = vmatprep.subr.mxu0 0.0
      %852 = vmatpush1.msra.mxu0 0.0
      %853 = vmatprep.subr.mxu0 0.0
      %854 = vmatpush1.msra.mxu0 0.0
      %855 = vmatprep.subr.mxu0 0.0
      %856 = vmatpush1.msra.mxu0 0.0
      %857 = vmatprep.subr.mxu0 0.0
      %858 = vmatpush1.msra.mxu0 0.0
      %859 = vmatprep.subr.mxu0 0.0
      %860 = vmatpush1.msra.mxu0 0.0
      %861 = vmatprep.subr.mxu0 0.0
      %862 = vmatpush1.msra.mxu0 0.0
      %863 = vmatprep.subr.mxu0 0.0
      %864 = vmatpush1.msra.mxu0 0.0
      %865 = vmatprep.subr.mxu0 0.0
      %866 = vmatpush1.msra.mxu0 0.0
      %867 = vmatprep.subr.mxu0 0.0
      %868 = vmatpush1.msra.mxu0 0.0
      %869 = vmatprep.subr.mxu0 0.0
      %870 = vmatpush1.msra.mxu0 0.0
      %871 = vmatprep.subr.mxu0 0.0
      %872 = vmatpush1.msra.mxu0 0.0
      %873 = vmatprep.subr.mxu0 0.0
      %874 = vmatpush1.msra.mxu0 0.0
      %875 = vmatprep.subr.mxu0 0.0
      %876 = vmatpush1.msra.mxu0 0.0
      %877 = vmatprep.subr.mxu0 0.0
      %878 = vmatpush1.msra.mxu0 0.0
      %879 = vmatprep.subr.mxu0 0.0
      %880 = vmatpush1.msra.mxu0 0.0
      %881 = vmatprep.subr.mxu0 0.0
      %882 = vmatpush1.msra.mxu0 0.0
      %883 = vmatprep.subr.mxu0 0.0
      %884 = vmatpush1.msra.mxu0 0.0
      %885 = vmatprep.subr.mxu0 0.0
      %886 = vmatpush1.msra.mxu0 0.0
      %887 = vmatprep.subr.mxu0 0.0
      %888 = vmatpush1.msra.mxu0 0.0
      %889 = vmatprep.subr.mxu0 0.0
      %890 = vmatpush1.msra.mxu0 0.0
      %891 = vmatprep.subr.mxu0 0.0
      %892 = vmatpush1.msra.mxu0 0.0
      %893 = vmatprep.subr.mxu0 0.0
      %894 = vmatpush1.msra.mxu0 0.0
      %895 = vmatprep.subr.mxu0 0.0
      %896 = vmatpush1.msra.mxu0 0.0
      %897 = vmatprep.subr.mxu0 0.0
      %898 = vmatpush1.msra.mxu0 0.0
      %899 = vmatprep.subr.mxu0 0.0
      %900 = vmatpush1.msra.mxu0 0.0
      %901 = vmatprep.subr.mxu0 0.0
      %902 = vmatpush1.msra.mxu0 0.0
      %903 = vmatprep.subr.mxu0 0.0
      %904 = vmatpush1.msra.mxu0 0.0
      %905 = vmatprep.mubr.f32.mxu0 0.0
      %v906 = vand.u32 %v791, 4294901760
      %v907 = vsub.f32 %v791, %v906
      %v908 = vand.u32 %v907, 4294901760
      %v909 = vsub.f32 %v907, %v908
      %v910 = vand.u32 %v909, 4294901760
      %911 = vmatmul.mubr.f32.gmra.mrb[0].mxu0 %v910
      %v912 = vpop.f32.mrb[0].mxu0
      %v913 = vadd.f32 %v787, %v912
      %v914 = vpop.f32.mrb[0].mxu0
      %915 = vmatprep.mubr.f32.mxu0 0.0
      %v916 = vand.u32 %v794, 4294901760
      %v917 = vsub.f32 %v794, %v916
      %v918 = vand.u32 %v917, 4294901760
      %v919 = vsub.f32 %v917, %v918
      %v920 = vand.u32 %v919, 4294901760
      %921 = vmatmul.mubr.f32.gmra.mrb[0].mxu0 %v920
      %v922 = vpop.f32.mrb[0].mxu0
      %v923 = vadd.f32 %v787, %v922
      %v924 = vpop.f32.mrb[0].mxu0
      %925 = vmatprep.mubr.f32.mxu0 0.0
      %v926 = vand.u32 %v797, 4294901760
      %v927 = vsub.f32 %v797, %v926
      %v928 = vand.u32 %v927, 4294901760
      %v929 = vsub.f32 %v927, %v928
      %v930 = vand.u32 %v929, 4294901760
      %931 = vmatmul.mubr.f32.gmra.mrb[0].mxu0 %v930
      %v932 = vpop.f32.mrb[0].mxu0
      %v933 = vadd.f32 %v787, %v932
      %v934 = vpop.f32.mrb[0].mxu0
      %935 = vmatprep.mubr.f32.mxu0 0.0
      %v936 = vand.u32 %v800, 4294901760
      %v937 = vsub.f32 %v800, %v936
      %v938 = vand.u32 %v937, 4294901760
      %v939 = vsub.f32 %v937, %v938
      %v940 = vand.u32 %v939, 4294901760
      %941 = vmatmul.mubr.f32.gmra.mrb[0].mxu0 %v940
      %v942 = vpop.f32.mrb[0].mxu0
      %v943 = vadd.f32 %v787, %v942
      %v944 = vpop.f32.mrb[0].mxu0
      %945 = vmatprep.mubr.f32.mxu0 0.0
      %v946 = vand.u32 %v803, 4294901760
      %v947 = vsub.f32 %v803, %v946
      %v948 = vand.u32 %v947, 4294901760
      %v949 = vsub.f32 %v947, %v948
      %v950 = vand.u32 %v949, 4294901760
      %951 = vmatmul.mubr.f32.gmra.mrb[0].mxu0 %v950
      %v952 = vpop.f32.mrb[0].mxu0
      %v953 = vadd.f32 %v787, %v952
      %v954 = vpop.f32.mrb[0].mxu0
      %955 = vmatprep.mubr.f32.mxu0 0.0
      %v956 = vand.u32 %v806, 4294901760
      %v957 = vsub.f32 %v806, %v956
      %v958 = vand.u32 %v957, 4294901760
      %v959 = vsub.f32 %v957, %v958
      %v960 = vand.u32 %v959, 4294901760
      %961 = vmatmul.mubr.f32.gmra.mrb[0].mxu0 %v960
      %v962 = vpop.f32.mrb[0].mxu0
      %v963 = vadd.f32 %v787, %v962
      %v964 = vpop.f32.mrb[0].mxu0
      %965 = vmatprep.mubr.f32.mxu0 0.0
      %v966 = vand.u32 %v809, 4294901760
      %v967 = vsub.f32 %v809, %v966
      %v968 = vand.u32 %v967, 4294901760
      %v969 = vsub.f32 %v967, %v968
      %v970 = vand.u32 %v969, 4294901760
      %971 = vmatmul.mubr.f32.gmra.mrb[0].mxu0 %v970
      %v972 = vpop.f32.mrb[0].mxu0
      %v973 = vadd.f32 %v787, %v972
      %v974 = vpop.f32.mrb[0].mxu0
      %975 = vmatprep.mubr.f32.mxu0 0.0
      %v976 = vand.u32 %v812, 4294901760
      %v977 = vsub.f32 %v812, %v976
      %v978 = vand.u32 %v977, 4294901760
      %v979 = vsub.f32 %v977, %v978
      %v980 = vand.u32 %v979, 4294901760
      %981 = vmatmul.mubr.f32.gmra.mrb[0].mxu0 %v980
      %v982 = vpop.f32.mrb[0].mxu0
      %v983 = vadd.f32 %v787, %v982
      %v984 = vpop.f32.mrb[0].mxu0
      %985 = vmatprep.mubr.f32.mxu0 0.0
      %v986 = vand.u32 %v815, 4294901760
      %v987 = vsub.f32 %v815, %v986
      %v988 = vand.u32 %v987, 4294901760
      %v989 = vsub.f32 %v987, %v988
      %v990 = vand.u32 %v989, 4294901760
      %991 = vmatmul.mubr.f32.gmra.mrb[0].mxu0 %v990
      %v992 = vpop.f32.mrb[0].mxu0
      %v993 = vadd.f32 %v787, %v992
      %v994 = vpop.f32.mrb[0].mxu0
      %995 = vmatprep.mubr.f32.mxu0 0.0
      %v996 = vand.u32 %v818, 4294901760
      %v997 = vsub.f32 %v818, %v996
      %v998 = vand.u32 %v997, 4294901760
      %v999 = vsub.f32 %v997, %v998
      %v1000 = vand.u32 %v999, 4294901760
      %1001 = vmatmul.mubr.f32.gmra.mrb[0].mxu0 %v1000
      %v1002 = vpop.f32.mrb[0].mxu0
      %v1003 = vadd.f32 %v787, %v1002
      %v1004 = vpop.f32.mrb[0].mxu0
      %1005 = vmatprep.mubr.f32.mxu0 0.0
      %v1006 = vand.u32 %v821, 4294901760
      %v1007 = vsub.f32 %v821, %v1006
      %v1008 = vand.u32 %v1007, 4294901760
      %v1009 = vsub.f32 %v1007, %v1008
      %v1010 = vand.u32 %v1009, 4294901760
      %1011 = vmatmul.mubr.f32.gmra.mrb[0].mxu0 %v1010
      %v1012 = vpop.f32.mrb[0].mxu0
      %v1013 = vadd.f32 %v787, %v1012
      %v1014 = vpop.f32.mrb[0].mxu0
      %1015 = vmatprep.mubr.f32.mxu0 0.0
      %v1016 = vand.u32 %v824, 4294901760
      %v1017 = vsub.f32 %v824, %v1016
      %v1018 = vand.u32 %v1017, 4294901760
      %v1019 = vsub.f32 %v1017, %v1018
      %v1020 = vand.u32 %v1019, 4294901760
      %1021 = vmatmul.mubr.f32.gmra.mrb[0].mxu0 %v1020
      %v1022 = vpop.f32.mrb[0].mxu0
      %v1023 = vadd.f32 %v787, %v1022
      %v1024 = vpop.f32.mrb[0].mxu0
      %1025 = vmatprep.mubr.f32.mxu0 0.0
      %v1026 = vand.u32 %v827, 4294901760
      %v1027 = vsub.f32 %v827, %v1026
      %v1028 = vand.u32 %v1027, 4294901760
      %v1029 = vsub.f32 %v1027, %v1028
      %v1030 = vand.u32 %v1029, 4294901760
      %1031 = vmatmul.mubr.f32.gmra.mrb[0].mxu0 %v1030
      %v1032 = vpop.f32.mrb[0].mxu0
      %v1033 = vadd.f32 %v787, %v1032
      %v1034 = vpop.f32.mrb[0].mxu0
      %1035 = vmatprep.mubr.f32.mxu0 0.0
      %v1036 = vand.u32 %v830, 4294901760
      %v1037 = vsub.f32 %v830, %v1036
      %v1038 = vand.u32 %v1037, 4294901760
      %v1039 = vsub.f32 %v1037, %v1038
      %v1040 = vand.u32 %v1039, 4294901760
      %1041 = vmatmul.mubr.f32.gmra.mrb[0].mxu0 %v1040
      %v1042 = vpop.f32.mrb[0].mxu0
      %v1043 = vadd.f32 %v787, %v1042
      %v1044 = vpop.f32.mrb[0].mxu0
      %1045 = vmatprep.mubr.f32.mxu0 0.0
      %v1046 = vand.u32 %v833, 4294901760
      %v1047 = vsub.f32 %v833, %v1046
      %v1048 = vand.u32 %v1047, 4294901760
      %v1049 = vsub.f32 %v1047, %v1048
      %v1050 = vand.u32 %v1049, 4294901760
      %1051 = vmatmul.mubr.f32.gmra.mrb[0].mxu0 %v1050
      %v1052 = vpop.f32.mrb[0].mxu0
      %v1053 = vadd.f32 %v787, %v1052
      %v1054 = vpop.f32.mrb[0].mxu0
      %1055 = vdwg.mxu0
      %1056 = vmatprep.subr.mxu0 0.0
      %v1057 = vand.u32 %v779, 4294901760
      %v1058 = vsub.f32 %v779, %v1057
      %v1059 = vand.u32 %v1058, 4294901760
      %v1060 = vsub.f32 %v1058, %v1059
      %v1061 = vand.u32 %v1060, 4294901760
      %1062 = vmatpush1.msra.mxu0 %v1061
      %1063 = vmatprep.subr.mxu0 0.0
      %v1064 = vand.u32 %v780, 4294901760
      %v1065 = vsub.f32 %v780, %v1064
      %v1066 = vand.u32 %v1065, 4294901760
      %v1067 = vsub.f32 %v1065, %v1066
      %v1068 = vand.u32 %v1067, 4294901760
      %1069 = vmatpush1.msra.mxu0 %v1068
      %1070 = vmatprep.subr.mxu0 0.0
      %v1071 = vand.u32 %v836, 4294901760
      %v1072 = vsub.f32 %v836, %v1071
      %v1073 = vand.u32 %v1072, 4294901760
      %v1074 = vsub.f32 %v1072, %v1073
      %v1075 = vand.u32 %v1074, 4294901760
      %1076 = vmatpush1.msra.mxu0 %v1075
      %1077 = vmatprep.subr.mxu0 0.0
      %1078 = vmatpush1.msra.mxu0 0.0
      %1079 = vmatprep.subr.mxu0 0.0
      %1080 = vmatpush1.msra.mxu0 0.0
      %1081 = vmatprep.subr.mxu0 0.0
      %1082 = vmatpush1.msra.mxu0 0.0
      %1083 = vmatprep.subr.mxu0 0.0
      %1084 = vmatpush1.msra.mxu0 0.0
      %1085 = vmatprep.subr.mxu0 0.0
      %1086 = vmatpush1.msra.mxu0 0.0
      %1087 = vmatprep.subr.mxu0 0.0
      %1088 = vmatpush1.msra.mxu0 0.0
      %1089 = vmatprep.subr.mxu0 0.0
      %1090 = vmatpush1.msra.mxu0 0.0
      %1091 = vmatprep.subr.mxu0 0.0
      %1092 = vmatpush1.msra.mxu0 0.0
      %1093 = vmatprep.subr.mxu0 0.0
      %1094 = vmatpush1.msra.mxu0 0.0
      %1095 = vmatprep.subr.mxu0 0.0
      %1096 = vmatpush1.msra.mxu0 0.0
      %1097 = vmatprep.subr.mxu0 0.0
      %1098 = vmatpush1.msra.mxu0 0.0
      %1099 = vmatprep.subr.mxu0 0.0
      %1100 = vmatpush1.msra.mxu0 0.0
      %1101 = vmatprep.subr.mxu0 0.0
      %1102 = vmatpush1.msra.mxu0 0.0
      %1103 = vmatprep.subr.mxu0 0.0
      %1104 = vmatpush1.msra.mxu0 0.0
      %1105 = vmatprep.subr.mxu0 0.0
      %1106 = vmatpush1.msra.mxu0 0.0
      %1107 = vmatprep.subr.mxu0 0.0
      %1108 = vmatpush1.msra.mxu0 0.0
      %1109 = vmatprep.subr.mxu0 0.0
      %1110 = vmatpush1.msra.mxu0 0.0
      %1111 = vmatprep.subr.mxu0 0.0
      %1112 = vmatpush1.msra.mxu0 0.0
      %1113 = vmatprep.subr.mxu0 0.0
      %1114 = vmatpush1.msra.mxu0 0.0
      %1115 = vmatprep.subr.mxu0 0.0
      %1116 = vmatpush1.msra.mxu0 0.0
      %1117 = vmatprep.subr.mxu0 0.0
      %1118 = vmatpush1.msra.mxu0 0.0
      %1119 = vmatprep.subr.mxu0 0.0
      %1120 = vmatpush1.msra.mxu0 0.0
      %1121 = vmatprep.subr.mxu0 0.0
      %1122 = vmatpush1.msra.mxu0 0.0
      %1123 = vmatprep.subr.mxu0 0.0
      %1124 = vmatpush1.msra.mxu0 0.0
      %1125 = vmatprep.subr.mxu0 0.0
      %1126 = vmatpush1.msra.mxu0 0.0
      %1127 = vmatprep.subr.mxu0 0.0
      %1128 = vmatpush1.msra.mxu0 0.0
      %1129 = vmatprep.subr.mxu0 0.0
      %1130 = vmatpush1.msra.mxu0 0.0
      %1131 = vmatprep.subr.mxu0 0.0
      %1132 = vmatpush1.msra.mxu0 0.0
      %1133 = vmatprep.subr.mxu0 0.0
      %1134 = vmatpush1.msra.mxu0 0.0
      %1135 = vmatprep.mubr.f32.mxu0 0.0
      %v1136 = vand.u32 %v791, 4294901760
      %1137 = vmatmul.mubr.f32.gmra.mrb[0].mxu0 %v1136
      %v1138 = vpop.f32.mrb[0].mxu0
      %v1139 = vadd.f32 %v913, %v1138
      %v1140 = vpop.f32.mrb[0].mxu0
      %1141 = vmatprep.mubr.f32.mxu0 0.0
      %v1142 = vand.u32 %v794, 4294901760
      %1143 = vmatmul.mubr.f32.gmra.mrb[0].mxu0 %v1142
      %v1144 = vpop.f32.mrb[0].mxu0
      %v1145 = vadd.f32 %v923, %v1144
      %v1146 = vpop.f32.mrb[0].mxu0
      %1147 = vmatprep.mubr.f32.mxu0 0.0
      %v1148 = vand.u32 %v797, 4294901760
      %1149 = vmatmul.mubr.f32.gmra.mrb[0].mxu0 %v1148
      %v1150 = vpop.f32.mrb[0].mxu0
      %v1151 = vadd.f32 %v933, %v1150
      %v1152 = vpop.f32.mrb[0].mxu0
      %1153 = vmatprep.mubr.f32.mxu0 0.0
      %v1154 = vand.u32 %v800, 4294901760
      %1155 = vmatmul.mubr.f32.gmra.mrb[0].mxu0 %v1154
      %v1156 = vpop.f32.mrb[0].mxu0
      %v1157 = vadd.f32 %v943, %v1156
      %v1158 = vpop.f32.mrb[0].mxu0
      %1159 = vmatprep.mubr.f32.mxu0 0.0
      %v1160 = vand.u32 %v803, 4294901760
      %1161 = vmatmul.mubr.f32.gmra.mrb[0].mxu0 %v1160
      %v1162 = vpop.f32.mrb[0].mxu0
      %v1163 = vadd.f32 %v953, %v1162
      %v1164 = vpop.f32.mrb[0].mxu0
      %1165 = vmatprep.mubr.f32.mxu0 0.0
      %v1166 = vand.u32 %v806, 4294901760
      %1167 = vmatmul.mubr.f32.gmra.mrb[0].mxu0 %v1166
      %v1168 = vpop.f32.mrb[0].mxu0
      %v1169 = vadd.f32 %v963, %v1168
      %v1170 = vpop.f32.mrb[0].mxu0
      %1171 = vmatprep.mubr.f32.mxu0 0.0
      %v1172 = vand.u32 %v809, 4294901760
      %1173 = vmatmul.mubr.f32.gmra.mrb[0].mxu0 %v1172
      %v1174 = vpop.f32.mrb[0].mxu0
      %v1175 = vadd.f32 %v973, %v1174
      %v1176 = vpop.f32.mrb[0].mxu0
      %1177 = vmatprep.mubr.f32.mxu0 0.0
      %v1178 = vand.u32 %v812, 4294901760
      %1179 = vmatmul.mubr.f32.gmra.mrb[0].mxu0 %v1178
      %v1180 = vpop.f32.mrb[0].mxu0
      %v1181 = vadd.f32 %v983, %v1180
      %v1182 = vpop.f32.mrb[0].mxu0
      %1183 = vmatprep.mubr.f32.mxu0 0.0
      %v1184 = vand.u32 %v815, 4294901760
      %1185 = vmatmul.mubr.f32.gmra.mrb[0].mxu0 %v1184
      %v1186 = vpop.f32.mrb[0].mxu0
      %v1187 = vadd.f32 %v993, %v1186
      %v1188 = vpop.f32.mrb[0].mxu0
      %1189 = vmatprep.mubr.f32.mxu0 0.0
      %v1190 = vand.u32 %v818, 4294901760
      %1191 = vmatmul.mubr.f32.gmra.mrb[0].mxu0 %v1190
      %v1192 = vpop.f32.mrb[0].mxu0
      %v1193 = vadd.f32 %v1003, %v1192
      %v1194 = vpop.f32.mrb[0].mxu0
      %1195 = vmatprep.mubr.f32.mxu0 0.0
      %v1196 = vand.u32 %v821, 4294901760
      %1197 = vmatmul.mubr.f32.gmra.mrb[0].mxu0 %v1196
      %v1198 = vpop.f32.mrb[0].mxu0
      %v1199 = vadd.f32 %v1013, %v1198
      %v1200 = vpop.f32.mrb[0].mxu0
      %1201 = vmatprep.mubr.f32.mxu0 0.0
      %v1202 = vand.u32 %v824, 4294901760
      %1203 = vmatmul.mubr.f32.gmra.mrb[0].mxu0 %v1202
      %v1204 = vpop.f32.mrb[0].mxu0
      %v1205 = vadd.f32 %v1023, %v1204
      %v1206 = vpop.f32.mrb[0].mxu0
      %1207 = vmatprep.mubr.f32.mxu0 0.0
      %v1208 = vand.u32 %v827, 4294901760
      %1209 = vmatmul.mubr.f32.gmra.mrb[0].mxu0 %v1208
      %v1210 = vpop.f32.mrb[0].mxu0
      %v1211 = vadd.f32 %v1033, %v1210
      %v1212 = vpop.f32.mrb[0].mxu0
      %1213 = vmatprep.mubr.f32.mxu0 0.0
      %v1214 = vand.u32 %v830, 4294901760
      %1215 = vmatmul.mubr.f32.gmra.mrb[0].mxu0 %v1214
      %v1216 = vpop.f32.mrb[0].mxu0
      %v1217 = vadd.f32 %v1043, %v1216
      %v1218 = vpop.f32.mrb[0].mxu0
      %1219 = vmatprep.mubr.f32.mxu0 0.0
      %v1220 = vand.u32 %v833, 4294901760
      %1221 = vmatmul.mubr.f32.gmra.mrb[0].mxu0 %v1220
      %v1222 = vpop.f32.mrb[0].mxu0
      %v1223 = vadd.f32 %v1053, %v1222
      %v1224 = vpop.f32.mrb[0].mxu0
      %1225 = vdwg.mxu0
      %1226 = vmatprep.subr.mxu0 0.0
      %v1227 = vand.u32 %v779, 4294901760
      %v1228 = vsub.f32 %v779, %v1227
      %1229 = vmatpush1.msra.mxu0 %v1228
      %1230 = vmatprep.subr.mxu0 0.0
      %v1231 = vand.u32 %v780, 4294901760
      %v1232 = vsub.f32 %v780, %v1231
      %1233 = vmatpush1.msra.mxu0 %v1232
      %1234 = vmatprep.subr.mxu0 0.0
      %v1235 = vand.u32 %v836, 4294901760
      %v1236 = vsub.f32 %v836, %v1235
      %1237 = vmatpush1.msra.mxu0 %v1236
      %1238 = vmatprep.subr.mxu0 0.0
      %1239 = vmatpush1.msra.mxu0 0.0
      %1240 = vmatprep.subr.mxu0 0.0
      %1241 = vmatpush1.msra.mxu0 0.0
      %1242 = vmatprep.subr.mxu0 0.0
      %1243 = vmatpush1.msra.mxu0 0.0
      %1244 = vmatprep.subr.mxu0 0.0
      %1245 = vmatpush1.msra.mxu0 0.0
      %1246 = vmatprep.subr.mxu0 0.0
      %1247 = vmatpush1.msra.mxu0 0.0
      %1248 = vmatprep.subr.mxu0 0.0
      %1249 = vmatpush1.msra.mxu0 0.0
      %1250 = vmatprep.subr.mxu0 0.0
      %1251 = vmatpush1.msra.mxu0 0.0
      %1252 = vmatprep.subr.mxu0 0.0
      %1253 = vmatpush1.msra.mxu0 0.0
      %1254 = vmatprep.subr.mxu0 0.0
      %1255 = vmatpush1.msra.mxu0 0.0
      %1256 = vmatprep.subr.mxu0 0.0
      %1257 = vmatpush1.msra.mxu0 0.0
      %1258 = vmatprep.subr.mxu0 0.0
      %1259 = vmatpush1.msra.mxu0 0.0
      %1260 = vmatprep.subr.mxu0 0.0
      %1261 = vmatpush1.msra.mxu0 0.0
      %1262 = vmatprep.subr.mxu0 0.0
      %1263 = vmatpush1.msra.mxu0 0.0
      %1264 = vmatprep.subr.mxu0 0.0
      %1265 = vmatpush1.msra.mxu0 0.0
      %1266 = vmatprep.subr.mxu0 0.0
      %1267 = vmatpush1.msra.mxu0 0.0
      %1268 = vmatprep.subr.mxu0 0.0
      %1269 = vmatpush1.msra.mxu0 0.0
      %1270 = vmatprep.subr.mxu0 0.0
      %1271 = vmatpush1.msra.mxu0 0.0
      %1272 = vmatprep.subr.mxu0 0.0
      %1273 = vmatpush1.msra.mxu0 0.0
      %1274 = vmatprep.subr.mxu0 0.0
      %1275 = vmatpush1.msra.mxu0 0.0
      %1276 = vmatprep.subr.mxu0 0.0
      %1277 = vmatpush1.msra.mxu0 0.0
      %1278 = vmatprep.subr.mxu0 0.0
      %1279 = vmatpush1.msra.mxu0 0.0
      %1280 = vmatprep.subr.mxu0 0.0
      %1281 = vmatpush1.msra.mxu0 0.0
      %1282 = vmatprep.subr.mxu0 0.0
      %1283 = vmatpush1.msra.mxu0 0.0
      %1284 = vmatprep.subr.mxu0 0.0
      %1285 = vmatpush1.msra.mxu0 0.0
      %1286 = vmatprep.subr.mxu0 0.0
      %1287 = vmatpush1.msra.mxu0 0.0
      %1288 = vmatprep.subr.mxu0 0.0
      %1289 = vmatpush1.msra.mxu0 0.0
      %1290 = vmatprep.subr.mxu0 0.0
      %1291 = vmatpush1.msra.mxu0 0.0
      %1292 = vmatprep.subr.mxu0 0.0
      %1293 = vmatpush1.msra.mxu0 0.0
      %1294 = vmatprep.subr.mxu0 0.0
      %1295 = vmatpush1.msra.mxu0 0.0
      %1296 = vmatprep.mubr.f32.mxu0 0.0
      %v1297 = vand.u32 %v791, 4294901760
      %v1298 = vsub.f32 %v791, %v1297
      %1299 = vmatmul.mubr.f32.gmra.mrb[0].mxu0 %v1298
      %v1300 = vpop.f32.mrb[0].mxu0
      %v1301 = vadd.f32 %v1139, %v1300
      %v1302 = vpop.f32.mrb[0].mxu0
      %1303 = vmatprep.mubr.f32.mxu0 0.0
      %v1304 = vand.u32 %v794, 4294901760
      %v1305 = vsub.f32 %v794, %v1304
      %1306 = vmatmul.mubr.f32.gmra.mrb[0].mxu0 %v1305
      %v1307 = vpop.f32.mrb[0].mxu0
      %v1308 = vadd.f32 %v1145, %v1307
      %v1309 = vpop.f32.mrb[0].mxu0
      %1310 = vmatprep.mubr.f32.mxu0 0.0
      %v1311 = vand.u32 %v797, 4294901760
      %v1312 = vsub.f32 %v797, %v1311
      %1313 = vmatmul.mubr.f32.gmra.mrb[0].mxu0 %v1312
      %v1314 = vpop.f32.mrb[0].mxu0
      %v1315 = vadd.f32 %v1151, %v1314
      %v1316 = vpop.f32.mrb[0].mxu0
      %1317 = vmatprep.mubr.f32.mxu0 0.0
      %v1318 = vand.u32 %v800, 4294901760
      %v1319 = vsub.f32 %v800, %v1318
      %1320 = vmatmul.mubr.f32.gmra.mrb[0].mxu0 %v1319
      %v1321 = vpop.f32.mrb[0].mxu0
      %v1322 = vadd.f32 %v1157, %v1321
      %v1323 = vpop.f32.mrb[0].mxu0
      %1324 = vmatprep.mubr.f32.mxu0 0.0
      %v1325 = vand.u32 %v803, 4294901760
      %v1326 = vsub.f32 %v803, %v1325
      %1327 = vmatmul.mubr.f32.gmra.mrb[0].mxu0 %v1326
      %v1328 = vpop.f32.mrb[0].mxu0
      %v1329 = vadd.f32 %v1163, %v1328
      %v1330 = vpop.f32.mrb[0].mxu0
      %1331 = vmatprep.mubr.f32.mxu0 0.0
      %v1332 = vand.u32 %v806, 4294901760
      %v1333 = vsub.f32 %v806, %v1332
      %1334 = vmatmul.mubr.f32.gmra.mrb[0].mxu0 %v1333
      %v1335 = vpop.f32.mrb[0].mxu0
      %v1336 = vadd.f32 %v1169, %v1335
      %v1337 = vpop.f32.mrb[0].mxu0
      %1338 = vmatprep.mubr.f32.mxu0 0.0
      %v1339 = vand.u32 %v809, 4294901760
      %v1340 = vsub.f32 %v809, %v1339
      %1341 = vmatmul.mubr.f32.gmra.mrb[0].mxu0 %v1340
      %v1342 = vpop.f32.mrb[0].mxu0
      %v1343 = vadd.f32 %v1175, %v1342
      %v1344 = vpop.f32.mrb[0].mxu0
      %1345 = vmatprep.mubr.f32.mxu0 0.0
      %v1346 = vand.u32 %v812, 4294901760
      %v1347 = vsub.f32 %v812, %v1346
      %1348 = vmatmul.mubr.f32.gmra.mrb[0].mxu0 %v1347
      %v1349 = vpop.f32.mrb[0].mxu0
      %v1350 = vadd.f32 %v1181, %v1349
      %v1351 = vpop.f32.mrb[0].mxu0
      %1352 = vmatprep.mubr.f32.mxu0 0.0
      %v1353 = vand.u32 %v815, 4294901760
      %v1354 = vsub.f32 %v815, %v1353
      %1355 = vmatmul.mubr.f32.gmra.mrb[0].mxu0 %v1354
      %v1356 = vpop.f32.mrb[0].mxu0
      %v1357 = vadd.f32 %v1187, %v1356
      %v1358 = vpop.f32.mrb[0].mxu0
      %1359 = vmatprep.mubr.f32.mxu0 0.0
      %v1360 = vand.u32 %v818, 4294901760
      %v1361 = vsub.f32 %v818, %v1360
      %1362 = vmatmul.mubr.f32.gmra.mrb[0].mxu0 %v1361
      %v1363 = vpop.f32.mrb[0].mxu0
      %v1364 = vadd.f32 %v1193, %v1363
      %v1365 = vpop.f32.mrb[0].mxu0
      %1366 = vmatprep.mubr.f32.mxu0 0.0
      %v1367 = vand.u32 %v821, 4294901760
      %v1368 = vsub.f32 %v821, %v1367
      %1369 = vmatmul.mubr.f32.gmra.mrb[0].mxu0 %v1368
      %v1370 = vpop.f32.mrb[0].mxu0
      %v1371 = vadd.f32 %v1199, %v1370
      %v1372 = vpop.f32.mrb[0].mxu0
      %1373 = vmatprep.mubr.f32.mxu0 0.0
      %v1374 = vand.u32 %v824, 4294901760
      %v1375 = vsub.f32 %v824, %v1374
      %1376 = vmatmul.mubr.f32.gmra.mrb[0].mxu0 %v1375
      %v1377 = vpop.f32.mrb[0].mxu0
      %v1378 = vadd.f32 %v1205, %v1377
      %v1379 = vpop.f32.mrb[0].mxu0
      %1380 = vmatprep.mubr.f32.mxu0 0.0
      %v1381 = vand.u32 %v827, 4294901760
      %v1382 = vsub.f32 %v827, %v1381
      %1383 = vmatmul.mubr.f32.gmra.mrb[0].mxu0 %v1382
      %v1384 = vpop.f32.mrb[0].mxu0
      %v1385 = vadd.f32 %v1211, %v1384
      %v1386 = vpop.f32.mrb[0].mxu0
      %1387 = vmatprep.mubr.f32.mxu0 0.0
      %v1388 = vand.u32 %v830, 4294901760
      %v1389 = vsub.f32 %v830, %v1388
      %1390 = vmatmul.mubr.f32.gmra.mrb[0].mxu0 %v1389
      %v1391 = vpop.f32.mrb[0].mxu0
      %v1392 = vadd.f32 %v1217, %v1391
      %v1393 = vpop.f32.mrb[0].mxu0
      %1394 = vmatprep.mubr.f32.mxu0 0.0
      %v1395 = vand.u32 %v833, 4294901760
      %v1396 = vsub.f32 %v833, %v1395
      %1397 = vmatmul.mubr.f32.gmra.mrb[0].mxu0 %v1396
      %v1398 = vpop.f32.mrb[0].mxu0
      %v1399 = vadd.f32 %v1223, %v1398
      %v1400 = vpop.f32.mrb[0].mxu0
      %1401 = vdwg.mxu0
      %1402 = vmatprep.subr.mxu0 0.0
      %v1403 = vand.u32 %v779, 4294901760
      %1404 = vmatpush1.msra.mxu0 %v1403
      %1405 = vmatprep.subr.mxu0 0.0
      %v1406 = vand.u32 %v780, 4294901760
      %1407 = vmatpush1.msra.mxu0 %v1406
      %1408 = vmatprep.subr.mxu0 0.0
      %v1409 = vand.u32 %v836, 4294901760
      %1410 = vmatpush1.msra.mxu0 %v1409
      %1411 = vmatprep.subr.mxu0 0.0
      %1412 = vmatpush1.msra.mxu0 0.0
      %1413 = vmatprep.subr.mxu0 0.0
      %1414 = vmatpush1.msra.mxu0 0.0
      %1415 = vmatprep.subr.mxu0 0.0
      %1416 = vmatpush1.msra.mxu0 0.0
      %1417 = vmatprep.subr.mxu0 0.0
      %1418 = vmatpush1.msra.mxu0 0.0
      %1419 = vmatprep.subr.mxu0 0.0
      %1420 = vmatpush1.msra.mxu0 0.0
      %1421 = vmatprep.subr.mxu0 0.0
      %1422 = vmatpush1.msra.mxu0 0.0
      %1423 = vmatprep.subr.mxu0 0.0
      %1424 = vmatpush1.msra.mxu0 0.0
      %1425 = vmatprep.subr.mxu0 0.0
      %1426 = vmatpush1.msra.mxu0 0.0
      %1427 = vmatprep.subr.mxu0 0.0
      %1428 = vmatpush1.msra.mxu0 0.0
      %1429 = vmatprep.subr.mxu0 0.0
      %1430 = vmatpush1.msra.mxu0 0.0
      %1431 = vmatprep.subr.mxu0 0.0
      %1432 = vmatpush1.msra.mxu0 0.0
      %1433 = vmatprep.subr.mxu0 0.0
      %1434 = vmatpush1.msra.mxu0 0.0
      %1435 = vmatprep.subr.mxu0 0.0
      %1436 = vmatpush1.msra.mxu0 0.0
      %1437 = vmatprep.subr.mxu0 0.0
      %1438 = vmatpush1.msra.mxu0 0.0
      %1439 = vmatprep.subr.mxu0 0.0
      %1440 = vmatpush1.msra.mxu0 0.0
      %1441 = vmatprep.subr.mxu0 0.0
      %1442 = vmatpush1.msra.mxu0 0.0
      %1443 = vmatprep.subr.mxu0 0.0
      %1444 = vmatpush1.msra.mxu0 0.0
      %1445 = vmatprep.subr.mxu0 0.0
      %1446 = vmatpush1.msra.mxu0 0.0
      %1447 = vmatprep.subr.mxu0 0.0
      %1448 = vmatpush1.msra.mxu0 0.0
      %1449 = vmatprep.subr.mxu0 0.0
      %1450 = vmatpush1.msra.mxu0 0.0
      %1451 = vmatprep.subr.mxu0 0.0
      %1452 = vmatpush1.msra.mxu0 0.0
      %1453 = vmatprep.subr.mxu0 0.0
      %1454 = vmatpush1.msra.mxu0 0.0
      %1455 = vmatprep.subr.mxu0 0.0
      %1456 = vmatpush1.msra.mxu0 0.0
      %1457 = vmatprep.subr.mxu0 0.0
      %1458 = vmatpush1.msra.mxu0 0.0
      %1459 = vmatprep.subr.mxu0 0.0
      %1460 = vmatpush1.msra.mxu0 0.0
      %1461 = vmatprep.subr.mxu0 0.0
      %1462 = vmatpush1.msra.mxu0 0.0
      %1463 = vmatprep.subr.mxu0 0.0
      %1464 = vmatpush1.msra.mxu0 0.0
      %1465 = vmatprep.subr.mxu0 0.0
      %1466 = vmatpush1.msra.mxu0 0.0
      %1467 = vmatprep.subr.mxu0 0.0
      %1468 = vmatpush1.msra.mxu0 0.0
      %1469 = vmatprep.mubr.f32.mxu0 0.0
      %v1470 = vand.u32 %v791, 4294901760
      %v1471 = vsub.f32 %v791, %v1470
      %v1472 = vand.u32 %v1471, 4294901760
      %1473 = vmatmul.mubr.f32.gmra.mrb[0].mxu0 %v1472
      %v1474 = vpop.f32.mrb[0].mxu0
      %v1475 = vadd.f32 %v1301, %v1474
      %v1476 = vpop.f32.mrb[0].mxu0
      %1477 = vmatprep.mubr.f32.mxu0 0.0
      %v1478 = vand.u32 %v794, 4294901760
      %v1479 = vsub.f32 %v794, %v1478
      %v1480 = vand.u32 %v1479, 4294901760
      %1481 = vmatmul.mubr.f32.gmra.mrb[0].mxu0 %v1480
      %v1482 = vpop.f32.mrb[0].mxu0
      %v1483 = vadd.f32 %v1308, %v1482
      %v1484 = vpop.f32.mrb[0].mxu0
      %1485 = vmatprep.mubr.f32.mxu0 0.0
      %v1486 = vand.u32 %v797, 4294901760
      %v1487 = vsub.f32 %v797, %v1486
      %v1488 = vand.u32 %v1487, 4294901760
      %1489 = vmatmul.mubr.f32.gmra.mrb[0].mxu0 %v1488
      %v1490 = vpop.f32.mrb[0].mxu0
      %v1491 = vadd.f32 %v1315, %v1490
      %v1492 = vpop.f32.mrb[0].mxu0
      %1493 = vmatprep.mubr.f32.mxu0 0.0
      %v1494 = vand.u32 %v800, 4294901760
      %v1495 = vsub.f32 %v800, %v1494
      %v1496 = vand.u32 %v1495, 4294901760
      %1497 = vmatmul.mubr.f32.gmra.mrb[0].mxu0 %v1496
      %v1498 = vpop.f32.mrb[0].mxu0
      %v1499 = vadd.f32 %v1322, %v1498
      %v1500 = vpop.f32.mrb[0].mxu0
      %1501 = vmatprep.mubr.f32.mxu0 0.0
      %v1502 = vand.u32 %v803, 4294901760
      %v1503 = vsub.f32 %v803, %v1502
      %v1504 = vand.u32 %v1503, 4294901760
      %1505 = vmatmul.mubr.f32.gmra.mrb[0].mxu0 %v1504
      %v1506 = vpop.f32.mrb[0].mxu0
      %v1507 = vadd.f32 %v1329, %v1506
      %v1508 = vpop.f32.mrb[0].mxu0
      %1509 = vmatprep.mubr.f32.mxu0 0.0
      %v1510 = vand.u32 %v806, 4294901760
      %v1511 = vsub.f32 %v806, %v1510
      %v1512 = vand.u32 %v1511, 4294901760
      %1513 = vmatmul.mubr.f32.gmra.mrb[0].mxu0 %v1512
      %v1514 = vpop.f32.mrb[0].mxu0
      %v1515 = vadd.f32 %v1336, %v1514
      %v1516 = vpop.f32.mrb[0].mxu0
      %1517 = vmatprep.mubr.f32.mxu0 0.0
      %v1518 = vand.u32 %v809, 4294901760
      %v1519 = vsub.f32 %v809, %v1518
      %v1520 = vand.u32 %v1519, 4294901760
      %1521 = vmatmul.mubr.f32.gmra.mrb[0].mxu0 %v1520
      %v1522 = vpop.f32.mrb[0].mxu0
      %v1523 = vadd.f32 %v1343, %v1522
      %v1524 = vpop.f32.mrb[0].mxu0
      %1525 = vmatprep.mubr.f32.mxu0 0.0
      %v1526 = vand.u32 %v812, 4294901760
      %v1527 = vsub.f32 %v812, %v1526
      %v1528 = vand.u32 %v1527, 4294901760
      %1529 = vmatmul.mubr.f32.gmra.mrb[0].mxu0 %v1528
      %v1530 = vpop.f32.mrb[0].mxu0
      %v1531 = vadd.f32 %v1350, %v1530
      %v1532 = vpop.f32.mrb[0].mxu0
      %1533 = vmatprep.mubr.f32.mxu0 0.0
      %v1534 = vand.u32 %v815, 4294901760
      %v1535 = vsub.f32 %v815, %v1534
      %v1536 = vand.u32 %v1535, 4294901760
      %1537 = vmatmul.mubr.f32.gmra.mrb[0].mxu0 %v1536
      %v1538 = vpop.f32.mrb[0].mxu0
      %v1539 = vadd.f32 %v1357, %v1538
      %v1540 = vpop.f32.mrb[0].mxu0
      %1541 = vmatprep.mubr.f32.mxu0 0.0
      %v1542 = vand.u32 %v818, 4294901760
      %v1543 = vsub.f32 %v818, %v1542
      %v1544 = vand.u32 %v1543, 4294901760
      %1545 = vmatmul.mubr.f32.gmra.mrb[0].mxu0 %v1544
      %v1546 = vpop.f32.mrb[0].mxu0
      %v1547 = vadd.f32 %v1364, %v1546
      %v1548 = vpop.f32.mrb[0].mxu0
      %1549 = vmatprep.mubr.f32.mxu0 0.0
      %v1550 = vand.u32 %v821, 4294901760
      %v1551 = vsub.f32 %v821, %v1550
      %v1552 = vand.u32 %v1551, 4294901760
      %1553 = vmatmul.mubr.f32.gmra.mrb[0].mxu0 %v1552
      %v1554 = vpop.f32.mrb[0].mxu0
      %v1555 = vadd.f32 %v1371, %v1554
      %v1556 = vpop.f32.mrb[0].mxu0
      %1557 = vmatprep.mubr.f32.mxu0 0.0
      %v1558 = vand.u32 %v824, 4294901760
      %v1559 = vsub.f32 %v824, %v1558
      %v1560 = vand.u32 %v1559, 4294901760
      %1561 = vmatmul.mubr.f32.gmra.mrb[0].mxu0 %v1560
      %v1562 = vpop.f32.mrb[0].mxu0
      %v1563 = vadd.f32 %v1378, %v1562
      %v1564 = vpop.f32.mrb[0].mxu0
      %1565 = vmatprep.mubr.f32.mxu0 0.0
      %v1566 = vand.u32 %v827, 4294901760
      %v1567 = vsub.f32 %v827, %v1566
      %v1568 = vand.u32 %v1567, 4294901760
      %1569 = vmatmul.mubr.f32.gmra.mrb[0].mxu0 %v1568
      %v1570 = vpop.f32.mrb[0].mxu0
      %v1571 = vadd.f32 %v1385, %v1570
      %v1572 = vpop.f32.mrb[0].mxu0
      %1573 = vmatprep.mubr.f32.mxu0 0.0
      %v1574 = vand.u32 %v830, 4294901760
      %v1575 = vsub.f32 %v830, %v1574
      %v1576 = vand.u32 %v1575, 4294901760
      %1577 = vmatmul.mubr.f32.gmra.mrb[0].mxu0 %v1576
      %v1578 = vpop.f32.mrb[0].mxu0
      %v1579 = vadd.f32 %v1392, %v1578
      %v1580 = vpop.f32.mrb[0].mxu0
      %1581 = vmatprep.mubr.f32.mxu0 0.0
      %v1582 = vand.u32 %v833, 4294901760
      %v1583 = vsub.f32 %v833, %v1582
      %v1584 = vand.u32 %v1583, 4294901760
      %1585 = vmatmul.mubr.f32.gmra.mrb[0].mxu0 %v1584
      %v1586 = vpop.f32.mrb[0].mxu0
      %v1587 = vadd.f32 %v1399, %v1586
      %v1588 = vpop.f32.mrb[0].mxu0
      %1589 = vdwg.mxu0
      %1590 = vmatprep.subr.mxu0 0.0
      %v1591 = vand.u32 %v779, 4294901760
      %v1592 = vsub.f32 %v779, %v1591
      %v1593 = vand.u32 %v1592, 4294901760
      %1594 = vmatpush1.msra.mxu0 %v1593
      %1595 = vmatprep.subr.mxu0 0.0
      %v1596 = vand.u32 %v780, 4294901760
      %v1597 = vsub.f32 %v780, %v1596
      %v1598 = vand.u32 %v1597, 4294901760
      %1599 = vmatpush1.msra.mxu0 %v1598
      %1600 = vmatprep.subr.mxu0 0.0
      %v1601 = vand.u32 %v836, 4294901760
      %v1602 = vsub.f32 %v836, %v1601
      %v1603 = vand.u32 %v1602, 4294901760
      %1604 = vmatpush1.msra.mxu0 %v1603
      %1605 = vmatprep.subr.mxu0 0.0
      %1606 = vmatpush1.msra.mxu0 0.0
      %1607 = vmatprep.subr.mxu0 0.0
      %1608 = vmatpush1.msra.mxu0 0.0
      %1609 = vmatprep.subr.mxu0 0.0
      %1610 = vmatpush1.msra.mxu0 0.0
      %1611 = vmatprep.subr.mxu0 0.0
      %1612 = vmatpush1.msra.mxu0 0.0
      %1613 = vmatprep.subr.mxu0 0.0
      %1614 = vmatpush1.msra.mxu0 0.0
      %1615 = vmatprep.subr.mxu0 0.0
      %1616 = vmatpush1.msra.mxu0 0.0
      %1617 = vmatprep.subr.mxu0 0.0
      %1618 = vmatpush1.msra.mxu0 0.0
      %1619 = vmatprep.subr.mxu0 0.0
      %1620 = vmatpush1.msra.mxu0 0.0
      %1621 = vmatprep.subr.mxu0 0.0
      %1622 = vmatpush1.msra.mxu0 0.0
      %1623 = vmatprep.subr.mxu0 0.0
      %1624 = vmatpush1.msra.mxu0 0.0
      %1625 = vmatprep.subr.mxu0 0.0
      %1626 = vmatpush1.msra.mxu0 0.0
      %1627 = vmatprep.subr.mxu0 0.0
      %1628 = vmatpush1.msra.mxu0 0.0
      %1629 = vmatprep.subr.mxu0 0.0
      %1630 = vmatpush1.msra.mxu0 0.0
      %1631 = vmatprep.subr.mxu0 0.0
      %1632 = vmatpush1.msra.mxu0 0.0
      %1633 = vmatprep.subr.mxu0 0.0
      %1634 = vmatpush1.msra.mxu0 0.0
      %1635 = vmatprep.subr.mxu0 0.0
      %1636 = vmatpush1.msra.mxu0 0.0
      %1637 = vmatprep.subr.mxu0 0.0
      %1638 = vmatpush1.msra.mxu0 0.0
      %1639 = vmatprep.subr.mxu0 0.0
      %1640 = vmatpush1.msra.mxu0 0.0
      %1641 = vmatprep.subr.mxu0 0.0
      %1642 = vmatpush1.msra.mxu0 0.0
      %1643 = vmatprep.subr.mxu0 0.0
      %1644 = vmatpush1.msra.mxu0 0.0
      %1645 = vmatprep.subr.mxu0 0.0
      %1646 = vmatpush1.msra.mxu0 0.0
      %1647 = vmatprep.subr.mxu0 0.0
      %1648 = vmatpush1.msra.mxu0 0.0
      %1649 = vmatprep.subr.mxu0 0.0
      %1650 = vmatpush1.msra.mxu0 0.0
      %1651 = vmatprep.subr.mxu0 0.0
      %1652 = vmatpush1.msra.mxu0 0.0
      %1653 = vmatprep.subr.mxu0 0.0
      %1654 = vmatpush1.msra.mxu0 0.0
      %1655 = vmatprep.subr.mxu0 0.0
      %1656 = vmatpush1.msra.mxu0 0.0
      %1657 = vmatprep.subr.mxu0 0.0
      %1658 = vmatpush1.msra.mxu0 0.0
      %1659 = vmatprep.subr.mxu0 0.0
      %1660 = vmatpush1.msra.mxu0 0.0
      %1661 = vmatprep.subr.mxu0 0.0
      %1662 = vmatpush1.msra.mxu0 0.0
      %1663 = vmatprep.mubr.f32.mxu0 0.0
      %v1664 = vand.u32 %v791, 4294901760
      %1665 = vmatmul.mubr.f32.gmra.mrb[0].mxu0 %v1664
      %v1666 = vpop.f32.mrb[0].mxu0
      %v1667 = vadd.f32 %v1475, %v1666
      %v1668 = vpop.f32.mrb[0].mxu0
      %1669 = vmatprep.mubr.f32.mxu0 0.0
      %v1670 = vand.u32 %v794, 4294901760
      %1671 = vmatmul.mubr.f32.gmra.mrb[0].mxu0 %v1670
      %v1672 = vpop.f32.mrb[0].mxu0
      %v1673 = vadd.f32 %v1483, %v1672
      %v1674 = vpop.f32.mrb[0].mxu0
      %1675 = vmatprep.mubr.f32.mxu0 0.0
      %v1676 = vand.u32 %v797, 4294901760
      %1677 = vmatmul.mubr.f32.gmra.mrb[0].mxu0 %v1676
      %v1678 = vpop.f32.mrb[0].mxu0
      %v1679 = vadd.f32 %v1491, %v1678
      %v1680 = vpop.f32.mrb[0].mxu0
      %1681 = vmatprep.mubr.f32.mxu0 0.0
      %v1682 = vand.u32 %v800, 4294901760
      %1683 = vmatmul.mubr.f32.gmra.mrb[0].mxu0 %v1682
      %v1684 = vpop.f32.mrb[0].mxu0
      %v1685 = vadd.f32 %v1499, %v1684
      %v1686 = vpop.f32.mrb[0].mxu0
      %1687 = vmatprep.mubr.f32.mxu0 0.0
      %v1688 = vand.u32 %v803, 4294901760
      %1689 = vmatmul.mubr.f32.gmra.mrb[0].mxu0 %v1688
      %v1690 = vpop.f32.mrb[0].mxu0
      %v1691 = vadd.f32 %v1507, %v1690
      %v1692 = vpop.f32.mrb[0].mxu0
      %1693 = vmatprep.mubr.f32.mxu0 0.0
      %v1694 = vand.u32 %v806, 4294901760
      %1695 = vmatmul.mubr.f32.gmra.mrb[0].mxu0 %v1694
      %v1696 = vpop.f32.mrb[0].mxu0
      %v1697 = vadd.f32 %v1515, %v1696
      %v1698 = vpop.f32.mrb[0].mxu0
      %1699 = vmatprep.mubr.f32.mxu0 0.0
      %v1700 = vand.u32 %v809, 4294901760
      %1701 = vmatmul.mubr.f32.gmra.mrb[0].mxu0 %v1700
      %v1702 = vpop.f32.mrb[0].mxu0
      %v1703 = vadd.f32 %v1523, %v1702
      %v1704 = vpop.f32.mrb[0].mxu0
      %1705 = vmatprep.mubr.f32.mxu0 0.0
      %v1706 = vand.u32 %v812, 4294901760
      %1707 = vmatmul.mubr.f32.gmra.mrb[0].mxu0 %v1706
      %v1708 = vpop.f32.mrb[0].mxu0
      %v1709 = vadd.f32 %v1531, %v1708
      %v1710 = vpop.f32.mrb[0].mxu0
      %1711 = vmatprep.mubr.f32.mxu0 0.0
      %v1712 = vand.u32 %v815, 4294901760
      %1713 = vmatmul.mubr.f32.gmra.mrb[0].mxu0 %v1712
      %v1714 = vpop.f32.mrb[0].mxu0
      %v1715 = vadd.f32 %v1539, %v1714
      %v1716 = vpop.f32.mrb[0].mxu0
      %1717 = vmatprep.mubr.f32.mxu0 0.0
      %v1718 = vand.u32 %v818, 4294901760
      %1719 = vmatmul.mubr.f32.gmra.mrb[0].mxu0 %v1718
      %v1720 = vpop.f32.mrb[0].mxu0
      %v1721 = vadd.f32 %v1547, %v1720
      %v1722 = vpop.f32.mrb[0].mxu0
      %1723 = vmatprep.mubr.f32.mxu0 0.0
      %v1724 = vand.u32 %v821, 4294901760
      %1725 = vmatmul.mubr.f32.gmra.mrb[0].mxu0 %v1724
      %v1726 = vpop.f32.mrb[0].mxu0
      %v1727 = vadd.f32 %v1555, %v1726
      %v1728 = vpop.f32.mrb[0].mxu0
      %1729 = vmatprep.mubr.f32.mxu0 0.0
      %v1730 = vand.u32 %v824, 4294901760
      %1731 = vmatmul.mubr.f32.gmra.mrb[0].mxu0 %v1730
      %v1732 = vpop.f32.mrb[0].mxu0
      %v1733 = vadd.f32 %v1563, %v1732
      %v1734 = vpop.f32.mrb[0].mxu0
      %1735 = vmatprep.mubr.f32.mxu0 0.0
      %v1736 = vand.u32 %v827, 4294901760
      %1737 = vmatmul.mubr.f32.gmra.mrb[0].mxu0 %v1736
      %v1738 = vpop.f32.mrb[0].mxu0
      %v1739 = vadd.f32 %v1571, %v1738
      %v1740 = vpop.f32.mrb[0].mxu0
      %1741 = vmatprep.mubr.f32.mxu0 0.0
      %v1742 = vand.u32 %v830, 4294901760
      %1743 = vmatmul.mubr.f32.gmra.mrb[0].mxu0 %v1742
      %v1744 = vpop.f32.mrb[0].mxu0
      %v1745 = vadd.f32 %v1579, %v1744
      %v1746 = vpop.f32.mrb[0].mxu0
      %1747 = vmatprep.mubr.f32.mxu0 0.0
      %v1748 = vand.u32 %v833, 4294901760
      %1749 = vmatmul.mubr.f32.gmra.mrb[0].mxu0 %v1748
      %v1750 = vpop.f32.mrb[0].mxu0
      %v1751 = vadd.f32 %v1587, %v1750
      %v1752 = vpop.f32.mrb[0].mxu0
      %1753 = vdwg.mxu0
      %1754 = vmatprep.subr.mxu0 0.0
      %v1755 = vand.u32 %v779, 4294901760
      %1756 = vmatpush1.msra.mxu0 %v1755
      %1757 = vmatprep.subr.mxu0 0.0
      %v1758 = vand.u32 %v780, 4294901760
      %1759 = vmatpush1.msra.mxu0 %v1758
      %1760 = vmatprep.subr.mxu0 0.0
      %v1761 = vand.u32 %v836, 4294901760
      %1762 = vmatpush1.msra.mxu0 %v1761
      %1763 = vmatprep.subr.mxu0 0.0
      %1764 = vmatpush1.msra.mxu0 0.0
      %1765 = vmatprep.subr.mxu0 0.0
      %1766 = vmatpush1.msra.mxu0 0.0
      %1767 = vmatprep.subr.mxu0 0.0
      %1768 = vmatpush1.msra.mxu0 0.0
      %1769 = vmatprep.subr.mxu0 0.0
      %1770 = vmatpush1.msra.mxu0 0.0
      %1771 = vmatprep.subr.mxu0 0.0
      %1772 = vmatpush1.msra.mxu0 0.0
      %1773 = vmatprep.subr.mxu0 0.0
      %1774 = vmatpush1.msra.mxu0 0.0
      %1775 = vmatprep.subr.mxu0 0.0
      %1776 = vmatpush1.msra.mxu0 0.0
      %1777 = vmatprep.subr.mxu0 0.0
      %1778 = vmatpush1.msra.mxu0 0.0
      %1779 = vmatprep.subr.mxu0 0.0
      %1780 = vmatpush1.msra.mxu0 0.0
      %1781 = vmatprep.subr.mxu0 0.0
      %1782 = vmatpush1.msra.mxu0 0.0
      %1783 = vmatprep.subr.mxu0 0.0
      %1784 = vmatpush1.msra.mxu0 0.0
      %1785 = vmatprep.subr.mxu0 0.0
      %1786 = vmatpush1.msra.mxu0 0.0
      %1787 = vmatprep.subr.mxu0 0.0
      %1788 = vmatpush1.msra.mxu0 0.0
      %1789 = vmatprep.subr.mxu0 0.0
      %1790 = vmatpush1.msra.mxu0 0.0
      %1791 = vmatprep.subr.mxu0 0.0
      %1792 = vmatpush1.msra.mxu0 0.0
      %1793 = vmatprep.subr.mxu0 0.0
      %1794 = vmatpush1.msra.mxu0 0.0
      %1795 = vmatprep.subr.mxu0 0.0
      %1796 = vmatpush1.msra.mxu0 0.0
      %1797 = vmatprep.subr.mxu0 0.0
      %1798 = vmatpush1.msra.mxu0 0.0
      %1799 = vmatprep.subr.mxu0 0.0
      %1800 = vmatpush1.msra.mxu0 0.0
      %1801 = vmatprep.subr.mxu0 0.0
      %1802 = vmatpush1.msra.mxu0 0.0
      %1803 = vmatprep.subr.mxu0 0.0
      %1804 = vmatpush1.msra.mxu0 0.0
      %1805 = vmatprep.subr.mxu0 0.0
      %1806 = vmatpush1.msra.mxu0 0.0
      %1807 = vmatprep.subr.mxu0 0.0
      %1808 = vmatpush1.msra.mxu0 0.0
      %1809 = vmatprep.subr.mxu0 0.0
      %1810 = vmatpush1.msra.mxu0 0.0
      %1811 = vmatprep.subr.mxu0 0.0
      %1812 = vmatpush1.msra.mxu0 0.0
      %1813 = vmatprep.subr.mxu0 0.0
      %1814 = vmatpush1.msra.mxu0 0.0
      %1815 = vmatprep.subr.mxu0 0.0
      %1816 = vmatpush1.msra.mxu0 0.0
      %1817 = vmatprep.subr.mxu0 0.0
      %1818 = vmatpush1.msra.mxu0 0.0
      %1819 = vmatprep.subr.mxu0 0.0
      %1820 = vmatpush1.msra.mxu0 0.0
      %1821 = vmatprep.mubr.f32.mxu0 0.0
      %v1822 = vand.u32 %v791, 4294901760
      %1823 = vmatmul.mubr.f32.gmra.mrb[0].mxu0 %v1822
      %v1824 = vpop.f32.mrb[0].mxu0
      %v1825 = vadd.f32 %v1667, %v1824
      %v1826 = vpop.f32.mrb[0].mxu0
      %1827 = vmatprep.mubr.f32.mxu0 0.0
      %v1828 = vand.u32 %v794, 4294901760
      %1829 = vmatmul.mubr.f32.gmra.mrb[0].mxu0 %v1828
      %v1830 = vpop.f32.mrb[0].mxu0
      %v1831 = vadd.f32 %v1673, %v1830
      %v1832 = vpop.f32.mrb[0].mxu0
      %1833 = vmatprep.mubr.f32.mxu0 0.0
      %v1834 = vand.u32 %v797, 4294901760
      %1835 = vmatmul.mubr.f32.gmra.mrb[0].mxu0 %v1834
      %v1836 = vpop.f32.mrb[0].mxu0
      %v1837 = vadd.f32 %v1679, %v1836
      %v1838 = vpop.f32.mrb[0].mxu0
      %1839 = vmatprep.mubr.f32.mxu0 0.0
      %v1840 = vand.u32 %v800, 4294901760
      %1841 = vmatmul.mubr.f32.gmra.mrb[0].mxu0 %v1840
      %v1842 = vpop.f32.mrb[0].mxu0
      %v1843 = vadd.f32 %v1685, %v1842
      %v1844 = vpop.f32.mrb[0].mxu0
      %1845 = vmatprep.mubr.f32.mxu0 0.0
      %v1846 = vand.u32 %v803, 4294901760
      %1847 = vmatmul.mubr.f32.gmra.mrb[0].mxu0 %v1846
      %v1848 = vpop.f32.mrb[0].mxu0
      %v1849 = vadd.f32 %v1691, %v1848
      %v1850 = vpop.f32.mrb[0].mxu0
      %1851 = vmatprep.mubr.f32.mxu0 0.0
      %v1852 = vand.u32 %v806, 4294901760
      %1853 = vmatmul.mubr.f32.gmra.mrb[0].mxu0 %v1852
      %v1854 = vpop.f32.mrb[0].mxu0
      %v1855 = vadd.f32 %v1697, %v1854
      %v1856 = vpop.f32.mrb[0].mxu0
      %1857 = vmatprep.mubr.f32.mxu0 0.0
      %v1858 = vand.u32 %v809, 4294901760
      %1859 = vmatmul.mubr.f32.gmra.mrb[0].mxu0 %v1858
      %v1860 = vpop.f32.mrb[0].mxu0
      %v1861 = vadd.f32 %v1703, %v1860
      %v1862 = vpop.f32.mrb[0].mxu0
      %1863 = vmatprep.mubr.f32.mxu0 0.0
      %v1864 = vand.u32 %v812, 4294901760
      %1865 = vmatmul.mubr.f32.gmra.mrb[0].mxu0 %v1864
      %v1866 = vpop.f32.mrb[0].mxu0
      %v1867 = vadd.f32 %v1709, %v1866
      %v1868 = vpop.f32.mrb[0].mxu0
      %1869 = vmatprep.mubr.f32.mxu0 0.0
      %v1870 = vand.u32 %v815, 4294901760
      %1871 = vmatmul.mubr.f32.gmra.mrb[0].mxu0 %v1870
      %v1872 = vpop.f32.mrb[0].mxu0
      %v1873 = vadd.f32 %v1715, %v1872
      %v1874 = vpop.f32.mrb[0].mxu0
      %1875 = vmatprep.mubr.f32.mxu0 0.0
      %v1876 = vand.u32 %v818, 4294901760
      %1877 = vmatmul.mubr.f32.gmra.mrb[0].mxu0 %v1876
      %v1878 = vpop.f32.mrb[0].mxu0
      %v1879 = vadd.f32 %v1721, %v1878
      %v1880 = vpop.f32.mrb[0].mxu0
      %1881 = vmatprep.mubr.f32.mxu0 0.0
      %v1882 = vand.u32 %v821, 4294901760
      %1883 = vmatmul.mubr.f32.gmra.mrb[0].mxu0 %v1882
      %v1884 = vpop.f32.mrb[0].mxu0
      %v1885 = vadd.f32 %v1727, %v1884
      %v1886 = vpop.f32.mrb[0].mxu0
      %1887 = vmatprep.mubr.f32.mxu0 0.0
      %v1888 = vand.u32 %v824, 4294901760
      %1889 = vmatmul.mubr.f32.gmra.mrb[0].mxu0 %v1888
      %v1890 = vpop.f32.mrb[0].mxu0
      %v1891 = vadd.f32 %v1733, %v1890
      %v1892 = vpop.f32.mrb[0].mxu0
      %1893 = vmatprep.mubr.f32.mxu0 0.0
      %v1894 = vand.u32 %v827, 4294901760
      %1895 = vmatmul.mubr.f32.gmra.mrb[0].mxu0 %v1894
      %v1896 = vpop.f32.mrb[0].mxu0
      %v1897 = vadd.f32 %v1739, %v1896
      %v1898 = vpop.f32.mrb[0].mxu0
      %1899 = vmatprep.mubr.f32.mxu0 0.0
      %v1900 = vand.u32 %v830, 4294901760
      %1901 = vmatmul.mubr.f32.gmra.mrb[0].mxu0 %v1900
      %v1902 = vpop.f32.mrb[0].mxu0
      %v1903 = vadd.f32 %v1745, %v1902
      %v1904 = vpop.f32.mrb[0].mxu0
      %1905 = vmatprep.mubr.f32.mxu0 0.0
      %v1906 = vand.u32 %v833, 4294901760
      %1907 = vmatmul.mubr.f32.gmra.mrb[0].mxu0 %v1906
      %v1908 = vpop.f32.mrb[0].mxu0
      %v1909 = vadd.f32 %v1751, %v1908
      %v1910 = vpop.f32.mrb[0].mxu0
      %1911 = vdwg.mxu0
      %v1912 = vmax.f32 %v1825, 0.0
      %v1913 = vmax.f32 %v1831, 0.0
      %v1914 = vmax.f32 %v1837, 0.0
      %v1915 = vmax.f32 %v1843, 0.0
      %v1916 = vmax.f32 %v1849, 0.0
      %v1917 = vmax.f32 %v1855, 0.0
      %v1918 = vmax.f32 %v1861, 0.0
      %v1919 = vmax.f32 %v1867, 0.0
      %v1920 = vmax.f32 %v1873, 0.0
      %v1921 = vmax.f32 %v1879, 0.0
      %v1922 = vmax.f32 %v1885, 0.0
      %v1923 = vmax.f32 %v1891, 0.0
      %v1924 = vmax.f32 %v1897, 0.0
      %v1925 = vmax.f32 %v1903, 0.0
      %v1926 = vmax.f32 %v1909, 0.0
      %v1942 = vrot.slane %v1912, 1
      %v1943 = vrot.slane %v1913, 1
      %v1944 = vsel %vm410, %v1942, %v1943
      %v1945 = vrot.slane %v1914, 1
      %v1946 = vsel %vm410, %v1943, %v1945
      %v1947 = vrot.slane %v1915, 1
      %v1948 = vsel %vm410, %v1945, %v1947
      %v1949 = vrot.slane %v1916, 1
      %v1950 = vsel %vm410, %v1947, %v1949
      %v1951 = vrot.slane %v1917, 1
      %v1952 = vsel %vm410, %v1949, %v1951
      %v1953 = vrot.slane %v1918, 1
      %v1954 = vsel %vm410, %v1951, %v1953
      %v1955 = vrot.slane %v1919, 1
      %v1956 = vsel %vm410, %v1953, %v1955
      %v1957 = vrot.slane %v1920, 1
      %v1958 = vsel %vm410, %v1955, %v1957
      %v1959 = vrot.slane %v1921, 1
      %v1960 = vsel %vm410, %v1957, %v1959
      %v1961 = vrot.slane %v1922, 1
      %v1962 = vsel %vm410, %v1959, %v1961
      %v1963 = vrot.slane %v1923, 1
      %v1964 = vsel %vm410, %v1961, %v1963
      %v1965 = vrot.slane %v1924, 1
      %v1966 = vsel %vm410, %v1963, %v1965
      %v1967 = vrot.slane %v1925, 1
      %v1968 = vsel %vm410, %v1965, %v1967
      %v1969 = vrot.slane %v1926, 1
      %v1970 = vsel %vm410, %v1967, %v1969
      %v1986 = vmax.f32 %v1912, %v1944
      %v1987 = vmax.f32 %v1913, %v1946
      %v1988 = vmax.f32 %v1914, %v1948
      %v1989 = vmax.f32 %v1915, %v1950
      %v1990 = vmax.f32 %v1916, %v1952
      %v1991 = vmax.f32 %v1917, %v1954
      %v1992 = vmax.f32 %v1918, %v1956
      %v1993 = vmax.f32 %v1919, %v1958
      %v1994 = vmax.f32 %v1920, %v1960
      %v1995 = vmax.f32 %v1921, %v1962
      %v1996 = vmax.f32 %v1922, %v1964
      %v1997 = vmax.f32 %v1923, %v1966
      %v1998 = vmax.f32 %v1924, %v1968
      %v1999 = vmax.f32 %v1925, %v1970
      %v2000 = vmax.f32 %v1926, %v1969
      %v2001 = vlaneseq
      %v2002 = vshrl.u32 %v2001, 7
      %v2003 = vadd.s32 %v2002, 8
      %v2004 = vadd.s32 %v2002, 16
      %v2005 = vadd.s32 %v2002, 24
      %v2006 = vadd.s32 %v2002, 32
      %v2007 = vadd.s32 %v2002, 40
      %v2008 = vadd.s32 %v2002, 48
      %v2009 = vadd.s32 %v2002, 56
      %v2010 = vlaneseq
      %v2011 = vand.u32 %v2010, 127
      %v2012 = vmul.u32 %v2002, 2
      %v2013 = vmul.u32 %v2003, 2
      %v2014 = vmul.u32 %v2004, 2
      %v2015 = vmul.u32 %v2005, 2
      %v2016 = vmul.u32 %v2006, 2
      %v2017 = vmul.u32 %v2007, 2
      %v2018 = vmul.u32 %v2008, 2
      %v2019 = vmul.u32 %v2009, 2
      %vm2020 = vcmp.eq.s32.totalorder %v2011, %v2012
      %vm2021 = vcmp.eq.s32.totalorder %v2011, %v2013
      %vm2022 = vcmp.eq.s32.totalorder %v2011, %v2014
      %vm2023 = vcmp.eq.s32.totalorder %v2011, %v2015
      %vm2024 = vcmp.eq.s32.totalorder %v2011, %v2016
      %vm2025 = vcmp.eq.s32.totalorder %v2011, %v2017
      %vm2026 = vcmp.eq.s32.totalorder %v2011, %v2018
      %vm2027 = vcmp.eq.s32.totalorder %v2011, %v2019
      %v2028 = vsel %vm2020, 1.0, 0.0
      %v2029 = vsel %vm2021, 1.0, 0.0
      %v2030 = vsel %vm2022, 1.0, 0.0
      %v2031 = vsel %vm2023, 1.0, 0.0
      %v2032 = vsel %vm2024, 1.0, 0.0
      %v2033 = vsel %vm2025, 1.0, 0.0
      %v2034 = vsel %vm2026, 1.0, 0.0
      %v2035 = vsel %vm2027, 1.0, 0.0
      %vm2036 = vcmask 957440
      %v2038 = vsel %vm2036, %v2028, 0
      %v2041 = vsel %vm2036, %v2029, 0
      %v2044 = vsel %vm2036, %v2030, 0
      %v2047 = vsel %vm2036, %v2031, 0
      %v2050 = vsel %vm2036, %v2032, 0
      %v2053 = vsel %vm2036, %v2033, 0
      %v2056 = vsel %vm2036, %v2034, 0
      %v2059 = vsel %vm2036, %v2035, 0
      %v2062 = vsel %vm561, %v2000, 0
      %2064 = vmatprep.subr.mxu0 0.0
      %v2065 = vand.u32 %v1986, 4294901760
      %2066 = vmatpush1.msra.mxu0 %v2065
      %2067 = vmatprep.subr.mxu0 0.0
      %v2068 = vand.u32 %v1987, 4294901760
      %2069 = vmatpush1.msra.mxu0 %v2068
      %2070 = vmatprep.subr.mxu0 0.0
      %v2071 = vand.u32 %v1988, 4294901760
      %2072 = vmatpush1.msra.mxu0 %v2071
      %2073 = vmatprep.subr.mxu0 0.0
      %v2074 = vand.u32 %v1989, 4294901760
      %2075 = vmatpush1.msra.mxu0 %v2074
      %2076 = vmatprep.subr.mxu0 0.0
      %v2077 = vand.u32 %v1990, 4294901760
      %2078 = vmatpush1.msra.mxu0 %v2077
      %2079 = vmatprep.subr.mxu0 0.0
      %v2080 = vand.u32 %v1991, 4294901760
      %2081 = vmatpush1.msra.mxu0 %v2080
      %2082 = vmatprep.subr.mxu0 0.0
      %v2083 = vand.u32 %v1992, 4294901760
      %2084 = vmatpush1.msra.mxu0 %v2083
      %2085 = vmatprep.subr.mxu0 0.0
      %v2086 = vand.u32 %v1993, 4294901760
      %2087 = vmatpush1.msra.mxu0 %v2086
      %2088 = vmatprep.subr.mxu0 0.0
      %v2089 = vand.u32 %v1994, 4294901760
      %2090 = vmatpush1.msra.mxu0 %v2089
      %2091 = vmatprep.subr.mxu0 0.0
      %v2092 = vand.u32 %v1995, 4294901760
      %2093 = vmatpush1.msra.mxu0 %v2092
      %2094 = vmatprep.subr.mxu0 0.0
      %v2095 = vand.u32 %v1996, 4294901760
      %2096 = vmatpush1.msra.mxu0 %v2095
      %2097 = vmatprep.subr.mxu0 0.0
      %v2098 = vand.u32 %v1997, 4294901760
      %2099 = vmatpush1.msra.mxu0 %v2098
      %2100 = vmatprep.subr.mxu0 0.0
      %v2101 = vand.u32 %v1998, 4294901760
      %2102 = vmatpush1.msra.mxu0 %v2101
      %2103 = vmatprep.subr.mxu0 0.0
      %v2104 = vand.u32 %v1999, 4294901760
      %2105 = vmatpush1.msra.mxu0 %v2104
      %2106 = vmatprep.subr.mxu0 0.0
      %v2107 = vand.u32 %v2062, 4294901760
      %2108 = vmatpush1.msra.mxu0 %v2107
      %2109 = vmatprep.subr.mxu0 0.0
      %2110 = vmatpush1.msra.mxu0 0.0
      %2111 = vmatprep.subr.mxu0 0.0
      %2112 = vmatpush1.msra.mxu0 0.0
      %2113 = vmatprep.subr.mxu0 0.0
      %2114 = vmatpush1.msra.mxu0 0.0
      %2115 = vmatprep.subr.mxu0 0.0
      %2116 = vmatpush1.msra.mxu0 0.0
      %2117 = vmatprep.subr.mxu0 0.0
      %2118 = vmatpush1.msra.mxu0 0.0
      %2119 = vmatprep.subr.mxu0 0.0
      %2120 = vmatpush1.msra.mxu0 0.0
      %2121 = vmatprep.subr.mxu0 0.0
      %2122 = vmatpush1.msra.mxu0 0.0
      %2123 = vmatprep.subr.mxu0 0.0
      %2124 = vmatpush1.msra.mxu0 0.0
      %2125 = vmatprep.subr.mxu0 0.0
      %2126 = vmatpush1.msra.mxu0 0.0
      %2127 = vmatprep.subr.mxu0 0.0
      %2128 = vmatpush1.msra.mxu0 0.0
      %2129 = vmatprep.subr.mxu0 0.0
      %2130 = vmatpush1.msra.mxu0 0.0
      %2131 = vmatprep.subr.mxu0 0.0
      %2132 = vmatpush1.msra.mxu0 0.0
      %2133 = vmatprep.subr.mxu0 0.0
      %2134 = vmatpush1.msra.mxu0 0.0
      %2135 = vmatprep.subr.mxu0 0.0
      %2136 = vmatpush1.msra.mxu0 0.0
      %2137 = vmatprep.subr.mxu0 0.0
      %2138 = vmatpush1.msra.mxu0 0.0
      %2139 = vmatprep.subr.mxu0 0.0
      %2140 = vmatpush1.msra.mxu0 0.0
      %2141 = vmatprep.subr.mxu0 0.0
      %2142 = vmatpush1.msra.mxu0 0.0
      %2143 = vmatprep.mubr.f32.mxu0 0.0
      %v2144 = vand.u32 %v2038, 4294901760
      %v2145 = vsub.f32 %v2038, %v2144
      %v2146 = vand.u32 %v2145, 4294901760
      %v2147 = vsub.f32 %v2145, %v2146
      %v2148 = vand.u32 %v2147, 4294901760
      %2149 = vmatmul.mubr.f32.gmra.mrb[0].mxu0 %v2148
      %v2150 = vpop.f32.mrb[0].mxu0
      %v2151 = vadd.f32 0.0, %v2150
      %v2152 = vpop.f32.mrb[0].mxu0
      %2153 = vmatprep.mubr.f32.mxu0 0.0
      %v2154 = vand.u32 %v2041, 4294901760
      %v2155 = vsub.f32 %v2041, %v2154
      %v2156 = vand.u32 %v2155, 4294901760
      %v2157 = vsub.f32 %v2155, %v2156
      %v2158 = vand.u32 %v2157, 4294901760
      %2159 = vmatmul.mubr.f32.gmra.mrb[0].mxu0 %v2158
      %v2160 = vpop.f32.mrb[0].mxu0
      %v2161 = vadd.f32 0.0, %v2160
      %v2162 = vpop.f32.mrb[0].mxu0
      %2163 = vmatprep.mubr.f32.mxu0 0.0
      %v2164 = vand.u32 %v2044, 4294901760
      %v2165 = vsub.f32 %v2044, %v2164
      %v2166 = vand.u32 %v2165, 4294901760
      %v2167 = vsub.f32 %v2165, %v2166
      %v2168 = vand.u32 %v2167, 4294901760
      %2169 = vmatmul.mubr.f32.gmra.mrb[0].mxu0 %v2168
      %v2170 = vpop.f32.mrb[0].mxu0
      %v2171 = vadd.f32 0.0, %v2170
      %v2172 = vpop.f32.mrb[0].mxu0
      %2173 = vmatprep.mubr.f32.mxu0 0.0
      %v2174 = vand.u32 %v2047, 4294901760
      %v2175 = vsub.f32 %v2047, %v2174
      %v2176 = vand.u32 %v2175, 4294901760
      %v2177 = vsub.f32 %v2175, %v2176
      %v2178 = vand.u32 %v2177, 4294901760
      %2179 = vmatmul.mubr.f32.gmra.mrb[0].mxu0 %v2178
      %v2180 = vpop.f32.mrb[0].mxu0
      %v2181 = vadd.f32 0.0, %v2180
      %v2182 = vpop.f32.mrb[0].mxu0
      %2183 = vmatprep.mubr.f32.mxu0 0.0
      %v2184 = vand.u32 %v2050, 4294901760
      %v2185 = vsub.f32 %v2050, %v2184
      %v2186 = vand.u32 %v2185, 4294901760
      %v2187 = vsub.f32 %v2185, %v2186
      %v2188 = vand.u32 %v2187, 4294901760
      %2189 = vmatmul.mubr.f32.gmra.mrb[0].mxu0 %v2188
      %v2190 = vpop.f32.mrb[0].mxu0
      %v2191 = vadd.f32 0.0, %v2190
      %v2192 = vpop.f32.mrb[0].mxu0
      %2193 = vmatprep.mubr.f32.mxu0 0.0
      %v2194 = vand.u32 %v2053, 4294901760
      %v2195 = vsub.f32 %v2053, %v2194
      %v2196 = vand.u32 %v2195, 4294901760
      %v2197 = vsub.f32 %v2195, %v2196
      %v2198 = vand.u32 %v2197, 4294901760
      %2199 = vmatmul.mubr.f32.gmra.mrb[0].mxu0 %v2198
      %v2200 = vpop.f32.mrb[0].mxu0
      %v2201 = vadd.f32 0.0, %v2200
      %v2202 = vpop.f32.mrb[0].mxu0
      %2203 = vmatprep.mubr.f32.mxu0 0.0
      %v2204 = vand.u32 %v2056, 4294901760
      %v2205 = vsub.f32 %v2056, %v2204
      %v2206 = vand.u32 %v2205, 4294901760
      %v2207 = vsub.f32 %v2205, %v2206
      %v2208 = vand.u32 %v2207, 4294901760
      %2209 = vmatmul.mubr.f32.gmra.mrb[0].mxu0 %v2208
      %v2210 = vpop.f32.mrb[0].mxu0
      %v2211 = vadd.f32 0.0, %v2210
      %v2212 = vpop.f32.mrb[0].mxu0
      %2213 = vmatprep.mubr.f32.mxu0 0.0
      %v2214 = vand.u32 %v2059, 4294901760
      %v2215 = vsub.f32 %v2059, %v2214
      %v2216 = vand.u32 %v2215, 4294901760
      %v2217 = vsub.f32 %v2215, %v2216
      %v2218 = vand.u32 %v2217, 4294901760
      %2219 = vmatmul.mubr.f32.gmra.mrb[0].mxu0 %v2218
      %v2220 = vpop.f32.mrb[0].mxu0
      %v2221 = vadd.f32 0.0, %v2220
      %v2222 = vpop.f32.mrb[0].mxu0
      %2223 = vdwg.mxu0
      %2224 = vmatprep.subr.mxu0 0.0
      %v2225 = vand.u32 %v1986, 4294901760
      %v2226 = vsub.f32 %v1986, %v2225
      %v2227 = vand.u32 %v2226, 4294901760
      %v2228 = vsub.f32 %v2226, %v2227
      %v2229 = vand.u32 %v2228, 4294901760
      %2230 = vmatpush1.msra.mxu0 %v2229
      %2231 = vmatprep.subr.mxu0 0.0
      %v2232 = vand.u32 %v1987, 4294901760
      %v2233 = vsub.f32 %v1987, %v2232
      %v2234 = vand.u32 %v2233, 4294901760
      %v2235 = vsub.f32 %v2233, %v2234
      %v2236 = vand.u32 %v2235, 4294901760
      %2237 = vmatpush1.msra.mxu0 %v2236
      %2238 = vmatprep.subr.mxu0 0.0
      %v2239 = vand.u32 %v1988, 4294901760
      %v2240 = vsub.f32 %v1988, %v2239
      %v2241 = vand.u32 %v2240, 4294901760
      %v2242 = vsub.f32 %v2240, %v2241
      %v2243 = vand.u32 %v2242, 4294901760
      %2244 = vmatpush1.msra.mxu0 %v2243
      %2245 = vmatprep.subr.mxu0 0.0
      %v2246 = vand.u32 %v1989, 4294901760
      %v2247 = vsub.f32 %v1989, %v2246
      %v2248 = vand.u32 %v2247, 4294901760
      %v2249 = vsub.f32 %v2247, %v2248
      %v2250 = vand.u32 %v2249, 4294901760
      %2251 = vmatpush1.msra.mxu0 %v2250
      %2252 = vmatprep.subr.mxu0 0.0
      %v2253 = vand.u32 %v1990, 4294901760
      %v2254 = vsub.f32 %v1990, %v2253
      %v2255 = vand.u32 %v2254, 4294901760
      %v2256 = vsub.f32 %v2254, %v2255
      %v2257 = vand.u32 %v2256, 4294901760
      %2258 = vmatpush1.msra.mxu0 %v2257
      %2259 = vmatprep.subr.mxu0 0.0
      %v2260 = vand.u32 %v1991, 4294901760
      %v2261 = vsub.f32 %v1991, %v2260
      %v2262 = vand.u32 %v2261, 4294901760
      %v2263 = vsub.f32 %v2261, %v2262
      %v2264 = vand.u32 %v2263, 4294901760
      %2265 = vmatpush1.msra.mxu0 %v2264
      %2266 = vmatprep.subr.mxu0 0.0
      %v2267 = vand.u32 %v1992, 4294901760
      %v2268 = vsub.f32 %v1992, %v2267
      %v2269 = vand.u32 %v2268, 4294901760
      %v2270 = vsub.f32 %v2268, %v2269
      %v2271 = vand.u32 %v2270, 4294901760
      %2272 = vmatpush1.msra.mxu0 %v2271
      %2273 = vmatprep.subr.mxu0 0.0
      %v2274 = vand.u32 %v1993, 4294901760
      %v2275 = vsub.f32 %v1993, %v2274
      %v2276 = vand.u32 %v2275, 4294901760
      %v2277 = vsub.f32 %v2275, %v2276
      %v2278 = vand.u32 %v2277, 4294901760
      %2279 = vmatpush1.msra.mxu0 %v2278
      %2280 = vmatprep.subr.mxu0 0.0
      %v2281 = vand.u32 %v1994, 4294901760
      %v2282 = vsub.f32 %v1994, %v2281
      %v2283 = vand.u32 %v2282, 4294901760
      %v2284 = vsub.f32 %v2282, %v2283
      %v2285 = vand.u32 %v2284, 4294901760
      %2286 = vmatpush1.msra.mxu0 %v2285
      %2287 = vmatprep.subr.mxu0 0.0
      %v2288 = vand.u32 %v1995, 4294901760
      %v2289 = vsub.f32 %v1995, %v2288
      %v2290 = vand.u32 %v2289, 4294901760
      %v2291 = vsub.f32 %v2289, %v2290
      %v2292 = vand.u32 %v2291, 4294901760
      %2293 = vmatpush1.msra.mxu0 %v2292
      %2294 = vmatprep.subr.mxu0 0.0
      %v2295 = vand.u32 %v1996, 4294901760
      %v2296 = vsub.f32 %v1996, %v2295
      %v2297 = vand.u32 %v2296, 4294901760
      %v2298 = vsub.f32 %v2296, %v2297
      %v2299 = vand.u32 %v2298, 4294901760
      %2300 = vmatpush1.msra.mxu0 %v2299
      %2301 = vmatprep.subr.mxu0 0.0
      %v2302 = vand.u32 %v1997, 4294901760
      %v2303 = vsub.f32 %v1997, %v2302
      %v2304 = vand.u32 %v2303, 4294901760
      %v2305 = vsub.f32 %v2303, %v2304
      %v2306 = vand.u32 %v2305, 4294901760
      %2307 = vmatpush1.msra.mxu0 %v2306
      %2308 = vmatprep.subr.mxu0 0.0
      %v2309 = vand.u32 %v1998, 4294901760
      %v2310 = vsub.f32 %v1998, %v2309
      %v2311 = vand.u32 %v2310, 4294901760
      %v2312 = vsub.f32 %v2310, %v2311
      %v2313 = vand.u32 %v2312, 4294901760
      %2314 = vmatpush1.msra.mxu0 %v2313
      %2315 = vmatprep.subr.mxu0 0.0
      %v2316 = vand.u32 %v1999, 4294901760
      %v2317 = vsub.f32 %v1999, %v2316
      %v2318 = vand.u32 %v2317, 4294901760
      %v2319 = vsub.f32 %v2317, %v2318
      %v2320 = vand.u32 %v2319, 4294901760
      %2321 = vmatpush1.msra.mxu0 %v2320
      %2322 = vmatprep.subr.mxu0 0.0
      %v2323 = vand.u32 %v2062, 4294901760
      %v2324 = vsub.f32 %v2062, %v2323
      %v2325 = vand.u32 %v2324, 4294901760
      %v2326 = vsub.f32 %v2324, %v2325
      %v2327 = vand.u32 %v2326, 4294901760
      %2328 = vmatpush1.msra.mxu0 %v2327
      %2329 = vmatprep.subr.mxu0 0.0
      %2330 = vmatpush1.msra.mxu0 0.0
      %2331 = vmatprep.subr.mxu0 0.0
      %2332 = vmatpush1.msra.mxu0 0.0
      %2333 = vmatprep.subr.mxu0 0.0
      %2334 = vmatpush1.msra.mxu0 0.0
      %2335 = vmatprep.subr.mxu0 0.0
      %2336 = vmatpush1.msra.mxu0 0.0
      %2337 = vmatprep.subr.mxu0 0.0
      %2338 = vmatpush1.msra.mxu0 0.0
      %2339 = vmatprep.subr.mxu0 0.0
      %2340 = vmatpush1.msra.mxu0 0.0
      %2341 = vmatprep.subr.mxu0 0.0
      %2342 = vmatpush1.msra.mxu0 0.0
      %2343 = vmatprep.subr.mxu0 0.0
      %2344 = vmatpush1.msra.mxu0 0.0
      %2345 = vmatprep.subr.mxu0 0.0
      %2346 = vmatpush1.msra.mxu0 0.0
      %2347 = vmatprep.subr.mxu0 0.0
      %2348 = vmatpush1.msra.mxu0 0.0
      %2349 = vmatprep.subr.mxu0 0.0
      %2350 = vmatpush1.msra.mxu0 0.0
      %2351 = vmatprep.subr.mxu0 0.0
      %2352 = vmatpush1.msra.mxu0 0.0
      %2353 = vmatprep.subr.mxu0 0.0
      %2354 = vmatpush1.msra.mxu0 0.0
      %2355 = vmatprep.subr.mxu0 0.0
      %2356 = vmatpush1.msra.mxu0 0.0
      %2357 = vmatprep.subr.mxu0 0.0
      %2358 = vmatpush1.msra.mxu0 0.0
      %2359 = vmatprep.subr.mxu0 0.0
      %2360 = vmatpush1.msra.mxu0 0.0
      %2361 = vmatprep.subr.mxu0 0.0
      %2362 = vmatpush1.msra.mxu0 0.0
      %2363 = vmatprep.mubr.f32.mxu0 0.0
      %v2364 = vand.u32 %v2038, 4294901760
      %2365 = vmatmul.mubr.f32.gmra.mrb[0].mxu0 %v2364
      %v2366 = vpop.f32.mrb[0].mxu0
      %v2367 = vadd.f32 %v2151, %v2366
      %v2368 = vpop.f32.mrb[0].mxu0
      %2369 = vmatprep.mubr.f32.mxu0 0.0
      %v2370 = vand.u32 %v2041, 4294901760
      %2371 = vmatmul.mubr.f32.gmra.mrb[0].mxu0 %v2370
      %v2372 = vpop.f32.mrb[0].mxu0
      %v2373 = vadd.f32 %v2161, %v2372
      %v2374 = vpop.f32.mrb[0].mxu0
      %2375 = vmatprep.mubr.f32.mxu0 0.0
      %v2376 = vand.u32 %v2044, 4294901760
      %2377 = vmatmul.mubr.f32.gmra.mrb[0].mxu0 %v2376
      %v2378 = vpop.f32.mrb[0].mxu0
      %v2379 = vadd.f32 %v2171, %v2378
      %v2380 = vpop.f32.mrb[0].mxu0
      %2381 = vmatprep.mubr.f32.mxu0 0.0
      %v2382 = vand.u32 %v2047, 4294901760
      %2383 = vmatmul.mubr.f32.gmra.mrb[0].mxu0 %v2382
      %v2384 = vpop.f32.mrb[0].mxu0
      %v2385 = vadd.f32 %v2181, %v2384
      %v2386 = vpop.f32.mrb[0].mxu0
      %2387 = vmatprep.mubr.f32.mxu0 0.0
      %v2388 = vand.u32 %v2050, 4294901760
      %2389 = vmatmul.mubr.f32.gmra.mrb[0].mxu0 %v2388
      %v2390 = vpop.f32.mrb[0].mxu0
      %v2391 = vadd.f32 %v2191, %v2390
      %v2392 = vpop.f32.mrb[0].mxu0
      %2393 = vmatprep.mubr.f32.mxu0 0.0
      %v2394 = vand.u32 %v2053, 4294901760
      %2395 = vmatmul.mubr.f32.gmra.mrb[0].mxu0 %v2394
      %v2396 = vpop.f32.mrb[0].mxu0
      %v2397 = vadd.f32 %v2201, %v2396
      %v2398 = vpop.f32.mrb[0].mxu0
      %2399 = vmatprep.mubr.f32.mxu0 0.0
      %v2400 = vand.u32 %v2056, 4294901760
      %2401 = vmatmul.mubr.f32.gmra.mrb[0].mxu0 %v2400
      %v2402 = vpop.f32.mrb[0].mxu0
      %v2403 = vadd.f32 %v2211, %v2402
      %v2404 = vpop.f32.mrb[0].mxu0
      %2405 = vmatprep.mubr.f32.mxu0 0.0
      %v2406 = vand.u32 %v2059, 4294901760
      %2407 = vmatmul.mubr.f32.gmra.mrb[0].mxu0 %v2406
      %v2408 = vpop.f32.mrb[0].mxu0
      %v2409 = vadd.f32 %v2221, %v2408
      %v2410 = vpop.f32.mrb[0].mxu0
      %2411 = vdwg.mxu0
      %2412 = vmatprep.subr.mxu0 0.0
      %v2413 = vand.u32 %v1986, 4294901760
      %v2414 = vsub.f32 %v1986, %v2413
      %2415 = vmatpush1.msra.mxu0 %v2414
      %2416 = vmatprep.subr.mxu0 0.0
      %v2417 = vand.u32 %v1987, 4294901760
      %v2418 = vsub.f32 %v1987, %v2417
      %2419 = vmatpush1.msra.mxu0 %v2418
      %2420 = vmatprep.subr.mxu0 0.0
      %v2421 = vand.u32 %v1988, 4294901760
      %v2422 = vsub.f32 %v1988, %v2421
      %2423 = vmatpush1.msra.mxu0 %v2422
      %2424 = vmatprep.subr.mxu0 0.0
      %v2425 = vand.u32 %v1989, 4294901760
      %v2426 = vsub.f32 %v1989, %v2425
      %2427 = vmatpush1.msra.mxu0 %v2426
      %2428 = vmatprep.subr.mxu0 0.0
      %v2429 = vand.u32 %v1990, 4294901760
      %v2430 = vsub.f32 %v1990, %v2429
      %2431 = vmatpush1.msra.mxu0 %v2430
      %2432 = vmatprep.subr.mxu0 0.0
      %v2433 = vand.u32 %v1991, 4294901760
      %v2434 = vsub.f32 %v1991, %v2433
      %2435 = vmatpush1.msra.mxu0 %v2434
      %2436 = vmatprep.subr.mxu0 0.0
      %v2437 = vand.u32 %v1992, 4294901760
      %v2438 = vsub.f32 %v1992, %v2437
      %2439 = vmatpush1.msra.mxu0 %v2438
      %2440 = vmatprep.subr.mxu0 0.0
      %v2441 = vand.u32 %v1993, 4294901760
      %v2442 = vsub.f32 %v1993, %v2441
      %2443 = vmatpush1.msra.mxu0 %v2442
      %2444 = vmatprep.subr.mxu0 0.0
      %v2445 = vand.u32 %v1994, 4294901760
      %v2446 = vsub.f32 %v1994, %v2445
      %2447 = vmatpush1.msra.mxu0 %v2446
      %2448 = vmatprep.subr.mxu0 0.0
      %v2449 = vand.u32 %v1995, 4294901760
      %v2450 = vsub.f32 %v1995, %v2449
      %2451 = vmatpush1.msra.mxu0 %v2450
      %2452 = vmatprep.subr.mxu0 0.0
      %v2453 = vand.u32 %v1996, 4294901760
      %v2454 = vsub.f32 %v1996, %v2453
      %2455 = vmatpush1.msra.mxu0 %v2454
      %2456 = vmatprep.subr.mxu0 0.0
      %v2457 = vand.u32 %v1997, 4294901760
      %v2458 = vsub.f32 %v1997, %v2457
      %2459 = vmatpush1.msra.mxu0 %v2458
      %2460 = vmatprep.subr.mxu0 0.0
      %v2461 = vand.u32 %v1998, 4294901760
      %v2462 = vsub.f32 %v1998, %v2461
      %2463 = vmatpush1.msra.mxu0 %v2462
      %2464 = vmatprep.subr.mxu0 0.0
      %v2465 = vand.u32 %v1999, 4294901760
      %v2466 = vsub.f32 %v1999, %v2465
      %2467 = vmatpush1.msra.mxu0 %v2466
      %2468 = vmatprep.subr.mxu0 0.0
      %v2469 = vand.u32 %v2062, 4294901760
      %v2470 = vsub.f32 %v2062, %v2469
      %2471 = vmatpush1.msra.mxu0 %v2470
      %2472 = vmatprep.subr.mxu0 0.0
      %2473 = vmatpush1.msra.mxu0 0.0
      %2474 = vmatprep.subr.mxu0 0.0
      %2475 = vmatpush1.msra.mxu0 0.0
      %2476 = vmatprep.subr.mxu0 0.0
      %2477 = vmatpush1.msra.mxu0 0.0
      %2478 = vmatprep.subr.mxu0 0.0
      %2479 = vmatpush1.msra.mxu0 0.0
      %2480 = vmatprep.subr.mxu0 0.0
      %2481 = vmatpush1.msra.mxu0 0.0
      %2482 = vmatprep.subr.mxu0 0.0
      %2483 = vmatpush1.msra.mxu0 0.0
      %2484 = vmatprep.subr.mxu0 0.0
      %2485 = vmatpush1.msra.mxu0 0.0
      %2486 = vmatprep.subr.mxu0 0.0
      %2487 = vmatpush1.msra.mxu0 0.0
      %2488 = vmatprep.subr.mxu0 0.0
      %2489 = vmatpush1.msra.mxu0 0.0
      %2490 = vmatprep.subr.mxu0 0.0
      %2491 = vmatpush1.msra.mxu0 0.0
      %2492 = vmatprep.subr.mxu0 0.0
      %2493 = vmatpush1.msra.mxu0 0.0
      %2494 = vmatprep.subr.mxu0 0.0
      %2495 = vmatpush1.msra.mxu0 0.0
      %2496 = vmatprep.subr.mxu0 0.0
      %2497 = vmatpush1.msra.mxu0 0.0
      %2498 = vmatprep.subr.mxu0 0.0
      %2499 = vmatpush1.msra.mxu0 0.0
      %2500 = vmatprep.subr.mxu0 0.0
      %2501 = vmatpush1.msra.mxu0 0.0
      %2502 = vmatprep.subr.mxu0 0.0
      %2503 = vmatpush1.msra.mxu0 0.0
      %2504 = vmatprep.subr.mxu0 0.0
      %2505 = vmatpush1.msra.mxu0 0.0
      %2506 = vmatprep.mubr.f32.mxu0 0.0
      %v2507 = vand.u32 %v2038, 4294901760
      %v2508 = vsub.f32 %v2038, %v2507
      %2509 = vmatmul.mubr.f32.gmra.mrb[0].mxu0 %v2508
      %v2510 = vpop.f32.mrb[0].mxu0
      %v2511 = vadd.f32 %v2367, %v2510
      %v2512 = vpop.f32.mrb[0].mxu0
      %2513 = vmatprep.mubr.f32.mxu0 0.0
      %v2514 = vand.u32 %v2041, 4294901760
      %v2515 = vsub.f32 %v2041, %v2514
      %2516 = vmatmul.mubr.f32.gmra.mrb[0].mxu0 %v2515
      %v2517 = vpop.f32.mrb[0].mxu0
      %v2518 = vadd.f32 %v2373, %v2517
      %v2519 = vpop.f32.mrb[0].mxu0
      %2520 = vmatprep.mubr.f32.mxu0 0.0
      %v2521 = vand.u32 %v2044, 4294901760
      %v2522 = vsub.f32 %v2044, %v2521
      %2523 = vmatmul.mubr.f32.gmra.mrb[0].mxu0 %v2522
      %v2524 = vpop.f32.mrb[0].mxu0
      %v2525 = vadd.f32 %v2379, %v2524
      %v2526 = vpop.f32.mrb[0].mxu0
      %2527 = vmatprep.mubr.f32.mxu0 0.0
      %v2528 = vand.u32 %v2047, 4294901760
      %v2529 = vsub.f32 %v2047, %v2528
      %2530 = vmatmul.mubr.f32.gmra.mrb[0].mxu0 %v2529
      %v2531 = vpop.f32.mrb[0].mxu0
      %v2532 = vadd.f32 %v2385, %v2531
      %v2533 = vpop.f32.mrb[0].mxu0
      %2534 = vmatprep.mubr.f32.mxu0 0.0
      %v2535 = vand.u32 %v2050, 4294901760
      %v2536 = vsub.f32 %v2050, %v2535
      %2537 = vmatmul.mubr.f32.gmra.mrb[0].mxu0 %v2536
      %v2538 = vpop.f32.mrb[0].mxu0
      %v2539 = vadd.f32 %v2391, %v2538
      %v2540 = vpop.f32.mrb[0].mxu0
      %2541 = vmatprep.mubr.f32.mxu0 0.0
      %v2542 = vand.u32 %v2053, 4294901760
      %v2543 = vsub.f32 %v2053, %v2542
      %2544 = vmatmul.mubr.f32.gmra.mrb[0].mxu0 %v2543
      %v2545 = vpop.f32.mrb[0].mxu0
      %v2546 = vadd.f32 %v2397, %v2545
      %v2547 = vpop.f32.mrb[0].mxu0
      %2548 = vmatprep.mubr.f32.mxu0 0.0
      %v2549 = vand.u32 %v2056, 4294901760
      %v2550 = vsub.f32 %v2056, %v2549
      %2551 = vmatmul.mubr.f32.gmra.mrb[0].mxu0 %v2550
      %v2552 = vpop.f32.mrb[0].mxu0
      %v2553 = vadd.f32 %v2403, %v2552
      %v2554 = vpop.f32.mrb[0].mxu0
      %2555 = vmatprep.mubr.f32.mxu0 0.0
      %v2556 = vand.u32 %v2059, 4294901760
      %v2557 = vsub.f32 %v2059, %v2556
      %2558 = vmatmul.mubr.f32.gmra.mrb[0].mxu0 %v2557
      %v2559 = vpop.f32.mrb[0].mxu0
      %v2560 = vadd.f32 %v2409, %v2559
      %v2561 = vpop.f32.mrb[0].mxu0
      %2562 = vdwg.mxu0
      %2563 = vmatprep.subr.mxu0 0.0
      %v2564 = vand.u32 %v1986, 4294901760
      %2565 = vmatpush1.msra.mxu0 %v2564
      %2566 = vmatprep.subr.mxu0 0.0
      %v2567 = vand.u32 %v1987, 4294901760
      %2568 = vmatpush1.msra.mxu0 %v2567
      %2569 = vmatprep.subr.mxu0 0.0
      %v2570 = vand.u32 %v1988, 4294901760
      %2571 = vmatpush1.msra.mxu0 %v2570
      %2572 = vmatprep.subr.mxu0 0.0
      %v2573 = vand.u32 %v1989, 4294901760
      %2574 = vmatpush1.msra.mxu0 %v2573
      %2575 = vmatprep.subr.mxu0 0.0
      %v2576 = vand.u32 %v1990, 4294901760
      %2577 = vmatpush1.msra.mxu0 %v2576
      %2578 = vmatprep.subr.mxu0 0.0
      %v2579 = vand.u32 %v1991, 4294901760
      %2580 = vmatpush1.msra.mxu0 %v2579
      %2581 = vmatprep.subr.mxu0 0.0
      %v2582 = vand.u32 %v1992, 4294901760
      %2583 = vmatpush1.msra.mxu0 %v2582
      %2584 = vmatprep.subr.mxu0 0.0
      %v2585 = vand.u32 %v1993, 4294901760
      %2586 = vmatpush1.msra.mxu0 %v2585
      %2587 = vmatprep.subr.mxu0 0.0
      %v2588 = vand.u32 %v1994, 4294901760
      %2589 = vmatpush1.msra.mxu0 %v2588
      %2590 = vmatprep.subr.mxu0 0.0
      %v2591 = vand.u32 %v1995, 4294901760
      %2592 = vmatpush1.msra.mxu0 %v2591
      %2593 = vmatprep.subr.mxu0 0.0
      %v2594 = vand.u32 %v1996, 4294901760
      %2595 = vmatpush1.msra.mxu0 %v2594
      %2596 = vmatprep.subr.mxu0 0.0
      %v2597 = vand.u32 %v1997, 4294901760
      %2598 = vmatpush1.msra.mxu0 %v2597
      %2599 = vmatprep.subr.mxu0 0.0
      %v2600 = vand.u32 %v1998, 4294901760
      %2601 = vmatpush1.msra.mxu0 %v2600
      %2602 = vmatprep.subr.mxu0 0.0
      %v2603 = vand.u32 %v1999, 4294901760
      %2604 = vmatpush1.msra.mxu0 %v2603
      %2605 = vmatprep.subr.mxu0 0.0
      %v2606 = vand.u32 %v2062, 4294901760
      %2607 = vmatpush1.msra.mxu0 %v2606
      %2608 = vmatprep.subr.mxu0 0.0
      %2609 = vmatpush1.msra.mxu0 0.0
      %2610 = vmatprep.subr.mxu0 0.0
      %2611 = vmatpush1.msra.mxu0 0.0
      %2612 = vmatprep.subr.mxu0 0.0
      %2613 = vmatpush1.msra.mxu0 0.0
      %2614 = vmatprep.subr.mxu0 0.0
      %2615 = vmatpush1.msra.mxu0 0.0
      %2616 = vmatprep.subr.mxu0 0.0
      %2617 = vmatpush1.msra.mxu0 0.0
      %2618 = vmatprep.subr.mxu0 0.0
      %2619 = vmatpush1.msra.mxu0 0.0
      %2620 = vmatprep.subr.mxu0 0.0
      %2621 = vmatpush1.msra.mxu0 0.0
      %2622 = vmatprep.subr.mxu0 0.0
      %2623 = vmatpush1.msra.mxu0 0.0
      %2624 = vmatprep.subr.mxu0 0.0
      %2625 = vmatpush1.msra.mxu0 0.0
      %2626 = vmatprep.subr.mxu0 0.0
      %2627 = vmatpush1.msra.mxu0 0.0
      %2628 = vmatprep.subr.mxu0 0.0
      %2629 = vmatpush1.msra.mxu0 0.0
      %2630 = vmatprep.subr.mxu0 0.0
      %2631 = vmatpush1.msra.mxu0 0.0
      %2632 = vmatprep.subr.mxu0 0.0
      %2633 = vmatpush1.msra.mxu0 0.0
      %2634 = vmatprep.subr.mxu0 0.0
      %2635 = vmatpush1.msra.mxu0 0.0
      %2636 = vmatprep.subr.mxu0 0.0
      %2637 = vmatpush1.msra.mxu0 0.0
      %2638 = vmatprep.subr.mxu0 0.0
      %2639 = vmatpush1.msra.mxu0 0.0
      %2640 = vmatprep.subr.mxu0 0.0
      %2641 = vmatpush1.msra.mxu0 0.0
      %2642 = vmatprep.mubr.f32.mxu0 0.0
      %v2643 = vand.u32 %v2038, 4294901760
      %v2644 = vsub.f32 %v2038, %v2643
      %v2645 = vand.u32 %v2644, 4294901760
      %2646 = vmatmul.mubr.f32.gmra.mrb[0].mxu0 %v2645
      %v2647 = vpop.f32.mrb[0].mxu0
      %v2648 = vadd.f32 %v2511, %v2647
      %v2649 = vpop.f32.mrb[0].mxu0
      %2650 = vmatprep.mubr.f32.mxu0 0.0
      %v2651 = vand.u32 %v2041, 4294901760
      %v2652 = vsub.f32 %v2041, %v2651
      %v2653 = vand.u32 %v2652, 4294901760
      %2654 = vmatmul.mubr.f32.gmra.mrb[0].mxu0 %v2653
      %v2655 = vpop.f32.mrb[0].mxu0
      %v2656 = vadd.f32 %v2518, %v2655
      %v2657 = vpop.f32.mrb[0].mxu0
      %2658 = vmatprep.mubr.f32.mxu0 0.0
      %v2659 = vand.u32 %v2044, 4294901760
      %v2660 = vsub.f32 %v2044, %v2659
      %v2661 = vand.u32 %v2660, 4294901760
      %2662 = vmatmul.mubr.f32.gmra.mrb[0].mxu0 %v2661
      %v2663 = vpop.f32.mrb[0].mxu0
      %v2664 = vadd.f32 %v2525, %v2663
      %v2665 = vpop.f32.mrb[0].mxu0
      %2666 = vmatprep.mubr.f32.mxu0 0.0
      %v2667 = vand.u32 %v2047, 4294901760
      %v2668 = vsub.f32 %v2047, %v2667
      %v2669 = vand.u32 %v2668, 4294901760
      %2670 = vmatmul.mubr.f32.gmra.mrb[0].mxu0 %v2669
      %v2671 = vpop.f32.mrb[0].mxu0
      %v2672 = vadd.f32 %v2532, %v2671
      %v2673 = vpop.f32.mrb[0].mxu0
      %2674 = vmatprep.mubr.f32.mxu0 0.0
      %v2675 = vand.u32 %v2050, 4294901760
      %v2676 = vsub.f32 %v2050, %v2675
      %v2677 = vand.u32 %v2676, 4294901760
      %2678 = vmatmul.mubr.f32.gmra.mrb[0].mxu0 %v2677
      %v2679 = vpop.f32.mrb[0].mxu0
      %v2680 = vadd.f32 %v2539, %v2679
      %v2681 = vpop.f32.mrb[0].mxu0
      %2682 = vmatprep.mubr.f32.mxu0 0.0
      %v2683 = vand.u32 %v2053, 4294901760
      %v2684 = vsub.f32 %v2053, %v2683
      %v2685 = vand.u32 %v2684, 4294901760
      %2686 = vmatmul.mubr.f32.gmra.mrb[0].mxu0 %v2685
      %v2687 = vpop.f32.mrb[0].mxu0
      %v2688 = vadd.f32 %v2546, %v2687
      %v2689 = vpop.f32.mrb[0].mxu0
      %2690 = vmatprep.mubr.f32.mxu0 0.0
      %v2691 = vand.u32 %v2056, 4294901760
      %v2692 = vsub.f32 %v2056, %v2691
      %v2693 = vand.u32 %v2692, 4294901760
      %2694 = vmatmul.mubr.f32.gmra.mrb[0].mxu0 %v2693
      %v2695 = vpop.f32.mrb[0].mxu0
      %v2696 = vadd.f32 %v2553, %v2695
      %v2697 = vpop.f32.mrb[0].mxu0
      %2698 = vmatprep.mubr.f32.mxu0 0.0
      %v2699 = vand.u32 %v2059, 4294901760
      %v2700 = vsub.f32 %v2059, %v2699
      %v2701 = vand.u32 %v2700, 4294901760
      %2702 = vmatmul.mubr.f32.gmra.mrb[0].mxu0 %v2701
      %v2703 = vpop.f32.mrb[0].mxu0
      %v2704 = vadd.f32 %v2560, %v2703
      %v2705 = vpop.f32.mrb[0].mxu0
      %2706 = vdwg.mxu0
      %2707 = vmatprep.subr.mxu0 0.0
      %v2708 = vand.u32 %v1986, 4294901760
      %v2709 = vsub.f32 %v1986, %v2708
      %v2710 = vand.u32 %v2709, 4294901760
      %2711 = vmatpush1.msra.mxu0 %v2710
      %2712 = vmatprep.subr.mxu0 0.0
      %v2713 = vand.u32 %v1987, 4294901760
      %v2714 = vsub.f32 %v1987, %v2713
      %v2715 = vand.u32 %v2714, 4294901760
      %2716 = vmatpush1.msra.mxu0 %v2715
      %2717 = vmatprep.subr.mxu0 0.0
      %v2718 = vand.u32 %v1988, 4294901760
      %v2719 = vsub.f32 %v1988, %v2718
      %v2720 = vand.u32 %v2719, 4294901760
      %2721 = vmatpush1.msra.mxu0 %v2720
      %2722 = vmatprep.subr.mxu0 0.0
      %v2723 = vand.u32 %v1989, 4294901760
      %v2724 = vsub.f32 %v1989, %v2723
      %v2725 = vand.u32 %v2724, 4294901760
      %2726 = vmatpush1.msra.mxu0 %v2725
      %2727 = vmatprep.subr.mxu0 0.0
      %v2728 = vand.u32 %v1990, 4294901760
      %v2729 = vsub.f32 %v1990, %v2728
      %v2730 = vand.u32 %v2729, 4294901760
      %2731 = vmatpush1.msra.mxu0 %v2730
      %2732 = vmatprep.subr.mxu0 0.0
      %v2733 = vand.u32 %v1991, 4294901760
      %v2734 = vsub.f32 %v1991, %v2733
      %v2735 = vand.u32 %v2734, 4294901760
      %2736 = vmatpush1.msra.mxu0 %v2735
      %2737 = vmatprep.subr.mxu0 0.0
      %v2738 = vand.u32 %v1992, 4294901760
      %v2739 = vsub.f32 %v1992, %v2738
      %v2740 = vand.u32 %v2739, 4294901760
      %2741 = vmatpush1.msra.mxu0 %v2740
      %2742 = vmatprep.subr.mxu0 0.0
      %v2743 = vand.u32 %v1993, 4294901760
      %v2744 = vsub.f32 %v1993, %v2743
      %v2745 = vand.u32 %v2744, 4294901760
      %2746 = vmatpush1.msra.mxu0 %v2745
      %2747 = vmatprep.subr.mxu0 0.0
      %v2748 = vand.u32 %v1994, 4294901760
      %v2749 = vsub.f32 %v1994, %v2748
      %v2750 = vand.u32 %v2749, 4294901760
      %2751 = vmatpush1.msra.mxu0 %v2750
      %2752 = vmatprep.subr.mxu0 0.0
      %v2753 = vand.u32 %v1995, 4294901760
      %v2754 = vsub.f32 %v1995, %v2753
      %v2755 = vand.u32 %v2754, 4294901760
      %2756 = vmatpush1.msra.mxu0 %v2755
      %2757 = vmatprep.subr.mxu0 0.0
      %v2758 = vand.u32 %v1996, 4294901760
      %v2759 = vsub.f32 %v1996, %v2758
      %v2760 = vand.u32 %v2759, 4294901760
      %2761 = vmatpush1.msra.mxu0 %v2760
      %2762 = vmatprep.subr.mxu0 0.0
      %v2763 = vand.u32 %v1997, 4294901760
      %v2764 = vsub.f32 %v1997, %v2763
      %v2765 = vand.u32 %v2764, 4294901760
      %2766 = vmatpush1.msra.mxu0 %v2765
      %2767 = vmatprep.subr.mxu0 0.0
      %v2768 = vand.u32 %v1998, 4294901760
      %v2769 = vsub.f32 %v1998, %v2768
      %v2770 = vand.u32 %v2769, 4294901760
      %2771 = vmatpush1.msra.mxu0 %v2770
      %2772 = vmatprep.subr.mxu0 0.0
      %v2773 = vand.u32 %v1999, 4294901760
      %v2774 = vsub.f32 %v1999, %v2773
      %v2775 = vand.u32 %v2774, 4294901760
      %2776 = vmatpush1.msra.mxu0 %v2775
      %2777 = vmatprep.subr.mxu0 0.0
      %v2778 = vand.u32 %v2062, 4294901760
      %v2779 = vsub.f32 %v2062, %v2778
      %v2780 = vand.u32 %v2779, 4294901760
      %2781 = vmatpush1.msra.mxu0 %v2780
      %2782 = vmatprep.subr.mxu0 0.0
      %2783 = vmatpush1.msra.mxu0 0.0
      %2784 = vmatprep.subr.mxu0 0.0
      %2785 = vmatpush1.msra.mxu0 0.0
      %2786 = vmatprep.subr.mxu0 0.0
      %2787 = vmatpush1.msra.mxu0 0.0
      %2788 = vmatprep.subr.mxu0 0.0
      %2789 = vmatpush1.msra.mxu0 0.0
      %2790 = vmatprep.subr.mxu0 0.0
      %2791 = vmatpush1.msra.mxu0 0.0
      %2792 = vmatprep.subr.mxu0 0.0
      %2793 = vmatpush1.msra.mxu0 0.0
      %2794 = vmatprep.subr.mxu0 0.0
      %2795 = vmatpush1.msra.mxu0 0.0
      %2796 = vmatprep.subr.mxu0 0.0
      %2797 = vmatpush1.msra.mxu0 0.0
      %2798 = vmatprep.subr.mxu0 0.0
      %2799 = vmatpush1.msra.mxu0 0.0
      %2800 = vmatprep.subr.mxu0 0.0
      %2801 = vmatpush1.msra.mxu0 0.0
      %2802 = vmatprep.subr.mxu0 0.0
      %2803 = vmatpush1.msra.mxu0 0.0
      %2804 = vmatprep.subr.mxu0 0.0
      %2805 = vmatpush1.msra.mxu0 0.0
      %2806 = vmatprep.subr.mxu0 0.0
      %2807 = vmatpush1.msra.mxu0 0.0
      %2808 = vmatprep.subr.mxu0 0.0
      %2809 = vmatpush1.msra.mxu0 0.0
      %2810 = vmatprep.subr.mxu0 0.0
      %2811 = vmatpush1.msra.mxu0 0.0
      %2812 = vmatprep.subr.mxu0 0.0
      %2813 = vmatpush1.msra.mxu0 0.0
      %2814 = vmatprep.subr.mxu0 0.0
      %2815 = vmatpush1.msra.mxu0 0.0
      %2816 = vmatprep.mubr.f32.mxu0 0.0
      %v2817 = vand.u32 %v2038, 4294901760
      %2818 = vmatmul.mubr.f32.gmra.mrb[0].mxu0 %v2817
      %v2819 = vpop.f32.mrb[0].mxu0
      %v2820 = vadd.f32 %v2648, %v2819
      %v2821 = vpop.f32.mrb[0].mxu0
      %2822 = vmatprep.mubr.f32.mxu0 0.0
      %v2823 = vand.u32 %v2041, 4294901760
      %2824 = vmatmul.mubr.f32.gmra.mrb[0].mxu0 %v2823
      %v2825 = vpop.f32.mrb[0].mxu0
      %v2826 = vadd.f32 %v2656, %v2825
      %v2827 = vpop.f32.mrb[0].mxu0
      %2828 = vmatprep.mubr.f32.mxu0 0.0
      %v2829 = vand.u32 %v2044, 4294901760
      %2830 = vmatmul.mubr.f32.gmra.mrb[0].mxu0 %v2829
      %v2831 = vpop.f32.mrb[0].mxu0
      %v2832 = vadd.f32 %v2664, %v2831
      %v2833 = vpop.f32.mrb[0].mxu0
      %2834 = vmatprep.mubr.f32.mxu0 0.0
      %v2835 = vand.u32 %v2047, 4294901760
      %2836 = vmatmul.mubr.f32.gmra.mrb[0].mxu0 %v2835
      %v2837 = vpop.f32.mrb[0].mxu0
      %v2838 = vadd.f32 %v2672, %v2837
      %v2839 = vpop.f32.mrb[0].mxu0
      %2840 = vmatprep.mubr.f32.mxu0 0.0
      %v2841 = vand.u32 %v2050, 4294901760
      %2842 = vmatmul.mubr.f32.gmra.mrb[0].mxu0 %v2841
      %v2843 = vpop.f32.mrb[0].mxu0
      %v2844 = vadd.f32 %v2680, %v2843
      %v2845 = vpop.f32.mrb[0].mxu0
      %2846 = vmatprep.mubr.f32.mxu0 0.0
      %v2847 = vand.u32 %v2053, 4294901760
      %2848 = vmatmul.mubr.f32.gmra.mrb[0].mxu0 %v2847
      %v2849 = vpop.f32.mrb[0].mxu0
      %v2850 = vadd.f32 %v2688, %v2849
      %v2851 = vpop.f32.mrb[0].mxu0
      %2852 = vmatprep.mubr.f32.mxu0 0.0
      %v2853 = vand.u32 %v2056, 4294901760
      %2854 = vmatmul.mubr.f32.gmra.mrb[0].mxu0 %v2853
      %v2855 = vpop.f32.mrb[0].mxu0
      %v2856 = vadd.f32 %v2696, %v2855
      %v2857 = vpop.f32.mrb[0].mxu0
      %2858 = vmatprep.mubr.f32.mxu0 0.0
      %v2859 = vand.u32 %v2059, 4294901760
      %2860 = vmatmul.mubr.f32.gmra.mrb[0].mxu0 %v2859
      %v2861 = vpop.f32.mrb[0].mxu0
      %v2862 = vadd.f32 %v2704, %v2861
      %v2863 = vpop.f32.mrb[0].mxu0
      %2864 = vdwg.mxu0
      %2865 = vmatprep.subr.mxu0 0.0
      %v2866 = vand.u32 %v1986, 4294901760
      %2867 = vmatpush1.msra.mxu0 %v2866
      %2868 = vmatprep.subr.mxu0 0.0
      %v2869 = vand.u32 %v1987, 4294901760
      %2870 = vmatpush1.msra.mxu0 %v2869
      %2871 = vmatprep.subr.mxu0 0.0
      %v2872 = vand.u32 %v1988, 4294901760
      %2873 = vmatpush1.msra.mxu0 %v2872
      %2874 = vmatprep.subr.mxu0 0.0
      %v2875 = vand.u32 %v1989, 4294901760
      %2876 = vmatpush1.msra.mxu0 %v2875
      %2877 = vmatprep.subr.mxu0 0.0
      %v2878 = vand.u32 %v1990, 4294901760
      %2879 = vmatpush1.msra.mxu0 %v2878
      %2880 = vmatprep.subr.mxu0 0.0
      %v2881 = vand.u32 %v1991, 4294901760
      %2882 = vmatpush1.msra.mxu0 %v2881
      %2883 = vmatprep.subr.mxu0 0.0
      %v2884 = vand.u32 %v1992, 4294901760
      %2885 = vmatpush1.msra.mxu0 %v2884
      %2886 = vmatprep.subr.mxu0 0.0
      %v2887 = vand.u32 %v1993, 4294901760
      %2888 = vmatpush1.msra.mxu0 %v2887
      %2889 = vmatprep.subr.mxu0 0.0
      %v2890 = vand.u32 %v1994, 4294901760
      %2891 = vmatpush1.msra.mxu0 %v2890
      %2892 = vmatprep.subr.mxu0 0.0
      %v2893 = vand.u32 %v1995, 4294901760
      %2894 = vmatpush1.msra.mxu0 %v2893
      %2895 = vmatprep.subr.mxu0 0.0
      %v2896 = vand.u32 %v1996, 4294901760
      %2897 = vmatpush1.msra.mxu0 %v2896
      %2898 = vmatprep.subr.mxu0 0.0
      %v2899 = vand.u32 %v1997, 4294901760
      %2900 = vmatpush1.msra.mxu0 %v2899
      %2901 = vmatprep.subr.mxu0 0.0
      %v2902 = vand.u32 %v1998, 4294901760
      %2903 = vmatpush1.msra.mxu0 %v2902
      %2904 = vmatprep.subr.mxu0 0.0
      %v2905 = vand.u32 %v1999, 4294901760
      %2906 = vmatpush1.msra.mxu0 %v2905
      %2907 = vmatprep.subr.mxu0 0.0
      %v2908 = vand.u32 %v2062, 4294901760
      %2909 = vmatpush1.msra.mxu0 %v2908
      %2910 = vmatprep.subr.mxu0 0.0
      %2911 = vmatpush1.msra.mxu0 0.0
      %2912 = vmatprep.subr.mxu0 0.0
      %2913 = vmatpush1.msra.mxu0 0.0
      %2914 = vmatprep.subr.mxu0 0.0
      %2915 = vmatpush1.msra.mxu0 0.0
      %2916 = vmatprep.subr.mxu0 0.0
      %2917 = vmatpush1.msra.mxu0 0.0
      %2918 = vmatprep.subr.mxu0 0.0
      %2919 = vmatpush1.msra.mxu0 0.0
      %2920 = vmatprep.subr.mxu0 0.0
      %2921 = vmatpush1.msra.mxu0 0.0
      %2922 = vmatprep.subr.mxu0 0.0
      %2923 = vmatpush1.msra.mxu0 0.0
      %2924 = vmatprep.subr.mxu0 0.0
      %2925 = vmatpush1.msra.mxu0 0.0
      %2926 = vmatprep.subr.mxu0 0.0
      %2927 = vmatpush1.msra.mxu0 0.0
      %2928 = vmatprep.subr.mxu0 0.0
      %2929 = vmatpush1.msra.mxu0 0.0
      %2930 = vmatprep.subr.mxu0 0.0
      %2931 = vmatpush1.msra.mxu0 0.0
      %2932 = vmatprep.subr.mxu0 0.0
      %2933 = vmatpush1.msra.mxu0 0.0
      %2934 = vmatprep.subr.mxu0 0.0
      %2935 = vmatpush1.msra.mxu0 0.0
      %2936 = vmatprep.subr.mxu0 0.0
      %2937 = vmatpush1.msra.mxu0 0.0
      %2938 = vmatprep.subr.mxu0 0.0
      %2939 = vmatpush1.msra.mxu0 0.0
      %2940 = vmatprep.subr.mxu0 0.0
      %2941 = vmatpush1.msra.mxu0 0.0
      %2942 = vmatprep.subr.mxu0 0.0
      %2943 = vmatpush1.msra.mxu0 0.0
      %2944 = vmatprep.mubr.f32.mxu0 0.0
      %v2945 = vand.u32 %v2038, 4294901760
      %2946 = vmatmul.mubr.f32.gmra.mrb[0].mxu0 %v2945
      %v2947 = vpop.f32.mrb[0].mxu0
      %v2948 = vadd.f32 %v2820, %v2947
      %v2949 = vpop.f32.mrb[0].mxu0
      %2950 = vmatprep.mubr.f32.mxu0 0.0
      %v2951 = vand.u32 %v2041, 4294901760
      %2952 = vmatmul.mubr.f32.gmra.mrb[0].mxu0 %v2951
      %v2953 = vpop.f32.mrb[0].mxu0
      %v2954 = vadd.f32 %v2826, %v2953
      %v2955 = vpop.f32.mrb[0].mxu0
      %2956 = vmatprep.mubr.f32.mxu0 0.0
      %v2957 = vand.u32 %v2044, 4294901760
      %2958 = vmatmul.mubr.f32.gmra.mrb[0].mxu0 %v2957
      %v2959 = vpop.f32.mrb[0].mxu0
      %v2960 = vadd.f32 %v2832, %v2959
      %v2961 = vpop.f32.mrb[0].mxu0
      %2962 = vmatprep.mubr.f32.mxu0 0.0
      %v2963 = vand.u32 %v2047, 4294901760
      %2964 = vmatmul.mubr.f32.gmra.mrb[0].mxu0 %v2963
      %v2965 = vpop.f32.mrb[0].mxu0
      %v2966 = vadd.f32 %v2838, %v2965
      %v2967 = vpop.f32.mrb[0].mxu0
      %2968 = vmatprep.mubr.f32.mxu0 0.0
      %v2969 = vand.u32 %v2050, 4294901760
      %2970 = vmatmul.mubr.f32.gmra.mrb[0].mxu0 %v2969
      %v2971 = vpop.f32.mrb[0].mxu0
      %v2972 = vadd.f32 %v2844, %v2971
      %v2973 = vpop.f32.mrb[0].mxu0
      %2974 = vmatprep.mubr.f32.mxu0 0.0
      %v2975 = vand.u32 %v2053, 4294901760
      %2976 = vmatmul.mubr.f32.gmra.mrb[0].mxu0 %v2975
      %v2977 = vpop.f32.mrb[0].mxu0
      %v2978 = vadd.f32 %v2850, %v2977
      %v2979 = vpop.f32.mrb[0].mxu0
      %2980 = vmatprep.mubr.f32.mxu0 0.0
      %v2981 = vand.u32 %v2056, 4294901760
      %2982 = vmatmul.mubr.f32.gmra.mrb[0].mxu0 %v2981
      %v2983 = vpop.f32.mrb[0].mxu0
      %v2984 = vadd.f32 %v2856, %v2983
      %v2985 = vpop.f32.mrb[0].mxu0
      %2986 = vmatprep.mubr.f32.mxu0 0.0
      %v2987 = vand.u32 %v2059, 4294901760
      %2988 = vmatmul.mubr.f32.gmra.mrb[0].mxu0 %v2987
      %v2989 = vpop.f32.mrb[0].mxu0
      %v2990 = vadd.f32 %v2862, %v2989
      %v2991 = vpop.f32.mrb[0].mxu0
      %2992 = vdwg.mxu0
      %v3001 = vrot.slane %v2948, 7
      %v3002 = vrot.slane %v2954, 7
      %v3003 = vsel %vm361, %v3001, %v3002
      %v3004 = vrot.slane %v2960, 7
      %v3005 = vsel %vm361, %v3002, %v3004
      %v3006 = vrot.slane %v2966, 7
      %v3007 = vsel %vm361, %v3004, %v3006
      %v3008 = vrot.slane %v2972, 7
      %v3009 = vsel %vm361, %v3006, %v3008
      %v3010 = vrot.slane %v2978, 7
      %v3011 = vsel %vm361, %v3008, %v3010
      %v3012 = vrot.slane %v2984, 7
      %v3013 = vsel %vm361, %v3010, %v3012
      %v3014 = vrot.slane %v2990, 7
      %v3015 = vsel %vm361, %v3012, %v3014
      %v3024 = vsel %vm361, 0.0, %v3001
      %v3025 = vsel %vm638, %v3015, 0.0
      %v3028 = vrot.slane %v3024, 1
      %v3029 = vrot.slane %v3003, 1
      %v3030 = vsel %vm410, %v3028, %v3029
      %v3031 = vrot.slane %v3005, 1
      %v3032 = vsel %vm410, %v3029, %v3031
      %v3033 = vrot.slane %v3007, 1
      %v3034 = vsel %vm410, %v3031, %v3033
      %v3035 = vrot.slane %v3009, 1
      %v3036 = vsel %vm410, %v3033, %v3035
      %v3037 = vrot.slane %v3011, 1
      %v3038 = vsel %vm410, %v3035, %v3037
      %v3039 = vrot.slane %v3013, 1
      %v3040 = vsel %vm410, %v3037, %v3039
      %v3041 = vrot.slane %v3025, 1
      %v3042 = vsel %vm410, %v3039, %v3041
      %3043 = vrot.lane.b32.xlu0 %v3030, 32
      %v3044 = vpop.permute.xlu0 %3043
      %3045 = vrot.lane.b32.xlu0 %v3032, 32
      %v3046 = vpop.permute.xlu0 %3045
      %3047 = vrot.lane.b32.xlu0 %v3034, 32
      %v3048 = vpop.permute.xlu0 %3047
      %3049 = vrot.lane.b32.xlu0 %v3036, 32
      %v3050 = vpop.permute.xlu0 %3049
      %3051 = vrot.lane.b32.xlu0 %v3038, 32
      %v3052 = vpop.permute.xlu0 %3051
      %3053 = vrot.lane.b32.xlu0 %v3040, 32
      %v3054 = vpop.permute.xlu0 %3053
      %3055 = vrot.lane.b32.xlu0 %v3042, 32
      %v3056 = vpop.permute.xlu0 %3055
      %3057 = vrot.lane.b32.xlu0 %v3041, 32
      %v3058 = vpop.permute.xlu0 %3057
      %v3067 = vrot.slane %v3024, 2
      %v3068 = vrot.slane %v3003, 2
      %v3069 = vsel %vm485, %v3067, %v3068
      %v3070 = vrot.slane %v3005, 2
      %v3071 = vsel %vm485, %v3068, %v3070
      %v3072 = vrot.slane %v3007, 2
      %v3073 = vsel %vm485, %v3070, %v3072
      %v3074 = vrot.slane %v3009, 2
      %v3075 = vsel %vm485, %v3072, %v3074
      %v3076 = vrot.slane %v3011, 2
      %v3077 = vsel %vm485, %v3074, %v3076
      %v3078 = vrot.slane %v3013, 2
      %v3079 = vsel %vm485, %v3076, %v3078
      %v3080 = vrot.slane %v3025, 2
      %v3081 = vsel %vm485, %v3078, %v3080
      %3082 = vrot.lane.b32.xlu0 %v3069, 64
      %v3083 = vpop.permute.xlu0 %3082
      %3084 = vrot.lane.b32.xlu0 %v3071, 64
      %v3085 = vpop.permute.xlu0 %3084
      %3086 = vrot.lane.b32.xlu0 %v3073, 64
      %v3087 = vpop.permute.xlu0 %3086
      %3088 = vrot.lane.b32.xlu0 %v3075, 64
      %v3089 = vpop.permute.xlu0 %3088
      %3090 = vrot.lane.b32.xlu0 %v3077, 64
      %v3091 = vpop.permute.xlu0 %3090
      %3092 = vrot.lane.b32.xlu0 %v3079, 64
      %v3093 = vpop.permute.xlu0 %3092
      %3094 = vrot.lane.b32.xlu0 %v3081, 64
      %v3095 = vpop.permute.xlu0 %3094
      %3096 = vrot.lane.b32.xlu0 %v3080, 64
      %v3097 = vpop.permute.xlu0 %3096
      %vm3106 = vcmask 261120
      %v3107 = vsel %vm3106, %v3024, %v3044
      %v3108 = vsel %vm3106, %v3003, %v3046
      %v3109 = vsel %vm3106, %v3005, %v3048
      %v3110 = vsel %vm3106, %v3007, %v3050
      %v3111 = vsel %vm3106, %v3009, %v3052
      %v3112 = vsel %vm3106, %v3011, %v3054
      %v3113 = vsel %vm3106, %v3013, %v3056
      %v3114 = vsel %vm3106, %v3025, %v3058
      %vm3115 = vcmask 523264
      %v3116 = vsel %vm3115, %v3107, %v3083
      %v3117 = vsel %vm3115, %v3108, %v3085
      %v3118 = vsel %vm3115, %v3109, %v3087
      %v3119 = vsel %vm3115, %v3110, %v3089
      %v3120 = vsel %vm3115, %v3111, %v3091
      %v3121 = vsel %vm3115, %v3112, %v3093
      %v3122 = vsel %vm3115, %v3113, %v3095
      %v3123 = vsel %vm3115, %v3114, %v3097
      %v3124 = vld [vmem:[%s3] sm:$0xff]
      %v3125 = vld [vmem:[%s3 + $0x8] sm:$0xff]
      %v3126 = vld [vmem:[%s3 + $0x10] sm:$0xff]
      %v3127 = vld [vmem:[%s3 + $0x18] sm:$0xff]
      %v3128 = vld [vmem:[%s3 + $0x20] sm:$0xff]
      %v3129 = vld [vmem:[%s3 + $0x28] sm:$0xff]
      %v3130 = vld [vmem:[%s3 + $0x30] sm:$0xff]
      %v3131 = vld [vmem:[%s3 + $0x38] sm:$0xff]
      %v3132 = vld [vmem:[%s3 + $0x40] sm:$0xff]
      %v3133 = vld [vmem:[%s3 + $0x48] sm:$0xff]
      %v3134 = vld [vmem:[%s3 + $0x50] sm:$0xff]
      %v3135 = vld [vmem:[%s3 + $0x58] sm:$0xff]
      %v3136 = vld [vmem:[%s4] sm:$0x1]
      %v3138 = vlaneseq
      %v3139 = vshrl.u32 %v3138, 7
      %v3140 = vsub.s32 0, %v3139
      %v3141 = vrot.slane %v3136, %v3140
      %vm3143 = vcmask 785408
      %v3145 = vsel %vm3143, %v3116, 0
      %v3148 = vsel %vm3143, %v3117, 0
      %v3151 = vsel %vm3143, %v3118, 0
      %v3154 = vsel %vm3143, %v3119, 0
      %v3157 = vsel %vm3143, %v3120, 0
      %v3160 = vsel %vm3143, %v3121, 0
      %v3163 = vsel %vm3143, %v3122, 0
      %v3166 = vsel %vm3143, %v3123, 0
      %3168 = vmatprep.subr.mxu0 0.0
      %v3169 = vand.u32 %v3124, 4294901760
      %3170 = vmatpush1.msra.mxu0 %v3169
      %3171 = vmatprep.subr.mxu0 0.0
      %v3172 = vand.u32 %v3125, 4294901760
      %3173 = vmatpush1.msra.mxu0 %v3172
      %3174 = vmatprep.subr.mxu0 0.0
      %v3175 = vand.u32 %v3126, 4294901760
      %3176 = vmatpush1.msra.mxu0 %v3175
      %3177 = vmatprep.subr.mxu0 0.0
      %v3178 = vand.u32 %v3127, 4294901760
      %3179 = vmatpush1.msra.mxu0 %v3178
      %3180 = vmatprep.subr.mxu0 0.0
      %v3181 = vand.u32 %v3128, 4294901760
      %3182 = vmatpush1.msra.mxu0 %v3181
      %3183 = vmatprep.subr.mxu0 0.0
      %v3184 = vand.u32 %v3129, 4294901760
      %3185 = vmatpush1.msra.mxu0 %v3184
      %3186 = vmatprep.subr.mxu0 0.0
      %v3187 = vand.u32 %v3130, 4294901760
      %3188 = vmatpush1.msra.mxu0 %v3187
      %3189 = vmatprep.subr.mxu0 0.0
      %v3190 = vand.u32 %v3131, 4294901760
      %3191 = vmatpush1.msra.mxu0 %v3190
      %3192 = vmatprep.subr.mxu0 0.0
      %v3193 = vand.u32 %v3132, 4294901760
      %3194 = vmatpush1.msra.mxu0 %v3193
      %3195 = vmatprep.subr.mxu0 0.0
      %v3196 = vand.u32 %v3133, 4294901760
      %3197 = vmatpush1.msra.mxu0 %v3196
      %3198 = vmatprep.subr.mxu0 0.0
      %v3199 = vand.u32 %v3134, 4294901760
      %3200 = vmatpush1.msra.mxu0 %v3199
      %3201 = vmatprep.subr.mxu0 0.0
      %v3202 = vand.u32 %v3135, 4294901760
      %3203 = vmatpush1.msra.mxu0 %v3202
      %3204 = vmatprep.subr.mxu0 0.0
      %3205 = vmatpush1.msra.mxu0 0.0
      %3206 = vmatprep.subr.mxu0 0.0
      %3207 = vmatpush1.msra.mxu0 0.0
      %3208 = vmatprep.subr.mxu0 0.0
      %3209 = vmatpush1.msra.mxu0 0.0
      %3210 = vmatprep.subr.mxu0 0.0
      %3211 = vmatpush1.msra.mxu0 0.0
      %3212 = vmatprep.subr.mxu0 0.0
      %3213 = vmatpush1.msra.mxu0 0.0
      %3214 = vmatprep.subr.mxu0 0.0
      %3215 = vmatpush1.msra.mxu0 0.0
      %3216 = vmatprep.subr.mxu0 0.0
      %3217 = vmatpush1.msra.mxu0 0.0
      %3218 = vmatprep.subr.mxu0 0.0
      %3219 = vmatpush1.msra.mxu0 0.0
      %3220 = vmatprep.subr.mxu0 0.0
      %3221 = vmatpush1.msra.mxu0 0.0
      %3222 = vmatprep.subr.mxu0 0.0
      %3223 = vmatpush1.msra.mxu0 0.0
      %3224 = vmatprep.subr.mxu0 0.0
      %3225 = vmatpush1.msra.mxu0 0.0
      %3226 = vmatprep.subr.mxu0 0.0
      %3227 = vmatpush1.msra.mxu0 0.0
      %3228 = vmatprep.subr.mxu0 0.0
      %3229 = vmatpush1.msra.mxu0 0.0
      %3230 = vmatprep.subr.mxu0 0.0
      %3231 = vmatpush1.msra.mxu0 0.0
      %3232 = vmatprep.subr.mxu0 0.0
      %3233 = vmatpush1.msra.mxu0 0.0
      %3234 = vmatprep.subr.mxu0 0.0
      %3235 = vmatpush1.msra.mxu0 0.0
      %3236 = vmatprep.subr.mxu0 0.0
      %3237 = vmatpush1.msra.mxu0 0.0
      %3238 = vmatprep.subr.mxu0 0.0
      %3239 = vmatpush1.msra.mxu0 0.0
      %3240 = vmatprep.subr.mxu0 0.0
      %3241 = vmatpush1.msra.mxu0 0.0
      %3242 = vmatprep.subr.mxu0 0.0
      %3243 = vmatpush1.msra.mxu0 0.0
      %3244 = vmatprep.mubr.f32.mxu0 0.0
      %v3245 = vand.u32 %v3145, 4294901760
      %v3246 = vsub.f32 %v3145, %v3245
      %v3247 = vand.u32 %v3246, 4294901760
      %v3248 = vsub.f32 %v3246, %v3247
      %v3249 = vand.u32 %v3248, 4294901760
      %3250 = vmatmul.mubr.f32.gmra.mrb[0].mxu0 %v3249
      %v3251 = vpop.f32.mrb[0].mxu0
      %v3252 = vadd.f32 %v3141, %v3251
      %v3253 = vpop.f32.mrb[0].mxu0
      %3254 = vmatprep.mubr.f32.mxu0 0.0
      %v3255 = vand.u32 %v3148, 4294901760
      %v3256 = vsub.f32 %v3148, %v3255
      %v3257 = vand.u32 %v3256, 4294901760
      %v3258 = vsub.f32 %v3256, %v3257
      %v3259 = vand.u32 %v3258, 4294901760
      %3260 = vmatmul.mubr.f32.gmra.mrb[0].mxu0 %v3259
      %v3261 = vpop.f32.mrb[0].mxu0
      %v3262 = vadd.f32 %v3141, %v3261
      %v3263 = vpop.f32.mrb[0].mxu0
      %3264 = vmatprep.mubr.f32.mxu0 0.0
      %v3265 = vand.u32 %v3151, 4294901760
      %v3266 = vsub.f32 %v3151, %v3265
      %v3267 = vand.u32 %v3266, 4294901760
      %v3268 = vsub.f32 %v3266, %v3267
      %v3269 = vand.u32 %v3268, 4294901760
      %3270 = vmatmul.mubr.f32.gmra.mrb[0].mxu0 %v3269
      %v3271 = vpop.f32.mrb[0].mxu0
      %v3272 = vadd.f32 %v3141, %v3271
      %v3273 = vpop.f32.mrb[0].mxu0
      %3274 = vmatprep.mubr.f32.mxu0 0.0
      %v3275 = vand.u32 %v3154, 4294901760
      %v3276 = vsub.f32 %v3154, %v3275
      %v3277 = vand.u32 %v3276, 4294901760
      %v3278 = vsub.f32 %v3276, %v3277
      %v3279 = vand.u32 %v3278, 4294901760
      %3280 = vmatmul.mubr.f32.gmra.mrb[0].mxu0 %v3279
      %v3281 = vpop.f32.mrb[0].mxu0
      %v3282 = vadd.f32 %v3141, %v3281
      %v3283 = vpop.f32.mrb[0].mxu0
      %3284 = vmatprep.mubr.f32.mxu0 0.0
      %v3285 = vand.u32 %v3157, 4294901760
      %v3286 = vsub.f32 %v3157, %v3285
      %v3287 = vand.u32 %v3286, 4294901760
      %v3288 = vsub.f32 %v3286, %v3287
      %v3289 = vand.u32 %v3288, 4294901760
      %3290 = vmatmul.mubr.f32.gmra.mrb[0].mxu0 %v3289
      %v3291 = vpop.f32.mrb[0].mxu0
      %v3292 = vadd.f32 %v3141, %v3291
      %v3293 = vpop.f32.mrb[0].mxu0
      %3294 = vmatprep.mubr.f32.mxu0 0.0
      %v3295 = vand.u32 %v3160, 4294901760
      %v3296 = vsub.f32 %v3160, %v3295
      %v3297 = vand.u32 %v3296, 4294901760
      %v3298 = vsub.f32 %v3296, %v3297
      %v3299 = vand.u32 %v3298, 4294901760
      %3300 = vmatmul.mubr.f32.gmra.mrb[0].mxu0 %v3299
      %v3301 = vpop.f32.mrb[0].mxu0
      %v3302 = vadd.f32 %v3141, %v3301
      %v3303 = vpop.f32.mrb[0].mxu0
      %3304 = vmatprep.mubr.f32.mxu0 0.0
      %v3305 = vand.u32 %v3163, 4294901760
      %v3306 = vsub.f32 %v3163, %v3305
      %v3307 = vand.u32 %v3306, 4294901760
      %v3308 = vsub.f32 %v3306, %v3307
      %v3309 = vand.u32 %v3308, 4294901760
      %3310 = vmatmul.mubr.f32.gmra.mrb[0].mxu0 %v3309
      %v3311 = vpop.f32.mrb[0].mxu0
      %v3312 = vadd.f32 %v3141, %v3311
      %v3313 = vpop.f32.mrb[0].mxu0
      %3314 = vmatprep.mubr.f32.mxu0 0.0
      %v3315 = vand.u32 %v3166, 4294901760
      %v3316 = vsub.f32 %v3166, %v3315
      %v3317 = vand.u32 %v3316, 4294901760
      %v3318 = vsub.f32 %v3316, %v3317
      %v3319 = vand.u32 %v3318, 4294901760
      %3320 = vmatmul.mubr.f32.gmra.mrb[0].mxu0 %v3319
      %v3321 = vpop.f32.mrb[0].mxu0
      %v3322 = vadd.f32 %v3141, %v3321
      %v3323 = vpop.f32.mrb[0].mxu0
      %3324 = vdwg.mxu0
      %3325 = vmatprep.subr.mxu0 0.0
      %v3326 = vand.u32 %v3124, 4294901760
      %v3327 = vsub.f32 %v3124, %v3326
      %v3328 = vand.u32 %v3327, 4294901760
      %v3329 = vsub.f32 %v3327, %v3328
      %v3330 = vand.u32 %v3329, 4294901760
      %3331 = vmatpush1.msra.mxu0 %v3330
      %3332 = vmatprep.subr.mxu0 0.0
      %v3333 = vand.u32 %v3125, 4294901760
      %v3334 = vsub.f32 %v3125, %v3333
      %v3335 = vand.u32 %v3334, 4294901760
      %v3336 = vsub.f32 %v3334, %v3335
      %v3337 = vand.u32 %v3336, 4294901760
      %3338 = vmatpush1.msra.mxu0 %v3337
      %3339 = vmatprep.subr.mxu0 0.0
      %v3340 = vand.u32 %v3126, 4294901760
      %v3341 = vsub.f32 %v3126, %v3340
      %v3342 = vand.u32 %v3341, 4294901760
      %v3343 = vsub.f32 %v3341, %v3342
      %v3344 = vand.u32 %v3343, 4294901760
      %3345 = vmatpush1.msra.mxu0 %v3344
      %3346 = vmatprep.subr.mxu0 0.0
      %v3347 = vand.u32 %v3127, 4294901760
      %v3348 = vsub.f32 %v3127, %v3347
      %v3349 = vand.u32 %v3348, 4294901760
      %v3350 = vsub.f32 %v3348, %v3349
      %v3351 = vand.u32 %v3350, 4294901760
      %3352 = vmatpush1.msra.mxu0 %v3351
      %3353 = vmatprep.subr.mxu0 0.0
      %v3354 = vand.u32 %v3128, 4294901760
      %v3355 = vsub.f32 %v3128, %v3354
      %v3356 = vand.u32 %v3355, 4294901760
      %v3357 = vsub.f32 %v3355, %v3356
      %v3358 = vand.u32 %v3357, 4294901760
      %3359 = vmatpush1.msra.mxu0 %v3358
      %3360 = vmatprep.subr.mxu0 0.0
      %v3361 = vand.u32 %v3129, 4294901760
      %v3362 = vsub.f32 %v3129, %v3361
      %v3363 = vand.u32 %v3362, 4294901760
      %v3364 = vsub.f32 %v3362, %v3363
      %v3365 = vand.u32 %v3364, 4294901760
      %3366 = vmatpush1.msra.mxu0 %v3365
      %3367 = vmatprep.subr.mxu0 0.0
      %v3368 = vand.u32 %v3130, 4294901760
      %v3369 = vsub.f32 %v3130, %v3368
      %v3370 = vand.u32 %v3369, 4294901760
      %v3371 = vsub.f32 %v3369, %v3370
      %v3372 = vand.u32 %v3371, 4294901760
      %3373 = vmatpush1.msra.mxu0 %v3372
      %3374 = vmatprep.subr.mxu0 0.0
      %v3375 = vand.u32 %v3131, 4294901760
      %v3376 = vsub.f32 %v3131, %v3375
      %v3377 = vand.u32 %v3376, 4294901760
      %v3378 = vsub.f32 %v3376, %v3377
      %v3379 = vand.u32 %v3378, 4294901760
      %3380 = vmatpush1.msra.mxu0 %v3379
      %3381 = vmatprep.subr.mxu0 0.0
      %v3382 = vand.u32 %v3132, 4294901760
      %v3383 = vsub.f32 %v3132, %v3382
      %v3384 = vand.u32 %v3383, 4294901760
      %v3385 = vsub.f32 %v3383, %v3384
      %v3386 = vand.u32 %v3385, 4294901760
      %3387 = vmatpush1.msra.mxu0 %v3386
      %3388 = vmatprep.subr.mxu0 0.0
      %v3389 = vand.u32 %v3133, 4294901760
      %v3390 = vsub.f32 %v3133, %v3389
      %v3391 = vand.u32 %v3390, 4294901760
      %v3392 = vsub.f32 %v3390, %v3391
      %v3393 = vand.u32 %v3392, 4294901760
      %3394 = vmatpush1.msra.mxu0 %v3393
      %3395 = vmatprep.subr.mxu0 0.0
      %v3396 = vand.u32 %v3134, 4294901760
      %v3397 = vsub.f32 %v3134, %v3396
      %v3398 = vand.u32 %v3397, 4294901760
      %v3399 = vsub.f32 %v3397, %v3398
      %v3400 = vand.u32 %v3399, 4294901760
      %3401 = vmatpush1.msra.mxu0 %v3400
      %3402 = vmatprep.subr.mxu0 0.0
      %v3403 = vand.u32 %v3135, 4294901760
      %v3404 = vsub.f32 %v3135, %v3403
      %v3405 = vand.u32 %v3404, 4294901760
      %v3406 = vsub.f32 %v3404, %v3405
      %v3407 = vand.u32 %v3406, 4294901760
      %3408 = vmatpush1.msra.mxu0 %v3407
      %3409 = vmatprep.subr.mxu0 0.0
      %3410 = vmatpush1.msra.mxu0 0.0
      %3411 = vmatprep.subr.mxu0 0.0
      %3412 = vmatpush1.msra.mxu0 0.0
      %3413 = vmatprep.subr.mxu0 0.0
      %3414 = vmatpush1.msra.mxu0 0.0
      %3415 = vmatprep.subr.mxu0 0.0
      %3416 = vmatpush1.msra.mxu0 0.0
      %3417 = vmatprep.subr.mxu0 0.0
      %3418 = vmatpush1.msra.mxu0 0.0
      %3419 = vmatprep.subr.mxu0 0.0
      %3420 = vmatpush1.msra.mxu0 0.0
      %3421 = vmatprep.subr.mxu0 0.0
      %3422 = vmatpush1.msra.mxu0 0.0
      %3423 = vmatprep.subr.mxu0 0.0
      %3424 = vmatpush1.msra.mxu0 0.0
      %3425 = vmatprep.subr.mxu0 0.0
      %3426 = vmatpush1.msra.mxu0 0.0
      %3427 = vmatprep.subr.mxu0 0.0
      %3428 = vmatpush1.msra.mxu0 0.0
      %3429 = vmatprep.subr.mxu0 0.0
      %3430 = vmatpush1.msra.mxu0 0.0
      %3431 = vmatprep.subr.mxu0 0.0
      %3432 = vmatpush1.msra.mxu0 0.0
      %3433 = vmatprep.subr.mxu0 0.0
      %3434 = vmatpush1.msra.mxu0 0.0
      %3435 = vmatprep.subr.mxu0 0.0
      %3436 = vmatpush1.msra.mxu0 0.0
      %3437 = vmatprep.subr.mxu0 0.0
      %3438 = vmatpush1.msra.mxu0 0.0
      %3439 = vmatprep.subr.mxu0 0.0
      %3440 = vmatpush1.msra.mxu0 0.0
      %3441 = vmatprep.subr.mxu0 0.0
      %3442 = vmatpush1.msra.mxu0 0.0
      %3443 = vmatprep.subr.mxu0 0.0
      %3444 = vmatpush1.msra.mxu0 0.0
      %3445 = vmatprep.subr.mxu0 0.0
      %3446 = vmatpush1.msra.mxu0 0.0
      %3447 = vmatprep.subr.mxu0 0.0
      %3448 = vmatpush1.msra.mxu0 0.0
      %3449 = vmatprep.mubr.f32.mxu0 0.0
      %v3450 = vand.u32 %v3145, 4294901760
      %3451 = vmatmul.mubr.f32.gmra.mrb[0].mxu0 %v3450
      %v3452 = vpop.f32.mrb[0].mxu0
      %v3453 = vadd.f32 %v3252, %v3452
      %v3454 = vpop.f32.mrb[0].mxu0
      %3455 = vmatprep.mubr.f32.mxu0 0.0
      %v3456 = vand.u32 %v3148, 4294901760
      %3457 = vmatmul.mubr.f32.gmra.mrb[0].mxu0 %v3456
      %v3458 = vpop.f32.mrb[0].mxu0
      %v3459 = vadd.f32 %v3262, %v3458
      %v3460 = vpop.f32.mrb[0].mxu0
      %3461 = vmatprep.mubr.f32.mxu0 0.0
      %v3462 = vand.u32 %v3151, 4294901760
      %3463 = vmatmul.mubr.f32.gmra.mrb[0].mxu0 %v3462
      %v3464 = vpop.f32.mrb[0].mxu0
      %v3465 = vadd.f32 %v3272, %v3464
      %v3466 = vpop.f32.mrb[0].mxu0
      %3467 = vmatprep.mubr.f32.mxu0 0.0
      %v3468 = vand.u32 %v3154, 4294901760
      %3469 = vmatmul.mubr.f32.gmra.mrb[0].mxu0 %v3468
      %v3470 = vpop.f32.mrb[0].mxu0
      %v3471 = vadd.f32 %v3282, %v3470
      %v3472 = vpop.f32.mrb[0].mxu0
      %3473 = vmatprep.mubr.f32.mxu0 0.0
      %v3474 = vand.u32 %v3157, 4294901760
      %3475 = vmatmul.mubr.f32.gmra.mrb[0].mxu0 %v3474
      %v3476 = vpop.f32.mrb[0].mxu0
      %v3477 = vadd.f32 %v3292, %v3476
      %v3478 = vpop.f32.mrb[0].mxu0
      %3479 = vmatprep.mubr.f32.mxu0 0.0
      %v3480 = vand.u32 %v3160, 4294901760
      %3481 = vmatmul.mubr.f32.gmra.mrb[0].mxu0 %v3480
      %v3482 = vpop.f32.mrb[0].mxu0
      %v3483 = vadd.f32 %v3302, %v3482
      %v3484 = vpop.f32.mrb[0].mxu0
      %3485 = vmatprep.mubr.f32.mxu0 0.0
      %v3486 = vand.u32 %v3163, 4294901760
      %3487 = vmatmul.mubr.f32.gmra.mrb[0].mxu0 %v3486
      %v3488 = vpop.f32.mrb[0].mxu0
      %v3489 = vadd.f32 %v3312, %v3488
      %v3490 = vpop.f32.mrb[0].mxu0
      %3491 = vmatprep.mubr.f32.mxu0 0.0
      %v3492 = vand.u32 %v3166, 4294901760
      %3493 = vmatmul.mubr.f32.gmra.mrb[0].mxu0 %v3492
      %v3494 = vpop.f32.mrb[0].mxu0
      %v3495 = vadd.f32 %v3322, %v3494
      %v3496 = vpop.f32.mrb[0].mxu0
      %3497 = vdwg.mxu0
      %3498 = vmatprep.subr.mxu0 0.0
      %v3499 = vand.u32 %v3124, 4294901760
      %v3500 = vsub.f32 %v3124, %v3499
      %3501 = vmatpush1.msra.mxu0 %v3500
      %3502 = vmatprep.subr.mxu0 0.0
      %v3503 = vand.u32 %v3125, 4294901760
      %v3504 = vsub.f32 %v3125, %v3503
      %3505 = vmatpush1.msra.mxu0 %v3504
      %3506 = vmatprep.subr.mxu0 0.0
      %v3507 = vand.u32 %v3126, 4294901760
      %v3508 = vsub.f32 %v3126, %v3507
      %3509 = vmatpush1.msra.mxu0 %v3508
      %3510 = vmatprep.subr.mxu0 0.0
      %v3511 = vand.u32 %v3127, 4294901760
      %v3512 = vsub.f32 %v3127, %v3511
      %3513 = vmatpush1.msra.mxu0 %v3512
      %3514 = vmatprep.subr.mxu0 0.0
      %v3515 = vand.u32 %v3128, 4294901760
      %v3516 = vsub.f32 %v3128, %v3515
      %3517 = vmatpush1.msra.mxu0 %v3516
      %3518 = vmatprep.subr.mxu0 0.0
      %v3519 = vand.u32 %v3129, 4294901760
      %v3520 = vsub.f32 %v3129, %v3519
      %3521 = vmatpush1.msra.mxu0 %v3520
      %3522 = vmatprep.subr.mxu0 0.0
      %v3523 = vand.u32 %v3130, 4294901760
      %v3524 = vsub.f32 %v3130, %v3523
      %3525 = vmatpush1.msra.mxu0 %v3524
      %3526 = vmatprep.subr.mxu0 0.0
      %v3527 = vand.u32 %v3131, 4294901760
      %v3528 = vsub.f32 %v3131, %v3527
      %3529 = vmatpush1.msra.mxu0 %v3528
      %3530 = vmatprep.subr.mxu0 0.0
      %v3531 = vand.u32 %v3132, 4294901760
      %v3532 = vsub.f32 %v3132, %v3531
      %3533 = vmatpush1.msra.mxu0 %v3532
      %3534 = vmatprep.subr.mxu0 0.0
      %v3535 = vand.u32 %v3133, 4294901760
      %v3536 = vsub.f32 %v3133, %v3535
      %3537 = vmatpush1.msra.mxu0 %v3536
      %3538 = vmatprep.subr.mxu0 0.0
      %v3539 = vand.u32 %v3134, 4294901760
      %v3540 = vsub.f32 %v3134, %v3539
      %3541 = vmatpush1.msra.mxu0 %v3540
      %3542 = vmatprep.subr.mxu0 0.0
      %v3543 = vand.u32 %v3135, 4294901760
      %v3544 = vsub.f32 %v3135, %v3543
      %3545 = vmatpush1.msra.mxu0 %v3544
      %3546 = vmatprep.subr.mxu0 0.0
      %3547 = vmatpush1.msra.mxu0 0.0
      %3548 = vmatprep.subr.mxu0 0.0
      %3549 = vmatpush1.msra.mxu0 0.0
      %3550 = vmatprep.subr.mxu0 0.0
      %3551 = vmatpush1.msra.mxu0 0.0
      %3552 = vmatprep.subr.mxu0 0.0
      %3553 = vmatpush1.msra.mxu0 0.0
      %3554 = vmatprep.subr.mxu0 0.0
      %3555 = vmatpush1.msra.mxu0 0.0
      %3556 = vmatprep.subr.mxu0 0.0
      %3557 = vmatpush1.msra.mxu0 0.0
      %3558 = vmatprep.subr.mxu0 0.0
      %3559 = vmatpush1.msra.mxu0 0.0
      %3560 = vmatprep.subr.mxu0 0.0
      %3561 = vmatpush1.msra.mxu0 0.0
      %3562 = vmatprep.subr.mxu0 0.0
      %3563 = vmatpush1.msra.mxu0 0.0
      %3564 = vmatprep.subr.mxu0 0.0
      %3565 = vmatpush1.msra.mxu0 0.0
      %3566 = vmatprep.subr.mxu0 0.0
      %3567 = vmatpush1.msra.mxu0 0.0
      %3568 = vmatprep.subr.mxu0 0.0
      %3569 = vmatpush1.msra.mxu0 0.0
      %3570 = vmatprep.subr.mxu0 0.0
      %3571 = vmatpush1.msra.mxu0 0.0
      %3572 = vmatprep.subr.mxu0 0.0
      %3573 = vmatpush1.msra.mxu0 0.0
      %3574 = vmatprep.subr.mxu0 0.0
      %3575 = vmatpush1.msra.mxu0 0.0
      %3576 = vmatprep.subr.mxu0 0.0
      %3577 = vmatpush1.msra.mxu0 0.0
      %3578 = vmatprep.subr.mxu0 0.0
      %3579 = vmatpush1.msra.mxu0 0.0
      %3580 = vmatprep.subr.mxu0 0.0
      %3581 = vmatpush1.msra.mxu0 0.0
      %3582 = vmatprep.subr.mxu0 0.0
      %3583 = vmatpush1.msra.mxu0 0.0
      %3584 = vmatprep.subr.mxu0 0.0
      %3585 = vmatpush1.msra.mxu0 0.0
      %3586 = vmatprep.mubr.f32.mxu0 0.0
      %v3587 = vand.u32 %v3145, 4294901760
      %v3588 = vsub.f32 %v3145, %v3587
      %3589 = vmatmul.mubr.f32.gmra.mrb[0].mxu0 %v3588
      %v3590 = vpop.f32.mrb[0].mxu0
      %v3591 = vadd.f32 %v3453, %v3590
      %v3592 = vpop.f32.mrb[0].mxu0
      %3593 = vmatprep.mubr.f32.mxu0 0.0
      %v3594 = vand.u32 %v3148, 4294901760
      %v3595 = vsub.f32 %v3148, %v3594
      %3596 = vmatmul.mubr.f32.gmra.mrb[0].mxu0 %v3595
      %v3597 = vpop.f32.mrb[0].mxu0
      %v3598 = vadd.f32 %v3459, %v3597
      %v3599 = vpop.f32.mrb[0].mxu0
      %3600 = vmatprep.mubr.f32.mxu0 0.0
      %v3601 = vand.u32 %v3151, 4294901760
      %v3602 = vsub.f32 %v3151, %v3601
      %3603 = vmatmul.mubr.f32.gmra.mrb[0].mxu0 %v3602
      %v3604 = vpop.f32.mrb[0].mxu0
      %v3605 = vadd.f32 %v3465, %v3604
      %v3606 = vpop.f32.mrb[0].mxu0
      %3607 = vmatprep.mubr.f32.mxu0 0.0
      %v3608 = vand.u32 %v3154, 4294901760
      %v3609 = vsub.f32 %v3154, %v3608
      %3610 = vmatmul.mubr.f32.gmra.mrb[0].mxu0 %v3609
      %v3611 = vpop.f32.mrb[0].mxu0
      %v3612 = vadd.f32 %v3471, %v3611
      %v3613 = vpop.f32.mrb[0].mxu0
      %3614 = vmatprep.mubr.f32.mxu0 0.0
      %v3615 = vand.u32 %v3157, 4294901760
      %v3616 = vsub.f32 %v3157, %v3615
      %3617 = vmatmul.mubr.f32.gmra.mrb[0].mxu0 %v3616
      %v3618 = vpop.f32.mrb[0].mxu0
      %v3619 = vadd.f32 %v3477, %v3618
      %v3620 = vpop.f32.mrb[0].mxu0
      %3621 = vmatprep.mubr.f32.mxu0 0.0
      %v3622 = vand.u32 %v3160, 4294901760
      %v3623 = vsub.f32 %v3160, %v3622
      %3624 = vmatmul.mubr.f32.gmra.mrb[0].mxu0 %v3623
      %v3625 = vpop.f32.mrb[0].mxu0
      %v3626 = vadd.f32 %v3483, %v3625
      %v3627 = vpop.f32.mrb[0].mxu0
      %3628 = vmatprep.mubr.f32.mxu0 0.0
      %v3629 = vand.u32 %v3163, 4294901760
      %v3630 = vsub.f32 %v3163, %v3629
      %3631 = vmatmul.mubr.f32.gmra.mrb[0].mxu0 %v3630
      %v3632 = vpop.f32.mrb[0].mxu0
      %v3633 = vadd.f32 %v3489, %v3632
      %v3634 = vpop.f32.mrb[0].mxu0
      %3635 = vmatprep.mubr.f32.mxu0 0.0
      %v3636 = vand.u32 %v3166, 4294901760
      %v3637 = vsub.f32 %v3166, %v3636
      %3638 = vmatmul.mubr.f32.gmra.mrb[0].mxu0 %v3637
      %v3639 = vpop.f32.mrb[0].mxu0
      %v3640 = vadd.f32 %v3495, %v3639
      %v3641 = vpop.f32.mrb[0].mxu0
      %3642 = vdwg.mxu0
      %3643 = vmatprep.subr.mxu0 0.0
      %v3644 = vand.u32 %v3124, 4294901760
      %3645 = vmatpush1.msra.mxu0 %v3644
      %3646 = vmatprep.subr.mxu0 0.0
      %v3647 = vand.u32 %v3125, 4294901760
      %3648 = vmatpush1.msra.mxu0 %v3647
      %3649 = vmatprep.subr.mxu0 0.0
      %v3650 = vand.u32 %v3126, 4294901760
      %3651 = vmatpush1.msra.mxu0 %v3650
      %3652 = vmatprep.subr.mxu0 0.0
      %v3653 = vand.u32 %v3127, 4294901760
      %3654 = vmatpush1.msra.mxu0 %v3653
      %3655 = vmatprep.subr.mxu0 0.0
      %v3656 = vand.u32 %v3128, 4294901760
      %3657 = vmatpush1.msra.mxu0 %v3656
      %3658 = vmatprep.subr.mxu0 0.0
      %v3659 = vand.u32 %v3129, 4294901760
      %3660 = vmatpush1.msra.mxu0 %v3659
      %3661 = vmatprep.subr.mxu0 0.0
      %v3662 = vand.u32 %v3130, 4294901760
      %3663 = vmatpush1.msra.mxu0 %v3662
      %3664 = vmatprep.subr.mxu0 0.0
      %v3665 = vand.u32 %v3131, 4294901760
      %3666 = vmatpush1.msra.mxu0 %v3665
      %3667 = vmatprep.subr.mxu0 0.0
      %v3668 = vand.u32 %v3132, 4294901760
      %3669 = vmatpush1.msra.mxu0 %v3668
      %3670 = vmatprep.subr.mxu0 0.0
      %v3671 = vand.u32 %v3133, 4294901760
      %3672 = vmatpush1.msra.mxu0 %v3671
      %3673 = vmatprep.subr.mxu0 0.0
      %v3674 = vand.u32 %v3134, 4294901760
      %3675 = vmatpush1.msra.mxu0 %v3674
      %3676 = vmatprep.subr.mxu0 0.0
      %v3677 = vand.u32 %v3135, 4294901760
      %3678 = vmatpush1.msra.mxu0 %v3677
      %3679 = vmatprep.subr.mxu0 0.0
      %3680 = vmatpush1.msra.mxu0 0.0
      %3681 = vmatprep.subr.mxu0 0.0
      %3682 = vmatpush1.msra.mxu0 0.0
      %3683 = vmatprep.subr.mxu0 0.0
      %3684 = vmatpush1.msra.mxu0 0.0
      %3685 = vmatprep.subr.mxu0 0.0
      %3686 = vmatpush1.msra.mxu0 0.0
      %3687 = vmatprep.subr.mxu0 0.0
      %3688 = vmatpush1.msra.mxu0 0.0
      %3689 = vmatprep.subr.mxu0 0.0
      %3690 = vmatpush1.msra.mxu0 0.0
      %3691 = vmatprep.subr.mxu0 0.0
      %3692 = vmatpush1.msra.mxu0 0.0
      %3693 = vmatprep.subr.mxu0 0.0
      %3694 = vmatpush1.msra.mxu0 0.0
      %3695 = vmatprep.subr.mxu0 0.0
      %3696 = vmatpush1.msra.mxu0 0.0
      %3697 = vmatprep.subr.mxu0 0.0
      %3698 = vmatpush1.msra.mxu0 0.0
      %3699 = vmatprep.subr.mxu0 0.0
      %3700 = vmatpush1.msra.mxu0 0.0
      %3701 = vmatprep.subr.mxu0 0.0
      %3702 = vmatpush1.msra.mxu0 0.0
      %3703 = vmatprep.subr.mxu0 0.0
      %3704 = vmatpush1.msra.mxu0 0.0
      %3705 = vmatprep.subr.mxu0 0.0
      %3706 = vmatpush1.msra.mxu0 0.0
      %3707 = vmatprep.subr.mxu0 0.0
      %3708 = vmatpush1.msra.mxu0 0.0
      %3709 = vmatprep.subr.mxu0 0.0
      %3710 = vmatpush1.msra.mxu0 0.0
      %3711 = vmatprep.subr.mxu0 0.0
      %3712 = vmatpush1.msra.mxu0 0.0
      %3713 = vmatprep.subr.mxu0 0.0
      %3714 = vmatpush1.msra.mxu0 0.0
      %3715 = vmatprep.subr.mxu0 0.0
      %3716 = vmatpush1.msra.mxu0 0.0
      %3717 = vmatprep.subr.mxu0 0.0
      %3718 = vmatpush1.msra.mxu0 0.0
      %3719 = vmatprep.mubr.f32.mxu0 0.0
      %v3720 = vand.u32 %v3145, 4294901760
      %v3721 = vsub.f32 %v3145, %v3720
      %v3722 = vand.u32 %v3721, 4294901760
      %3723 = vmatmul.mubr.f32.gmra.mrb[0].mxu0 %v3722
      %v3724 = vpop.f32.mrb[0].mxu0
      %v3725 = vadd.f32 %v3591, %v3724
      %v3726 = vpop.f32.mrb[0].mxu0
      %3727 = vmatprep.mubr.f32.mxu0 0.0
      %v3728 = vand.u32 %v3148, 4294901760
      %v3729 = vsub.f32 %v3148, %v3728
      %v3730 = vand.u32 %v3729, 4294901760
      %3731 = vmatmul.mubr.f32.gmra.mrb[0].mxu0 %v3730
      %v3732 = vpop.f32.mrb[0].mxu0
      %v3733 = vadd.f32 %v3598, %v3732
      %v3734 = vpop.f32.mrb[0].mxu0
      %3735 = vmatprep.mubr.f32.mxu0 0.0
      %v3736 = vand.u32 %v3151, 4294901760
      %v3737 = vsub.f32 %v3151, %v3736
      %v3738 = vand.u32 %v3737, 4294901760
      %3739 = vmatmul.mubr.f32.gmra.mrb[0].mxu0 %v3738
      %v3740 = vpop.f32.mrb[0].mxu0
      %v3741 = vadd.f32 %v3605, %v3740
      %v3742 = vpop.f32.mrb[0].mxu0
      %3743 = vmatprep.mubr.f32.mxu0 0.0
      %v3744 = vand.u32 %v3154, 4294901760
      %v3745 = vsub.f32 %v3154, %v3744
      %v3746 = vand.u32 %v3745, 4294901760
      %3747 = vmatmul.mubr.f32.gmra.mrb[0].mxu0 %v3746
      %v3748 = vpop.f32.mrb[0].mxu0
      %v3749 = vadd.f32 %v3612, %v3748
      %v3750 = vpop.f32.mrb[0].mxu0
      %3751 = vmatprep.mubr.f32.mxu0 0.0
      %v3752 = vand.u32 %v3157, 4294901760
      %v3753 = vsub.f32 %v3157, %v3752
      %v3754 = vand.u32 %v3753, 4294901760
      %3755 = vmatmul.mubr.f32.gmra.mrb[0].mxu0 %v3754
      %v3756 = vpop.f32.mrb[0].mxu0
      %v3757 = vadd.f32 %v3619, %v3756
      %v3758 = vpop.f32.mrb[0].mxu0
      %3759 = vmatprep.mubr.f32.mxu0 0.0
      %v3760 = vand.u32 %v3160, 4294901760
      %v3761 = vsub.f32 %v3160, %v3760
      %v3762 = vand.u32 %v3761, 4294901760
      %3763 = vmatmul.mubr.f32.gmra.mrb[0].mxu0 %v3762
      %v3764 = vpop.f32.mrb[0].mxu0
      %v3765 = vadd.f32 %v3626, %v3764
      %v3766 = vpop.f32.mrb[0].mxu0
      %3767 = vmatprep.mubr.f32.mxu0 0.0
      %v3768 = vand.u32 %v3163, 4294901760
      %v3769 = vsub.f32 %v3163, %v3768
      %v3770 = vand.u32 %v3769, 4294901760
      %3771 = vmatmul.mubr.f32.gmra.mrb[0].mxu0 %v3770
      %v3772 = vpop.f32.mrb[0].mxu0
      %v3773 = vadd.f32 %v3633, %v3772
      %v3774 = vpop.f32.mrb[0].mxu0
      %3775 = vmatprep.mubr.f32.mxu0 0.0
      %v3776 = vand.u32 %v3166, 4294901760
      %v3777 = vsub.f32 %v3166, %v3776
      %v3778 = vand.u32 %v3777, 4294901760
      %3779 = vmatmul.mubr.f32.gmra.mrb[0].mxu0 %v3778
      %v3780 = vpop.f32.mrb[0].mxu0
      %v3781 = vadd.f32 %v3640, %v3780
      %v3782 = vpop.f32.mrb[0].mxu0
      %3783 = vdwg.mxu0
      %3784 = vmatprep.subr.mxu0 0.0
      %v3785 = vand.u32 %v3124, 4294901760
      %v3786 = vsub.f32 %v3124, %v3785
      %v3787 = vand.u32 %v3786, 4294901760
      %3788 = vmatpush1.msra.mxu0 %v3787
      %3789 = vmatprep.subr.mxu0 0.0
      %v3790 = vand.u32 %v3125, 4294901760
      %v3791 = vsub.f32 %v3125, %v3790
      %v3792 = vand.u32 %v3791, 4294901760
      %3793 = vmatpush1.msra.mxu0 %v3792
      %3794 = vmatprep.subr.mxu0 0.0
      %v3795 = vand.u32 %v3126, 4294901760
      %v3796 = vsub.f32 %v3126, %v3795
      %v3797 = vand.u32 %v3796, 4294901760
      %3798 = vmatpush1.msra.mxu0 %v3797
      %3799 = vmatprep.subr.mxu0 0.0
      %v3800 = vand.u32 %v3127, 4294901760
      %v3801 = vsub.f32 %v3127, %v3800
      %v3802 = vand.u32 %v3801, 4294901760
      %3803 = vmatpush1.msra.mxu0 %v3802
      %3804 = vmatprep.subr.mxu0 0.0
      %v3805 = vand.u32 %v3128, 4294901760
      %v3806 = vsub.f32 %v3128, %v3805
      %v3807 = vand.u32 %v3806, 4294901760
      %3808 = vmatpush1.msra.mxu0 %v3807
      %3809 = vmatprep.subr.mxu0 0.0
      %v3810 = vand.u32 %v3129, 4294901760
      %v3811 = vsub.f32 %v3129, %v3810
      %v3812 = vand.u32 %v3811, 4294901760
      %3813 = vmatpush1.msra.mxu0 %v3812
      %3814 = vmatprep.subr.mxu0 0.0
      %v3815 = vand.u32 %v3130, 4294901760
      %v3816 = vsub.f32 %v3130, %v3815
      %v3817 = vand.u32 %v3816, 4294901760
      %3818 = vmatpush1.msra.mxu0 %v3817
      %3819 = vmatprep.subr.mxu0 0.0
      %v3820 = vand.u32 %v3131, 4294901760
      %v3821 = vsub.f32 %v3131, %v3820
      %v3822 = vand.u32 %v3821, 4294901760
      %3823 = vmatpush1.msra.mxu0 %v3822
      %3824 = vmatprep.subr.mxu0 0.0
      %v3825 = vand.u32 %v3132, 4294901760
      %v3826 = vsub.f32 %v3132, %v3825
      %v3827 = vand.u32 %v3826, 4294901760
      %3828 = vmatpush1.msra.mxu0 %v3827
      %3829 = vmatprep.subr.mxu0 0.0
      %v3830 = vand.u32 %v3133, 4294901760
      %v3831 = vsub.f32 %v3133, %v3830
      %v3832 = vand.u32 %v3831, 4294901760
      %3833 = vmatpush1.msra.mxu0 %v3832
      %3834 = vmatprep.subr.mxu0 0.0
      %v3835 = vand.u32 %v3134, 4294901760
      %v3836 = vsub.f32 %v3134, %v3835
      %v3837 = vand.u32 %v3836, 4294901760
      %3838 = vmatpush1.msra.mxu0 %v3837
      %3839 = vmatprep.subr.mxu0 0.0
      %v3840 = vand.u32 %v3135, 4294901760
      %v3841 = vsub.f32 %v3135, %v3840
      %v3842 = vand.u32 %v3841, 4294901760
      %3843 = vmatpush1.msra.mxu0 %v3842
      %3844 = vmatprep.subr.mxu0 0.0
      %3845 = vmatpush1.msra.mxu0 0.0
      %3846 = vmatprep.subr.mxu0 0.0
      %3847 = vmatpush1.msra.mxu0 0.0
      %3848 = vmatprep.subr.mxu0 0.0
      %3849 = vmatpush1.msra.mxu0 0.0
      %3850 = vmatprep.subr.mxu0 0.0
      %3851 = vmatpush1.msra.mxu0 0.0
      %3852 = vmatprep.subr.mxu0 0.0
      %3853 = vmatpush1.msra.mxu0 0.0
      %3854 = vmatprep.subr.mxu0 0.0
      %3855 = vmatpush1.msra.mxu0 0.0
      %3856 = vmatprep.subr.mxu0 0.0
      %3857 = vmatpush1.msra.mxu0 0.0
      %3858 = vmatprep.subr.mxu0 0.0
      %3859 = vmatpush1.msra.mxu0 0.0
      %3860 = vmatprep.subr.mxu0 0.0
      %3861 = vmatpush1.msra.mxu0 0.0
      %3862 = vmatprep.subr.mxu0 0.0
      %3863 = vmatpush1.msra.mxu0 0.0
      %3864 = vmatprep.subr.mxu0 0.0
      %3865 = vmatpush1.msra.mxu0 0.0
      %3866 = vmatprep.subr.mxu0 0.0
      %3867 = vmatpush1.msra.mxu0 0.0
      %3868 = vmatprep.subr.mxu0 0.0
      %3869 = vmatpush1.msra.mxu0 0.0
      %3870 = vmatprep.subr.mxu0 0.0
      %3871 = vmatpush1.msra.mxu0 0.0
      %3872 = vmatprep.subr.mxu0 0.0
      %3873 = vmatpush1.msra.mxu0 0.0
      %3874 = vmatprep.subr.mxu0 0.0
      %3875 = vmatpush1.msra.mxu0 0.0
      %3876 = vmatprep.subr.mxu0 0.0
      %3877 = vmatpush1.msra.mxu0 0.0
      %3878 = vmatprep.subr.mxu0 0.0
      %3879 = vmatpush1.msra.mxu0 0.0
      %3880 = vmatprep.subr.mxu0 0.0
      %3881 = vmatpush1.msra.mxu0 0.0
      %3882 = vmatprep.subr.mxu0 0.0
      %3883 = vmatpush1.msra.mxu0 0.0
      %3884 = vmatprep.mubr.f32.mxu0 0.0
      %v3885 = vand.u32 %v3145, 4294901760
      %3886 = vmatmul.mubr.f32.gmra.mrb[0].mxu0 %v3885
      %v3887 = vpop.f32.mrb[0].mxu0
      %v3888 = vadd.f32 %v3725, %v3887
      %v3889 = vpop.f32.mrb[0].mxu0
      %3890 = vmatprep.mubr.f32.mxu0 0.0
      %v3891 = vand.u32 %v3148, 4294901760
      %3892 = vmatmul.mubr.f32.gmra.mrb[0].mxu0 %v3891
      %v3893 = vpop.f32.mrb[0].mxu0
      %v3894 = vadd.f32 %v3733, %v3893
      %v3895 = vpop.f32.mrb[0].mxu0
      %3896 = vmatprep.mubr.f32.mxu0 0.0
      %v3897 = vand.u32 %v3151, 4294901760
      %3898 = vmatmul.mubr.f32.gmra.mrb[0].mxu0 %v3897
      %v3899 = vpop.f32.mrb[0].mxu0
      %v3900 = vadd.f32 %v3741, %v3899
      %v3901 = vpop.f32.mrb[0].mxu0
      %3902 = vmatprep.mubr.f32.mxu0 0.0
      %v3903 = vand.u32 %v3154, 4294901760
      %3904 = vmatmul.mubr.f32.gmra.mrb[0].mxu0 %v3903
      %v3905 = vpop.f32.mrb[0].mxu0
      %v3906 = vadd.f32 %v3749, %v3905
      %v3907 = vpop.f32.mrb[0].mxu0
      %3908 = vmatprep.mubr.f32.mxu0 0.0
      %v3909 = vand.u32 %v3157, 4294901760
      %3910 = vmatmul.mubr.f32.gmra.mrb[0].mxu0 %v3909
      %v3911 = vpop.f32.mrb[0].mxu0
      %v3912 = vadd.f32 %v3757, %v3911
      %v3913 = vpop.f32.mrb[0].mxu0
      %3914 = vmatprep.mubr.f32.mxu0 0.0
      %v3915 = vand.u32 %v3160, 4294901760
      %3916 = vmatmul.mubr.f32.gmra.mrb[0].mxu0 %v3915
      %v3917 = vpop.f32.mrb[0].mxu0
      %v3918 = vadd.f32 %v3765, %v3917
      %v3919 = vpop.f32.mrb[0].mxu0
      %3920 = vmatprep.mubr.f32.mxu0 0.0
      %v3921 = vand.u32 %v3163, 4294901760
      %3922 = vmatmul.mubr.f32.gmra.mrb[0].mxu0 %v3921
      %v3923 = vpop.f32.mrb[0].mxu0
      %v3924 = vadd.f32 %v3773, %v3923
      %v3925 = vpop.f32.mrb[0].mxu0
      %3926 = vmatprep.mubr.f32.mxu0 0.0
      %v3927 = vand.u32 %v3166, 4294901760
      %3928 = vmatmul.mubr.f32.gmra.mrb[0].mxu0 %v3927
      %v3929 = vpop.f32.mrb[0].mxu0
      %v3930 = vadd.f32 %v3781, %v3929
      %v3931 = vpop.f32.mrb[0].mxu0
      %3932 = vdwg.mxu0
      %3933 = vmatprep.subr.mxu0 0.0
      %v3934 = vand.u32 %v3124, 4294901760
      %3935 = vmatpush1.msra.mxu0 %v3934
      %3936 = vmatprep.subr.mxu0 0.0
      %v3937 = vand.u32 %v3125, 4294901760
      %3938 = vmatpush1.msra.mxu0 %v3937
      %3939 = vmatprep.subr.mxu0 0.0
      %v3940 = vand.u32 %v3126, 4294901760
      %3941 = vmatpush1.msra.mxu0 %v3940
      %3942 = vmatprep.subr.mxu0 0.0
      %v3943 = vand.u32 %v3127, 4294901760
      %3944 = vmatpush1.msra.mxu0 %v3943
      %3945 = vmatprep.subr.mxu0 0.0
      %v3946 = vand.u32 %v3128, 4294901760
      %3947 = vmatpush1.msra.mxu0 %v3946
      %3948 = vmatprep.subr.mxu0 0.0
      %v3949 = vand.u32 %v3129, 4294901760
      %3950 = vmatpush1.msra.mxu0 %v3949
      %3951 = vmatprep.subr.mxu0 0.0
      %v3952 = vand.u32 %v3130, 4294901760
      %3953 = vmatpush1.msra.mxu0 %v3952
      %3954 = vmatprep.subr.mxu0 0.0
      %v3955 = vand.u32 %v3131, 4294901760
      %3956 = vmatpush1.msra.mxu0 %v3955
      %3957 = vmatprep.subr.mxu0 0.0
      %v3958 = vand.u32 %v3132, 4294901760
      %3959 = vmatpush1.msra.mxu0 %v3958
      %3960 = vmatprep.subr.mxu0 0.0
      %v3961 = vand.u32 %v3133, 4294901760
      %3962 = vmatpush1.msra.mxu0 %v3961
      %3963 = vmatprep.subr.mxu0 0.0
      %v3964 = vand.u32 %v3134, 4294901760
      %3965 = vmatpush1.msra.mxu0 %v3964
      %3966 = vmatprep.subr.mxu0 0.0
      %v3967 = vand.u32 %v3135, 4294901760
      %3968 = vmatpush1.msra.mxu0 %v3967
      %3969 = vmatprep.subr.mxu0 0.0
      %3970 = vmatpush1.msra.mxu0 0.0
      %3971 = vmatprep.subr.mxu0 0.0
      %3972 = vmatpush1.msra.mxu0 0.0
      %3973 = vmatprep.subr.mxu0 0.0
      %3974 = vmatpush1.msra.mxu0 0.0
      %3975 = vmatprep.subr.mxu0 0.0
      %3976 = vmatpush1.msra.mxu0 0.0
      %3977 = vmatprep.subr.mxu0 0.0
      %3978 = vmatpush1.msra.mxu0 0.0
      %3979 = vmatprep.subr.mxu0 0.0
      %3980 = vmatpush1.msra.mxu0 0.0
      %3981 = vmatprep.subr.mxu0 0.0
      %3982 = vmatpush1.msra.mxu0 0.0
      %3983 = vmatprep.subr.mxu0 0.0
      %3984 = vmatpush1.msra.mxu0 0.0
      %3985 = vmatprep.subr.mxu0 0.0
      %3986 = vmatpush1.msra.mxu0 0.0
      %3987 = vmatprep.subr.mxu0 0.0
      %3988 = vmatpush1.msra.mxu0 0.0
      %3989 = vmatprep.subr.mxu0 0.0
      %3990 = vmatpush1.msra.mxu0 0.0
      %3991 = vmatprep.subr.mxu0 0.0
      %3992 = vmatpush1.msra.mxu0 0.0
      %3993 = vmatprep.subr.mxu0 0.0
      %3994 = vmatpush1.msra.mxu0 0.0
      %3995 = vmatprep.subr.mxu0 0.0
      %3996 = vmatpush1.msra.mxu0 0.0
      %3997 = vmatprep.subr.mxu0 0.0
      %3998 = vmatpush1.msra.mxu0 0.0
      %3999 = vmatprep.subr.mxu0 0.0
      %4000 = vmatpush1.msra.mxu0 0.0
      %4001 = vmatprep.subr.mxu0 0.0
      %4002 = vmatpush1.msra.mxu0 0.0
      %4003 = vmatprep.subr.mxu0 0.0
      %4004 = vmatpush1.msra.mxu0 0.0
      %4005 = vmatprep.subr.mxu0 0.0
      %4006 = vmatpush1.msra.mxu0 0.0
      %4007 = vmatprep.subr.mxu0 0.0
      %4008 = vmatpush1.msra.mxu0 0.0
      %4009 = vmatprep.mubr.f32.mxu0 0.0
      %v4010 = vand.u32 %v3145, 4294901760
      %4011 = vmatmul.mubr.f32.gmra.mrb[0].mxu0 %v4010
      %v4012 = vpop.f32.mrb[0].mxu0
      %v4013 = vadd.f32 %v3888, %v4012
      %v4014 = vpop.f32.mrb[0].mxu0
      %4015 = vmatprep.mubr.f32.mxu0 0.0
      %v4016 = vand.u32 %v3148, 4294901760
      %4017 = vmatmul.mubr.f32.gmra.mrb[0].mxu0 %v4016
      %v4018 = vpop.f32.mrb[0].mxu0
      %v4019 = vadd.f32 %v3894, %v4018
      %v4020 = vpop.f32.mrb[0].mxu0
      %4021 = vmatprep.mubr.f32.mxu0 0.0
      %v4022 = vand.u32 %v3151, 4294901760
      %4023 = vmatmul.mubr.f32.gmra.mrb[0].mxu0 %v4022
      %v4024 = vpop.f32.mrb[0].mxu0
      %v4025 = vadd.f32 %v3900, %v4024
      %v4026 = vpop.f32.mrb[0].mxu0
      %4027 = vmatprep.mubr.f32.mxu0 0.0
      %v4028 = vand.u32 %v3154, 4294901760
      %4029 = vmatmul.mubr.f32.gmra.mrb[0].mxu0 %v4028
      %v4030 = vpop.f32.mrb[0].mxu0
      %v4031 = vadd.f32 %v3906, %v4030
      %v4032 = vpop.f32.mrb[0].mxu0
      %4033 = vmatprep.mubr.f32.mxu0 0.0
      %v4034 = vand.u32 %v3157, 4294901760
      %4035 = vmatmul.mubr.f32.gmra.mrb[0].mxu0 %v4034
      %v4036 = vpop.f32.mrb[0].mxu0
      %v4037 = vadd.f32 %v3912, %v4036
      %v4038 = vpop.f32.mrb[0].mxu0
      %4039 = vmatprep.mubr.f32.mxu0 0.0
      %v4040 = vand.u32 %v3160, 4294901760
      %4041 = vmatmul.mubr.f32.gmra.mrb[0].mxu0 %v4040
      %v4042 = vpop.f32.mrb[0].mxu0
      %v4043 = vadd.f32 %v3918, %v4042
      %v4044 = vpop.f32.mrb[0].mxu0
      %4045 = vmatprep.mubr.f32.mxu0 0.0
      %v4046 = vand.u32 %v3163, 4294901760
      %4047 = vmatmul.mubr.f32.gmra.mrb[0].mxu0 %v4046
      %v4048 = vpop.f32.mrb[0].mxu0
      %v4049 = vadd.f32 %v3924, %v4048
      %v4050 = vpop.f32.mrb[0].mxu0
      %4051 = vmatprep.mubr.f32.mxu0 0.0
      %v4052 = vand.u32 %v3166, 4294901760
      %4053 = vmatmul.mubr.f32.gmra.mrb[0].mxu0 %v4052
      %v4054 = vpop.f32.mrb[0].mxu0
      %v4055 = vadd.f32 %v3930, %v4054
      %v4056 = vpop.f32.mrb[0].mxu0
      %4057 = vdwg.mxu0
      %v4058 = vmax.f32 %v4013, 0.0
      %v4059 = vmax.f32 %v4019, 0.0
      %v4060 = vmax.f32 %v4025, 0.0
      %v4061 = vmax.f32 %v4031, 0.0
      %v4062 = vmax.f32 %v4037, 0.0
      %v4063 = vmax.f32 %v4043, 0.0
      %v4064 = vmax.f32 %v4049, 0.0
      %v4065 = vmax.f32 %v4055, 0.0
      %v4074 = vrot.slane %v4058, 1
      %v4075 = vrot.slane %v4059, 1
      %v4076 = vsel %vm410, %v4074, %v4075
      %v4077 = vrot.slane %v4060, 1
      %v4078 = vsel %vm410, %v4075, %v4077
      %v4079 = vrot.slane %v4061, 1
      %v4080 = vsel %vm410, %v4077, %v4079
      %v4081 = vrot.slane %v4062, 1
      %v4082 = vsel %vm410, %v4079, %v4081
      %v4083 = vrot.slane %v4063, 1
      %v4084 = vsel %vm410, %v4081, %v4083
      %v4085 = vrot.slane %v4064, 1
      %v4086 = vsel %vm410, %v4083, %v4085
      %v4087 = vrot.slane %v4065, 1
      %v4088 = vsel %vm410, %v4085, %v4087
      %v4097 = vmax.f32 %v4058, %v4076
      %v4098 = vmax.f32 %v4059, %v4078
      %v4099 = vmax.f32 %v4060, %v4080
      %v4100 = vmax.f32 %v4061, %v4082
      %v4101 = vmax.f32 %v4062, %v4084
      %v4102 = vmax.f32 %v4063, %v4086
      %v4103 = vmax.f32 %v4064, %v4088
      %v4104 = vmax.f32 %v4065, %v4087
      %vm4105 = vcmask 474112
      %v4106 = vsel %vm4105, %v2028, 0
      %v4108 = vsel %vm4105, %v2029, 0
      %v4110 = vsel %vm4105, %v2030, 0
      %v4112 = vsel %vm4105, %v2031, 0
      %vm4114 = vcmask 1041408
      %v4116 = vsel %vm4114, %v4104, 0
      %4118 = vmatprep.subr.mxu0 0.0
      %v4119 = vand.u32 %v4097, 4294901760
      %4120 = vmatpush1.msra.mxu0 %v4119
      %4121 = vmatprep.subr.mxu0 0.0
      %v4122 = vand.u32 %v4098, 4294901760
      %4123 = vmatpush1.msra.mxu0 %v4122
      %4124 = vmatprep.subr.mxu0 0.0
      %v4125 = vand.u32 %v4099, 4294901760
      %4126 = vmatpush1.msra.mxu0 %v4125
      %4127 = vmatprep.subr.mxu0 0.0
      %v4128 = vand.u32 %v4100, 4294901760
      %4129 = vmatpush1.msra.mxu0 %v4128
      %4130 = vmatprep.subr.mxu0 0.0
      %v4131 = vand.u32 %v4101, 4294901760
      %4132 = vmatpush1.msra.mxu0 %v4131
      %4133 = vmatprep.subr.mxu0 0.0
      %v4134 = vand.u32 %v4102, 4294901760
      %4135 = vmatpush1.msra.mxu0 %v4134
      %4136 = vmatprep.subr.mxu0 0.0
      %v4137 = vand.u32 %v4103, 4294901760
      %4138 = vmatpush1.msra.mxu0 %v4137
      %4139 = vmatprep.subr.mxu0 0.0
      %v4140 = vand.u32 %v4116, 4294901760
      %4141 = vmatpush1.msra.mxu0 %v4140
      %4142 = vmatprep.subr.mxu0 0.0
      %4143 = vmatpush1.msra.mxu0 0.0
      %4144 = vmatprep.subr.mxu0 0.0
      %4145 = vmatpush1.msra.mxu0 0.0
      %4146 = vmatprep.subr.mxu0 0.0
      %4147 = vmatpush1.msra.mxu0 0.0
      %4148 = vmatprep.subr.mxu0 0.0
      %4149 = vmatpush1.msra.mxu0 0.0
      %4150 = vmatprep.subr.mxu0 0.0
      %4151 = vmatpush1.msra.mxu0 0.0
      %4152 = vmatprep.subr.mxu0 0.0
      %4153 = vmatpush1.msra.mxu0 0.0
      %4154 = vmatprep.subr.mxu0 0.0
      %4155 = vmatpush1.msra.mxu0 0.0
      %4156 = vmatprep.subr.mxu0 0.0
      %4157 = vmatpush1.msra.mxu0 0.0
      %4158 = vmatprep.subr.mxu0 0.0
      %4159 = vmatpush1.msra.mxu0 0.0
      %4160 = vmatprep.subr.mxu0 0.0
      %4161 = vmatpush1.msra.mxu0 0.0
      %4162 = vmatprep.subr.mxu0 0.0
      %4163 = vmatpush1.msra.mxu0 0.0
      %4164 = vmatprep.subr.mxu0 0.0
      %4165 = vmatpush1.msra.mxu0 0.0
      %4166 = vmatprep.subr.mxu0 0.0
      %4167 = vmatpush1.msra.mxu0 0.0
      %4168 = vmatprep.subr.mxu0 0.0
      %4169 = vmatpush1.msra.mxu0 0.0
      %4170 = vmatprep.subr.mxu0 0.0
      %4171 = vmatpush1.msra.mxu0 0.0
      %4172 = vmatprep.subr.mxu0 0.0
      %4173 = vmatpush1.msra.mxu0 0.0
      %4174 = vmatprep.subr.mxu0 0.0
      %4175 = vmatpush1.msra.mxu0 0.0
      %4176 = vmatprep.subr.mxu0 0.0
      %4177 = vmatpush1.msra.mxu0 0.0
      %4178 = vmatprep.subr.mxu0 0.0
      %4179 = vmatpush1.msra.mxu0 0.0
      %4180 = vmatprep.subr.mxu0 0.0
      %4181 = vmatpush1.msra.mxu0 0.0
      %4182 = vmatprep.subr.mxu0 0.0
      %4183 = vmatpush1.msra.mxu0 0.0
      %4184 = vmatprep.subr.mxu0 0.0
      %4185 = vmatpush1.msra.mxu0 0.0
      %4186 = vmatprep.subr.mxu0 0.0
      %4187 = vmatpush1.msra.mxu0 0.0
      %4188 = vmatprep.subr.mxu0 0.0
      %4189 = vmatpush1.msra.mxu0 0.0
      %4190 = vmatprep.mubr.f32.mxu0 0.0
      %v4191 = vand.u32 %v4106, 4294901760
      %v4192 = vsub.f32 %v4106, %v4191
      %v4193 = vand.u32 %v4192, 4294901760
      %v4194 = vsub.f32 %v4192, %v4193
      %v4195 = vand.u32 %v4194, 4294901760
      %4196 = vmatmul.mubr.f32.gmra.mrb[0].mxu0 %v4195
      %v4197 = vpop.f32.mrb[0].mxu0
      %v4198 = vadd.f32 0.0, %v4197
      %v4199 = vpop.f32.mrb[0].mxu0
      %4200 = vmatprep.mubr.f32.mxu0 0.0
      %v4201 = vand.u32 %v4108, 4294901760
      %v4202 = vsub.f32 %v4108, %v4201
      %v4203 = vand.u32 %v4202, 4294901760
      %v4204 = vsub.f32 %v4202, %v4203
      %v4205 = vand.u32 %v4204, 4294901760
      %4206 = vmatmul.mubr.f32.gmra.mrb[0].mxu0 %v4205
      %v4207 = vpop.f32.mrb[0].mxu0
      %v4208 = vadd.f32 0.0, %v4207
      %v4209 = vpop.f32.mrb[0].mxu0
      %4210 = vmatprep.mubr.f32.mxu0 0.0
      %v4211 = vand.u32 %v4110, 4294901760
      %v4212 = vsub.f32 %v4110, %v4211
      %v4213 = vand.u32 %v4212, 4294901760
      %v4214 = vsub.f32 %v4212, %v4213
      %v4215 = vand.u32 %v4214, 4294901760
      %4216 = vmatmul.mubr.f32.gmra.mrb[0].mxu0 %v4215
      %v4217 = vpop.f32.mrb[0].mxu0
      %v4218 = vadd.f32 0.0, %v4217
      %v4219 = vpop.f32.mrb[0].mxu0
      %4220 = vmatprep.mubr.f32.mxu0 0.0
      %v4221 = vand.u32 %v4112, 4294901760
      %v4222 = vsub.f32 %v4112, %v4221
      %v4223 = vand.u32 %v4222, 4294901760
      %v4224 = vsub.f32 %v4222, %v4223
      %v4225 = vand.u32 %v4224, 4294901760
      %4226 = vmatmul.mubr.f32.gmra.mrb[0].mxu0 %v4225
      %v4227 = vpop.f32.mrb[0].mxu0
      %v4228 = vadd.f32 0.0, %v4227
      %v4229 = vpop.f32.mrb[0].mxu0
      %4230 = vdwg.mxu0
      %4231 = vmatprep.subr.mxu0 0.0
      %v4232 = vand.u32 %v4097, 4294901760
      %v4233 = vsub.f32 %v4097, %v4232
      %v4234 = vand.u32 %v4233, 4294901760
      %v4235 = vsub.f32 %v4233, %v4234
      %v4236 = vand.u32 %v4235, 4294901760
      %4237 = vmatpush1.msra.mxu0 %v4236
      %4238 = vmatprep.subr.mxu0 0.0
      %v4239 = vand.u32 %v4098, 4294901760
      %v4240 = vsub.f32 %v4098, %v4239
      %v4241 = vand.u32 %v4240, 4294901760
      %v4242 = vsub.f32 %v4240, %v4241
      %v4243 = vand.u32 %v4242, 4294901760
      %4244 = vmatpush1.msra.mxu0 %v4243
      %4245 = vmatprep.subr.mxu0 0.0
      %v4246 = vand.u32 %v4099, 4294901760
      %v4247 = vsub.f32 %v4099, %v4246
      %v4248 = vand.u32 %v4247, 4294901760
      %v4249 = vsub.f32 %v4247, %v4248
      %v4250 = vand.u32 %v4249, 4294901760
      %4251 = vmatpush1.msra.mxu0 %v4250
      %4252 = vmatprep.subr.mxu0 0.0
      %v4253 = vand.u32 %v4100, 4294901760
      %v4254 = vsub.f32 %v4100, %v4253
      %v4255 = vand.u32 %v4254, 4294901760
      %v4256 = vsub.f32 %v4254, %v4255
      %v4257 = vand.u32 %v4256, 4294901760
      %4258 = vmatpush1.msra.mxu0 %v4257
      %4259 = vmatprep.subr.mxu0 0.0
      %v4260 = vand.u32 %v4101, 4294901760
      %v4261 = vsub.f32 %v4101, %v4260
      %v4262 = vand.u32 %v4261, 4294901760
      %v4263 = vsub.f32 %v4261, %v4262
      %v4264 = vand.u32 %v4263, 4294901760
      %4265 = vmatpush1.msra.mxu0 %v4264
      %4266 = vmatprep.subr.mxu0 0.0
      %v4267 = vand.u32 %v4102, 4294901760
      %v4268 = vsub.f32 %v4102, %v4267
      %v4269 = vand.u32 %v4268, 4294901760
      %v4270 = vsub.f32 %v4268, %v4269
      %v4271 = vand.u32 %v4270, 4294901760
      %4272 = vmatpush1.msra.mxu0 %v4271
      %4273 = vmatprep.subr.mxu0 0.0
      %v4274 = vand.u32 %v4103, 4294901760
      %v4275 = vsub.f32 %v4103, %v4274
      %v4276 = vand.u32 %v4275, 4294901760
      %v4277 = vsub.f32 %v4275, %v4276
      %v4278 = vand.u32 %v4277, 4294901760
      %4279 = vmatpush1.msra.mxu0 %v4278
      %4280 = vmatprep.subr.mxu0 0.0
      %v4281 = vand.u32 %v4116, 4294901760
      %v4282 = vsub.f32 %v4116, %v4281
      %v4283 = vand.u32 %v4282, 4294901760
      %v4284 = vsub.f32 %v4282, %v4283
      %v4285 = vand.u32 %v4284, 4294901760
      %4286 = vmatpush1.msra.mxu0 %v4285
      %4287 = vmatprep.subr.mxu0 0.0
      %4288 = vmatpush1.msra.mxu0 0.0
      %4289 = vmatprep.subr.mxu0 0.0
      %4290 = vmatpush1.msra.mxu0 0.0
      %4291 = vmatprep.subr.mxu0 0.0
      %4292 = vmatpush1.msra.mxu0 0.0
      %4293 = vmatprep.subr.mxu0 0.0
      %4294 = vmatpush1.msra.mxu0 0.0
      %4295 = vmatprep.subr.mxu0 0.0
      %4296 = vmatpush1.msra.mxu0 0.0
      %4297 = vmatprep.subr.mxu0 0.0
      %4298 = vmatpush1.msra.mxu0 0.0
      %4299 = vmatprep.subr.mxu0 0.0
      %4300 = vmatpush1.msra.mxu0 0.0
      %4301 = vmatprep.subr.mxu0 0.0
      %4302 = vmatpush1.msra.mxu0 0.0
      %4303 = vmatprep.subr.mxu0 0.0
      %4304 = vmatpush1.msra.mxu0 0.0
      %4305 = vmatprep.subr.mxu0 0.0
      %4306 = vmatpush1.msra.mxu0 0.0
      %4307 = vmatprep.subr.mxu0 0.0
      %4308 = vmatpush1.msra.mxu0 0.0
      %4309 = vmatprep.subr.mxu0 0.0
      %4310 = vmatpush1.msra.mxu0 0.0
      %4311 = vmatprep.subr.mxu0 0.0
      %4312 = vmatpush1.msra.mxu0 0.0
      %4313 = vmatprep.subr.mxu0 0.0
      %4314 = vmatpush1.msra.mxu0 0.0
      %4315 = vmatprep.subr.mxu0 0.0
      %4316 = vmatpush1.msra.mxu0 0.0
      %4317 = vmatprep.subr.mxu0 0.0
      %4318 = vmatpush1.msra.mxu0 0.0
      %4319 = vmatprep.subr.mxu0 0.0
      %4320 = vmatpush1.msra.mxu0 0.0
      %4321 = vmatprep.subr.mxu0 0.0
      %4322 = vmatpush1.msra.mxu0 0.0
      %4323 = vmatprep.subr.mxu0 0.0
      %4324 = vmatpush1.msra.mxu0 0.0
      %4325 = vmatprep.subr.mxu0 0.0
      %4326 = vmatpush1.msra.mxu0 0.0
      %4327 = vmatprep.subr.mxu0 0.0
      %4328 = vmatpush1.msra.mxu0 0.0
      %4329 = vmatprep.subr.mxu0 0.0
      %4330 = vmatpush1.msra.mxu0 0.0
      %4331 = vmatprep.subr.mxu0 0.0
      %4332 = vmatpush1.msra.mxu0 0.0
      %4333 = vmatprep.subr.mxu0 0.0
      %4334 = vmatpush1.msra.mxu0 0.0
      %4335 = vmatprep.mubr.f32.mxu0 0.0
      %v4336 = vand.u32 %v4106, 4294901760
      %4337 = vmatmul.mubr.f32.gmra.mrb[0].mxu0 %v4336
      %v4338 = vpop.f32.mrb[0].mxu0
      %v4339 = vadd.f32 %v4198, %v4338
      %v4340 = vpop.f32.mrb[0].mxu0
      %4341 = vmatprep.mubr.f32.mxu0 0.0
      %v4342 = vand.u32 %v4108, 4294901760
      %4343 = vmatmul.mubr.f32.gmra.mrb[0].mxu0 %v4342
      %v4344 = vpop.f32.mrb[0].mxu0
      %v4345 = vadd.f32 %v4208, %v4344
      %v4346 = vpop.f32.mrb[0].mxu0
      %4347 = vmatprep.mubr.f32.mxu0 0.0
      %v4348 = vand.u32 %v4110, 4294901760
      %4349 = vmatmul.mubr.f32.gmra.mrb[0].mxu0 %v4348
      %v4350 = vpop.f32.mrb[0].mxu0
      %v4351 = vadd.f32 %v4218, %v4350
      %v4352 = vpop.f32.mrb[0].mxu0
      %4353 = vmatprep.mubr.f32.mxu0 0.0
      %v4354 = vand.u32 %v4112, 4294901760
      %4355 = vmatmul.mubr.f32.gmra.mrb[0].mxu0 %v4354
      %v4356 = vpop.f32.mrb[0].mxu0
      %v4357 = vadd.f32 %v4228, %v4356
      %v4358 = vpop.f32.mrb[0].mxu0
      %4359 = vdwg.mxu0
      %4360 = vmatprep.subr.mxu0 0.0
      %v4361 = vand.u32 %v4097, 4294901760
      %v4362 = vsub.f32 %v4097, %v4361
      %4363 = vmatpush1.msra.mxu0 %v4362
      %4364 = vmatprep.subr.mxu0 0.0
      %v4365 = vand.u32 %v4098, 4294901760
      %v4366 = vsub.f32 %v4098, %v4365
      %4367 = vmatpush1.msra.mxu0 %v4366
      %4368 = vmatprep.subr.mxu0 0.0
      %v4369 = vand.u32 %v4099, 4294901760
      %v4370 = vsub.f32 %v4099, %v4369
      %4371 = vmatpush1.msra.mxu0 %v4370
      %4372 = vmatprep.subr.mxu0 0.0
      %v4373 = vand.u32 %v4100, 4294901760
      %v4374 = vsub.f32 %v4100, %v4373
      %4375 = vmatpush1.msra.mxu0 %v4374
      %4376 = vmatprep.subr.mxu0 0.0
      %v4377 = vand.u32 %v4101, 4294901760
      %v4378 = vsub.f32 %v4101, %v4377
      %4379 = vmatpush1.msra.mxu0 %v4378
      %4380 = vmatprep.subr.mxu0 0.0
      %v4381 = vand.u32 %v4102, 4294901760
      %v4382 = vsub.f32 %v4102, %v4381
      %4383 = vmatpush1.msra.mxu0 %v4382
      %4384 = vmatprep.subr.mxu0 0.0
      %v4385 = vand.u32 %v4103, 4294901760
      %v4386 = vsub.f32 %v4103, %v4385
      %4387 = vmatpush1.msra.mxu0 %v4386
      %4388 = vmatprep.subr.mxu0 0.0
      %v4389 = vand.u32 %v4116, 4294901760
      %v4390 = vsub.f32 %v4116, %v4389
      %4391 = vmatpush1.msra.mxu0 %v4390
      %4392 = vmatprep.subr.mxu0 0.0
      %4393 = vmatpush1.msra.mxu0 0.0
      %4394 = vmatprep.subr.mxu0 0.0
      %4395 = vmatpush1.msra.mxu0 0.0
      %4396 = vmatprep.subr.mxu0 0.0
      %4397 = vmatpush1.msra.mxu0 0.0
      %4398 = vmatprep.subr.mxu0 0.0
      %4399 = vmatpush1.msra.mxu0 0.0
      %4400 = vmatprep.subr.mxu0 0.0
      %4401 = vmatpush1.msra.mxu0 0.0
      %4402 = vmatprep.subr.mxu0 0.0
      %4403 = vmatpush1.msra.mxu0 0.0
      %4404 = vmatprep.subr.mxu0 0.0
      %4405 = vmatpush1.msra.mxu0 0.0
      %4406 = vmatprep.subr.mxu0 0.0
      %4407 = vmatpush1.msra.mxu0 0.0
      %4408 = vmatprep.subr.mxu0 0.0
      %4409 = vmatpush1.msra.mxu0 0.0
      %4410 = vmatprep.subr.mxu0 0.0
      %4411 = vmatpush1.msra.mxu0 0.0
      %4412 = vmatprep.subr.mxu0 0.0
      %4413 = vmatpush1.msra.mxu0 0.0
      %4414 = vmatprep.subr.mxu0 0.0
      %4415 = vmatpush1.msra.mxu0 0.0
      %4416 = vmatprep.subr.mxu0 0.0
      %4417 = vmatpush1.msra.mxu0 0.0
      %4418 = vmatprep.subr.mxu0 0.0
      %4419 = vmatpush1.msra.mxu0 0.0
      %4420 = vmatprep.subr.mxu0 0.0
      %4421 = vmatpush1.msra.mxu0 0.0
      %4422 = vmatprep.subr.mxu0 0.0
      %4423 = vmatpush1.msra.mxu0 0.0
      %4424 = vmatprep.subr.mxu0 0.0
      %4425 = vmatpush1.msra.mxu0 0.0
      %4426 = vmatprep.subr.mxu0 0.0
      %4427 = vmatpush1.msra.mxu0 0.0
      %4428 = vmatprep.subr.mxu0 0.0
      %4429 = vmatpush1.msra.mxu0 0.0
      %4430 = vmatprep.subr.mxu0 0.0
      %4431 = vmatpush1.msra.mxu0 0.0
      %4432 = vmatprep.subr.mxu0 0.0
      %4433 = vmatpush1.msra.mxu0 0.0
      %4434 = vmatprep.subr.mxu0 0.0
      %4435 = vmatpush1.msra.mxu0 0.0
      %4436 = vmatprep.subr.mxu0 0.0
      %4437 = vmatpush1.msra.mxu0 0.0
      %4438 = vmatprep.subr.mxu0 0.0
      %4439 = vmatpush1.msra.mxu0 0.0
      %4440 = vmatprep.mubr.f32.mxu0 0.0
      %v4441 = vand.u32 %v4106, 4294901760
      %v4442 = vsub.f32 %v4106, %v4441
      %4443 = vmatmul.mubr.f32.gmra.mrb[0].mxu0 %v4442
      %v4444 = vpop.f32.mrb[0].mxu0
      %v4445 = vadd.f32 %v4339, %v4444
      %v4446 = vpop.f32.mrb[0].mxu0
      %4447 = vmatprep.mubr.f32.mxu0 0.0
      %v4448 = vand.u32 %v4108, 4294901760
      %v4449 = vsub.f32 %v4108, %v4448
      %4450 = vmatmul.mubr.f32.gmra.mrb[0].mxu0 %v4449
      %v4451 = vpop.f32.mrb[0].mxu0
      %v4452 = vadd.f32 %v4345, %v4451
      %v4453 = vpop.f32.mrb[0].mxu0
      %4454 = vmatprep.mubr.f32.mxu0 0.0
      %v4455 = vand.u32 %v4110, 4294901760
      %v4456 = vsub.f32 %v4110, %v4455
      %4457 = vmatmul.mubr.f32.gmra.mrb[0].mxu0 %v4456
      %v4458 = vpop.f32.mrb[0].mxu0
      %v4459 = vadd.f32 %v4351, %v4458
      %v4460 = vpop.f32.mrb[0].mxu0
      %4461 = vmatprep.mubr.f32.mxu0 0.0
      %v4462 = vand.u32 %v4112, 4294901760
      %v4463 = vsub.f32 %v4112, %v4462
      %4464 = vmatmul.mubr.f32.gmra.mrb[0].mxu0 %v4463
      %v4465 = vpop.f32.mrb[0].mxu0
      %v4466 = vadd.f32 %v4357, %v4465
      %v4467 = vpop.f32.mrb[0].mxu0
      %4468 = vdwg.mxu0
      %4469 = vmatprep.subr.mxu0 0.0
      %v4470 = vand.u32 %v4097, 4294901760
      %4471 = vmatpush1.msra.mxu0 %v4470
      %4472 = vmatprep.subr.mxu0 0.0
      %v4473 = vand.u32 %v4098, 4294901760
      %4474 = vmatpush1.msra.mxu0 %v4473
      %4475 = vmatprep.subr.mxu0 0.0
      %v4476 = vand.u32 %v4099, 4294901760
      %4477 = vmatpush1.msra.mxu0 %v4476
      %4478 = vmatprep.subr.mxu0 0.0
      %v4479 = vand.u32 %v4100, 4294901760
      %4480 = vmatpush1.msra.mxu0 %v4479
      %4481 = vmatprep.subr.mxu0 0.0
      %v4482 = vand.u32 %v4101, 4294901760
      %4483 = vmatpush1.msra.mxu0 %v4482
      %4484 = vmatprep.subr.mxu0 0.0
      %v4485 = vand.u32 %v4102, 4294901760
      %4486 = vmatpush1.msra.mxu0 %v4485
      %4487 = vmatprep.subr.mxu0 0.0
      %v4488 = vand.u32 %v4103, 4294901760
      %4489 = vmatpush1.msra.mxu0 %v4488
      %4490 = vmatprep.subr.mxu0 0.0
      %v4491 = vand.u32 %v4116, 4294901760
      %4492 = vmatpush1.msra.mxu0 %v4491
      %4493 = vmatprep.subr.mxu0 0.0
      %4494 = vmatpush1.msra.mxu0 0.0
      %4495 = vmatprep.subr.mxu0 0.0
      %4496 = vmatpush1.msra.mxu0 0.0
      %4497 = vmatprep.subr.mxu0 0.0
      %4498 = vmatpush1.msra.mxu0 0.0
      %4499 = vmatprep.subr.mxu0 0.0
      %4500 = vmatpush1.msra.mxu0 0.0
      %4501 = vmatprep.subr.mxu0 0.0
      %4502 = vmatpush1.msra.mxu0 0.0
      %4503 = vmatprep.subr.mxu0 0.0
      %4504 = vmatpush1.msra.mxu0 0.0
      %4505 = vmatprep.subr.mxu0 0.0
      %4506 = vmatpush1.msra.mxu0 0.0
      %4507 = vmatprep.subr.mxu0 0.0
      %4508 = vmatpush1.msra.mxu0 0.0
      %4509 = vmatprep.subr.mxu0 0.0
      %4510 = vmatpush1.msra.mxu0 0.0
      %4511 = vmatprep.subr.mxu0 0.0
      %4512 = vmatpush1.msra.mxu0 0.0
      %4513 = vmatprep.subr.mxu0 0.0
      %4514 = vmatpush1.msra.mxu0 0.0
      %4515 = vmatprep.subr.mxu0 0.0
      %4516 = vmatpush1.msra.mxu0 0.0
      %4517 = vmatprep.subr.mxu0 0.0
      %4518 = vmatpush1.msra.mxu0 0.0
      %4519 = vmatprep.subr.mxu0 0.0
      %4520 = vmatpush1.msra.mxu0 0.0
      %4521 = vmatprep.subr.mxu0 0.0
      %4522 = vmatpush1.msra.mxu0 0.0
      %4523 = vmatprep.subr.mxu0 0.0
      %4524 = vmatpush1.msra.mxu0 0.0
      %4525 = vmatprep.subr.mxu0 0.0
      %4526 = vmatpush1.msra.mxu0 0.0
      %4527 = vmatprep.subr.mxu0 0.0
      %4528 = vmatpush1.msra.mxu0 0.0
      %4529 = vmatprep.subr.mxu0 0.0
      %4530 = vmatpush1.msra.mxu0 0.0
      %4531 = vmatprep.subr.mxu0 0.0
      %4532 = vmatpush1.msra.mxu0 0.0
      %4533 = vmatprep.subr.mxu0 0.0
      %4534 = vmatpush1.msra.mxu0 0.0
      %4535 = vmatprep.subr.mxu0 0.0
      %4536 = vmatpush1.msra.mxu0 0.0
      %4537 = vmatprep.subr.mxu0 0.0
      %4538 = vmatpush1.msra.mxu0 0.0
      %4539 = vmatprep.subr.mxu0 0.0
      %4540 = vmatpush1.msra.mxu0 0.0
      %4541 = vmatprep.mubr.f32.mxu0 0.0
      %v4542 = vand.u32 %v4106, 4294901760
      %v4543 = vsub.f32 %v4106, %v4542
      %v4544 = vand.u32 %v4543, 4294901760
      %4545 = vmatmul.mubr.f32.gmra.mrb[0].mxu0 %v4544
      %v4546 = vpop.f32.mrb[0].mxu0
      %v4547 = vadd.f32 %v4445, %v4546
      %v4548 = vpop.f32.mrb[0].mxu0
      %4549 = vmatprep.mubr.f32.mxu0 0.0
      %v4550 = vand.u32 %v4108, 4294901760
      %v4551 = vsub.f32 %v4108, %v4550
      %v4552 = vand.u32 %v4551, 4294901760
      %4553 = vmatmul.mubr.f32.gmra.mrb[0].mxu0 %v4552
      %v4554 = vpop.f32.mrb[0].mxu0
      %v4555 = vadd.f32 %v4452, %v4554
      %v4556 = vpop.f32.mrb[0].mxu0
      %4557 = vmatprep.mubr.f32.mxu0 0.0
      %v4558 = vand.u32 %v4110, 4294901760
      %v4559 = vsub.f32 %v4110, %v4558
      %v4560 = vand.u32 %v4559, 4294901760
      %4561 = vmatmul.mubr.f32.gmra.mrb[0].mxu0 %v4560
      %v4562 = vpop.f32.mrb[0].mxu0
      %v4563 = vadd.f32 %v4459, %v4562
      %v4564 = vpop.f32.mrb[0].mxu0
      %4565 = vmatprep.mubr.f32.mxu0 0.0
      %v4566 = vand.u32 %v4112, 4294901760
      %v4567 = vsub.f32 %v4112, %v4566
      %v4568 = vand.u32 %v4567, 4294901760
      %4569 = vmatmul.mubr.f32.gmra.mrb[0].mxu0 %v4568
      %v4570 = vpop.f32.mrb[0].mxu0
      %v4571 = vadd.f32 %v4466, %v4570
      %v4572 = vpop.f32.mrb[0].mxu0
      %4573 = vdwg.mxu0
      %4574 = vmatprep.subr.mxu0 0.0
      %v4575 = vand.u32 %v4097, 4294901760
      %v4576 = vsub.f32 %v4097, %v4575
      %v4577 = vand.u32 %v4576, 4294901760
      %4578 = vmatpush1.msra.mxu0 %v4577
      %4579 = vmatprep.subr.mxu0 0.0
      %v4580 = vand.u32 %v4098, 4294901760
      %v4581 = vsub.f32 %v4098, %v4580
      %v4582 = vand.u32 %v4581, 4294901760
      %4583 = vmatpush1.msra.mxu0 %v4582
      %4584 = vmatprep.subr.mxu0 0.0
      %v4585 = vand.u32 %v4099, 4294901760
      %v4586 = vsub.f32 %v4099, %v4585
      %v4587 = vand.u32 %v4586, 4294901760
      %4588 = vmatpush1.msra.mxu0 %v4587
      %4589 = vmatprep.subr.mxu0 0.0
      %v4590 = vand.u32 %v4100, 4294901760
      %v4591 = vsub.f32 %v4100, %v4590
      %v4592 = vand.u32 %v4591, 4294901760
      %4593 = vmatpush1.msra.mxu0 %v4592
      %4594 = vmatprep.subr.mxu0 0.0
      %v4595 = vand.u32 %v4101, 4294901760
      %v4596 = vsub.f32 %v4101, %v4595
      %v4597 = vand.u32 %v4596, 4294901760
      %4598 = vmatpush1.msra.mxu0 %v4597
      %4599 = vmatprep.subr.mxu0 0.0
      %v4600 = vand.u32 %v4102, 4294901760
      %v4601 = vsub.f32 %v4102, %v4600
      %v4602 = vand.u32 %v4601, 4294901760
      %4603 = vmatpush1.msra.mxu0 %v4602
      %4604 = vmatprep.subr.mxu0 0.0
      %v4605 = vand.u32 %v4103, 4294901760
      %v4606 = vsub.f32 %v4103, %v4605
      %v4607 = vand.u32 %v4606, 4294901760
      %4608 = vmatpush1.msra.mxu0 %v4607
      %4609 = vmatprep.subr.mxu0 0.0
      %v4610 = vand.u32 %v4116, 4294901760
      %v4611 = vsub.f32 %v4116, %v4610
      %v4612 = vand.u32 %v4611, 4294901760
      %4613 = vmatpush1.msra.mxu0 %v4612
      %4614 = vmatprep.subr.mxu0 0.0
      %4615 = vmatpush1.msra.mxu0 0.0
      %4616 = vmatprep.subr.mxu0 0.0
      %4617 = vmatpush1.msra.mxu0 0.0
      %4618 = vmatprep.subr.mxu0 0.0
      %4619 = vmatpush1.msra.mxu0 0.0
      %4620 = vmatprep.subr.mxu0 0.0
      %4621 = vmatpush1.msra.mxu0 0.0
      %4622 = vmatprep.subr.mxu0 0.0
      %4623 = vmatpush1.msra.mxu0 0.0
      %4624 = vmatprep.subr.mxu0 0.0
      %4625 = vmatpush1.msra.mxu0 0.0
      %4626 = vmatprep.subr.mxu0 0.0
      %4627 = vmatpush1.msra.mxu0 0.0
      %4628 = vmatprep.subr.mxu0 0.0
      %4629 = vmatpush1.msra.mxu0 0.0
      %4630 = vmatprep.subr.mxu0 0.0
      %4631 = vmatpush1.msra.mxu0 0.0
      %4632 = vmatprep.subr.mxu0 0.0
      %4633 = vmatpush1.msra.mxu0 0.0
      %4634 = vmatprep.subr.mxu0 0.0
      %4635 = vmatpush1.msra.mxu0 0.0
      %4636 = vmatprep.subr.mxu0 0.0
      %4637 = vmatpush1.msra.mxu0 0.0
      %4638 = vmatprep.subr.mxu0 0.0
      %4639 = vmatpush1.msra.mxu0 0.0
      %4640 = vmatprep.subr.mxu0 0.0
      %4641 = vmatpush1.msra.mxu0 0.0
      %4642 = vmatprep.subr.mxu0 0.0
      %4643 = vmatpush1.msra.mxu0 0.0
      %4644 = vmatprep.subr.mxu0 0.0
      %4645 = vmatpush1.msra.mxu0 0.0
      %4646 = vmatprep.subr.mxu0 0.0
      %4647 = vmatpush1.msra.mxu0 0.0
      %4648 = vmatprep.subr.mxu0 0.0
      %4649 = vmatpush1.msra.mxu0 0.0
      %4650 = vmatprep.subr.mxu0 0.0
      %4651 = vmatpush1.msra.mxu0 0.0
      %4652 = vmatprep.subr.mxu0 0.0
      %4653 = vmatpush1.msra.mxu0 0.0
      %4654 = vmatprep.subr.mxu0 0.0
      %4655 = vmatpush1.msra.mxu0 0.0
      %4656 = vmatprep.subr.mxu0 0.0
      %4657 = vmatpush1.msra.mxu0 0.0
      %4658 = vmatprep.subr.mxu0 0.0
      %4659 = vmatpush1.msra.mxu0 0.0
      %4660 = vmatprep.subr.mxu0 0.0
      %4661 = vmatpush1.msra.mxu0 0.0
      %4662 = vmatprep.mubr.f32.mxu0 0.0
      %v4663 = vand.u32 %v4106, 4294901760
      %4664 = vmatmul.mubr.f32.gmra.mrb[0].mxu0 %v4663
      %v4665 = vpop.f32.mrb[0].mxu0
      %v4666 = vadd.f32 %v4547, %v4665
      %v4667 = vpop.f32.mrb[0].mxu0
      %4668 = vmatprep.mubr.f32.mxu0 0.0
      %v4669 = vand.u32 %v4108, 4294901760
      %4670 = vmatmul.mubr.f32.gmra.mrb[0].mxu0 %v4669
      %v4671 = vpop.f32.mrb[0].mxu0
      %v4672 = vadd.f32 %v4555, %v4671
      %v4673 = vpop.f32.mrb[0].mxu0
      %4674 = vmatprep.mubr.f32.mxu0 0.0
      %v4675 = vand.u32 %v4110, 4294901760
      %4676 = vmatmul.mubr.f32.gmra.mrb[0].mxu0 %v4675
      %v4677 = vpop.f32.mrb[0].mxu0
      %v4678 = vadd.f32 %v4563, %v4677
      %v4679 = vpop.f32.mrb[0].mxu0
      %4680 = vmatprep.mubr.f32.mxu0 0.0
      %v4681 = vand.u32 %v4112, 4294901760
      %4682 = vmatmul.mubr.f32.gmra.mrb[0].mxu0 %v4681
      %v4683 = vpop.f32.mrb[0].mxu0
      %v4684 = vadd.f32 %v4571, %v4683
      %v4685 = vpop.f32.mrb[0].mxu0
      %4686 = vdwg.mxu0
      %4687 = vmatprep.subr.mxu0 0.0
      %v4688 = vand.u32 %v4097, 4294901760
      %4689 = vmatpush1.msra.mxu0 %v4688
      %4690 = vmatprep.subr.mxu0 0.0
      %v4691 = vand.u32 %v4098, 4294901760
      %4692 = vmatpush1.msra.mxu0 %v4691
      %4693 = vmatprep.subr.mxu0 0.0
      %v4694 = vand.u32 %v4099, 4294901760
      %4695 = vmatpush1.msra.mxu0 %v4694
      %4696 = vmatprep.subr.mxu0 0.0
      %v4697 = vand.u32 %v4100, 4294901760
      %4698 = vmatpush1.msra.mxu0 %v4697
      %4699 = vmatprep.subr.mxu0 0.0
      %v4700 = vand.u32 %v4101, 4294901760
      %4701 = vmatpush1.msra.mxu0 %v4700
      %4702 = vmatprep.subr.mxu0 0.0
      %v4703 = vand.u32 %v4102, 4294901760
      %4704 = vmatpush1.msra.mxu0 %v4703
      %4705 = vmatprep.subr.mxu0 0.0
      %v4706 = vand.u32 %v4103, 4294901760
      %4707 = vmatpush1.msra.mxu0 %v4706
      %4708 = vmatprep.subr.mxu0 0.0
      %v4709 = vand.u32 %v4116, 4294901760
      %4710 = vmatpush1.msra.mxu0 %v4709
      %4711 = vmatprep.subr.mxu0 0.0
      %4712 = vmatpush1.msra.mxu0 0.0
      %4713 = vmatprep.subr.mxu0 0.0
      %4714 = vmatpush1.msra.mxu0 0.0
      %4715 = vmatprep.subr.mxu0 0.0
      %4716 = vmatpush1.msra.mxu0 0.0
      %4717 = vmatprep.subr.mxu0 0.0
      %4718 = vmatpush1.msra.mxu0 0.0
      %4719 = vmatprep.subr.mxu0 0.0
      %4720 = vmatpush1.msra.mxu0 0.0
      %4721 = vmatprep.subr.mxu0 0.0
      %4722 = vmatpush1.msra.mxu0 0.0
      %4723 = vmatprep.subr.mxu0 0.0
      %4724 = vmatpush1.msra.mxu0 0.0
      %4725 = vmatprep.subr.mxu0 0.0
      %4726 = vmatpush1.msra.mxu0 0.0
      %4727 = vmatprep.subr.mxu0 0.0
      %4728 = vmatpush1.msra.mxu0 0.0
      %4729 = vmatprep.subr.mxu0 0.0
      %4730 = vmatpush1.msra.mxu0 0.0
      %4731 = vmatprep.subr.mxu0 0.0
      %4732 = vmatpush1.msra.mxu0 0.0
      %4733 = vmatprep.subr.mxu0 0.0
      %4734 = vmatpush1.msra.mxu0 0.0
      %4735 = vmatprep.subr.mxu0 0.0
      %4736 = vmatpush1.msra.mxu0 0.0
      %4737 = vmatprep.subr.mxu0 0.0
      %4738 = vmatpush1.msra.mxu0 0.0
      %4739 = vmatprep.subr.mxu0 0.0
      %4740 = vmatpush1.msra.mxu0 0.0
      %4741 = vmatprep.subr.mxu0 0.0
      %4742 = vmatpush1.msra.mxu0 0.0
      %4743 = vmatprep.subr.mxu0 0.0
      %4744 = vmatpush1.msra.mxu0 0.0
      %4745 = vmatprep.subr.mxu0 0.0
      %4746 = vmatpush1.msra.mxu0 0.0
      %4747 = vmatprep.subr.mxu0 0.0
      %4748 = vmatpush1.msra.mxu0 0.0
      %4749 = vmatprep.subr.mxu0 0.0
      %4750 = vmatpush1.msra.mxu0 0.0
      %4751 = vmatprep.subr.mxu0 0.0
      %4752 = vmatpush1.msra.mxu0 0.0
      %4753 = vmatprep.subr.mxu0 0.0
      %4754 = vmatpush1.msra.mxu0 0.0
      %4755 = vmatprep.subr.mxu0 0.0
      %4756 = vmatpush1.msra.mxu0 0.0
      %4757 = vmatprep.subr.mxu0 0.0
      %4758 = vmatpush1.msra.mxu0 0.0
      %4759 = vmatprep.mubr.f32.mxu0 0.0
      %v4760 = vand.u32 %v4106, 4294901760
      %4761 = vmatmul.mubr.f32.gmra.mrb[0].mxu0 %v4760
      %v4762 = vpop.f32.mrb[0].mxu0
      %v4763 = vadd.f32 %v4666, %v4762
      %v4764 = vpop.f32.mrb[0].mxu0
      %4765 = vmatprep.mubr.f32.mxu0 0.0
      %v4766 = vand.u32 %v4108, 4294901760
      %4767 = vmatmul.mubr.f32.gmra.mrb[0].mxu0 %v4766
      %v4768 = vpop.f32.mrb[0].mxu0
      %v4769 = vadd.f32 %v4672, %v4768
      %v4770 = vpop.f32.mrb[0].mxu0
      %4771 = vmatprep.mubr.f32.mxu0 0.0
      %v4772 = vand.u32 %v4110, 4294901760
      %4773 = vmatmul.mubr.f32.gmra.mrb[0].mxu0 %v4772
      %v4774 = vpop.f32.mrb[0].mxu0
      %v4775 = vadd.f32 %v4678, %v4774
      %v4776 = vpop.f32.mrb[0].mxu0
      %4777 = vmatprep.mubr.f32.mxu0 0.0
      %v4778 = vand.u32 %v4112, 4294901760
      %4779 = vmatmul.mubr.f32.gmra.mrb[0].mxu0 %v4778
      %v4780 = vpop.f32.mrb[0].mxu0
      %v4781 = vadd.f32 %v4684, %v4780
      %v4782 = vpop.f32.mrb[0].mxu0
      %4783 = vdwg.mxu0
      %v4788 = vrot.slane %v4763, 7
      %v4789 = vrot.slane %v4769, 7
      %v4790 = vsel %vm361, %v4788, %v4789
      %v4791 = vrot.slane %v4775, 7
      %v4792 = vsel %vm361, %v4789, %v4791
      %v4793 = vrot.slane %v4781, 7
      %v4794 = vsel %vm361, %v4791, %v4793
      %v4799 = vsel %vm361, 0.0, %v4788
      %v4800 = vsel %vm485, %v4794, 0.0
      %v4803 = vrot.slane %v4799, 1
      %v4804 = vrot.slane %v4790, 1
      %v4805 = vsel %vm410, %v4803, %v4804
      %v4806 = vrot.slane %v4792, 1
      %v4807 = vsel %vm410, %v4804, %v4806
      %v4808 = vrot.slane %v4800, 1
      %v4809 = vsel %vm410, %v4806, %v4808
      %4810 = vrot.lane.b32.xlu0 %v4805, 64
      %v4811 = vpop.permute.xlu0 %4810
      %4812 = vrot.lane.b32.xlu0 %v4807, 64
      %v4813 = vpop.permute.xlu0 %4812
      %4814 = vrot.lane.b32.xlu0 %v4809, 64
      %v4815 = vpop.permute.xlu0 %4814
      %4816 = vrot.lane.b32.xlu0 %v4808, 64
      %v4817 = vpop.permute.xlu0 %4816
      %v4822 = vrot.slane %v4799, 2
      %v4823 = vrot.slane %v4790, 2
      %v4824 = vsel %vm485, %v4822, %v4823
      %v4825 = vrot.slane %v4792, 2
      %v4826 = vsel %vm485, %v4823, %v4825
      %v4827 = vrot.slane %v4800, 2
      %v4828 = vsel %vm485, %v4825, %v4827
      %v4829 = vsel %vm3115, %v4799, %v4811
      %v4830 = vsel %vm3115, %v4790, %v4813
      %v4831 = vsel %vm3115, %v4792, %v4815
      %v4832 = vsel %vm3115, %v4800, %v4817
      %v4833 = vld [vmem:[%s5] sm:$0xff]
      %v4834 = vld [vmem:[%s5 + $0x8] sm:$0xff]
      %v4835 = vld [vmem:[%s5 + $0x10] sm:$0xff]
      %v4836 = vld [vmem:[%s5 + $0x18] sm:$0xff]
      %v4837 = vld [vmem:[%s5 + $0x20] sm:$0xff]
      %v4838 = vld [vmem:[%s5 + $0x28] sm:$0xff]
      %v4839 = vld [vmem:[%s5 + $0x30] sm:$0xff]
      %v4840 = vld [vmem:[%s5 + $0x38] sm:$0xff]
      %v4841 = vld [vmem:[%s5 + $0x40] sm:$0xff]
      %v4842 = vld [vmem:[%s5 + $0x48] sm:$0xff]
      %v4843 = vld [vmem:[%s5 + $0x50] sm:$0xff]
      %v4844 = vld [vmem:[%s5 + $0x58] sm:$0xff]
      %v4845 = vld [vmem:[%s5 + $0x60] sm:$0xff]
      %v4846 = vld [vmem:[%s5 + $0x68] sm:$0xff]
      %v4847 = vld [vmem:[%s5 + $0x70] sm:$0xff]
      %v4848 = vld [vmem:[%s5 + $0x78] sm:$0xff]
      %v4849 = vld [vmem:[%s5 + $0x80] sm:$0xff]
      %v4850 = vld [vmem:[%s5 + $0x88] sm:$0xff]
      %v4851 = vld [vmem:[%s5 + $0x90] sm:$0xff]
      %v4852 = vld [vmem:[%s5 + $0x98] sm:$0xff]
      %v4853 = vld [vmem:[%s5 + $0xa0] sm:$0xff]
      %v4854 = vld [vmem:[%s5 + $0xa8] sm:$0xff]
      %v4855 = vld [vmem:[%s5 + $0xb0] sm:$0xff]
      %v4856 = vld [vmem:[%s5 + $0xb8] sm:$0xff]
      %v4857 = vld [vmem:[%s6] sm:$0x1]
      %v4859 = vlaneseq
      %v4860 = vshrl.u32 %v4859, 7
      %v4861 = vsub.s32 0, %v4860
      %v4862 = vrot.slane %v4857, %v4861
      %v4864 = vsel %vm3115, %v4824, 0
      %v4866 = vsel %vm3115, %v4826, 0
      %v4868 = vsel %vm3115, %v4828, 0
      %v4870 = vsel %vm3115, %v4827, 0
      %4872 = vmatprep.subr.mxu0 0.0
      %v4873 = vand.u32 %v4833, 4294901760
      %4874 = vmatpush1.msra.mxu0 %v4873
      %4875 = vmatprep.subr.mxu0 0.0
      %v4876 = vand.u32 %v4834, 4294901760
      %4877 = vmatpush1.msra.mxu0 %v4876
      %4878 = vmatprep.subr.mxu0 0.0
      %v4879 = vand.u32 %v4835, 4294901760
      %4880 = vmatpush1.msra.mxu0 %v4879
      %4881 = vmatprep.subr.mxu0 0.0
      %v4882 = vand.u32 %v4836, 4294901760
      %4883 = vmatpush1.msra.mxu0 %v4882
      %4884 = vmatprep.subr.mxu0 0.0
      %v4885 = vand.u32 %v4837, 4294901760
      %4886 = vmatpush1.msra.mxu0 %v4885
      %4887 = vmatprep.subr.mxu0 0.0
      %v4888 = vand.u32 %v4838, 4294901760
      %4889 = vmatpush1.msra.mxu0 %v4888
      %4890 = vmatprep.subr.mxu0 0.0
      %v4891 = vand.u32 %v4839, 4294901760
      %4892 = vmatpush1.msra.mxu0 %v4891
      %4893 = vmatprep.subr.mxu0 0.0
      %v4894 = vand.u32 %v4840, 4294901760
      %4895 = vmatpush1.msra.mxu0 %v4894
      %4896 = vmatprep.subr.mxu0 0.0
      %v4897 = vand.u32 %v4841, 4294901760
      %4898 = vmatpush1.msra.mxu0 %v4897
      %4899 = vmatprep.subr.mxu0 0.0
      %v4900 = vand.u32 %v4842, 4294901760
      %4901 = vmatpush1.msra.mxu0 %v4900
      %4902 = vmatprep.subr.mxu0 0.0
      %v4903 = vand.u32 %v4843, 4294901760
      %4904 = vmatpush1.msra.mxu0 %v4903
      %4905 = vmatprep.subr.mxu0 0.0
      %v4906 = vand.u32 %v4844, 4294901760
      %4907 = vmatpush1.msra.mxu0 %v4906
      %4908 = vmatprep.subr.mxu0 0.0
      %v4909 = vand.u32 %v4845, 4294901760
      %4910 = vmatpush1.msra.mxu0 %v4909
      %4911 = vmatprep.subr.mxu0 0.0
      %v4912 = vand.u32 %v4846, 4294901760
      %4913 = vmatpush1.msra.mxu0 %v4912
      %4914 = vmatprep.subr.mxu0 0.0
      %v4915 = vand.u32 %v4847, 4294901760
      %4916 = vmatpush1.msra.mxu0 %v4915
      %4917 = vmatprep.subr.mxu0 0.0
      %v4918 = vand.u32 %v4848, 4294901760
      %4919 = vmatpush1.msra.mxu0 %v4918
      %4920 = vmatprep.subr.mxu0 0.0
      %v4921 = vand.u32 %v4849, 4294901760
      %4922 = vmatpush1.msra.mxu0 %v4921
      %4923 = vmatprep.subr.mxu0 0.0
      %v4924 = vand.u32 %v4850, 4294901760
      %4925 = vmatpush1.msra.mxu0 %v4924
      %4926 = vmatprep.subr.mxu0 0.0
      %v4927 = vand.u32 %v4851, 4294901760
      %4928 = vmatpush1.msra.mxu0 %v4927
      %4929 = vmatprep.subr.mxu0 0.0
      %v4930 = vand.u32 %v4852, 4294901760
      %4931 = vmatpush1.msra.mxu0 %v4930
      %4932 = vmatprep.subr.mxu0 0.0
      %v4933 = vand.u32 %v4853, 4294901760
      %4934 = vmatpush1.msra.mxu0 %v4933
      %4935 = vmatprep.subr.mxu0 0.0
      %v4936 = vand.u32 %v4854, 4294901760
      %4937 = vmatpush1.msra.mxu0 %v4936
      %4938 = vmatprep.subr.mxu0 0.0
      %v4939 = vand.u32 %v4855, 4294901760
      %4940 = vmatpush1.msra.mxu0 %v4939
      %4941 = vmatprep.subr.mxu0 0.0
      %v4942 = vand.u32 %v4856, 4294901760
      %4943 = vmatpush1.msra.mxu0 %v4942
      %4944 = vmatprep.subr.mxu0 0.0
      %4945 = vmatpush1.msra.mxu0 0.0
      %4946 = vmatprep.subr.mxu0 0.0
      %4947 = vmatpush1.msra.mxu0 0.0
      %4948 = vmatprep.subr.mxu0 0.0
      %4949 = vmatpush1.msra.mxu0 0.0
      %4950 = vmatprep.subr.mxu0 0.0
      %4951 = vmatpush1.msra.mxu0 0.0
      %4952 = vmatprep.subr.mxu0 0.0
      %4953 = vmatpush1.msra.mxu0 0.0
      %4954 = vmatprep.subr.mxu0 0.0
      %4955 = vmatpush1.msra.mxu0 0.0
      %4956 = vmatprep.subr.mxu0 0.0
      %4957 = vmatpush1.msra.mxu0 0.0
      %4958 = vmatprep.subr.mxu0 0.0
      %4959 = vmatpush1.msra.mxu0 0.0
      %v4960 = vand.u32 %v4864, 4294901760
      %v4961 = vsub.f32 %v4864, %v4960
      %v4962 = vand.u32 %v4961, 4294901760
      %v4963 = vsub.f32 %v4961, %v4962
      %v4964 = vand.u32 %v4963, 4294901760
      %4965 = vmatprep.mubr.f32.mxu0 %v4964
      %v4966 = vand.u32 %v4829, 4294901760
      %v4967 = vsub.f32 %v4829, %v4966
      %v4968 = vand.u32 %v4967, 4294901760
      %v4969 = vsub.f32 %v4967, %v4968
      %v4970 = vand.u32 %v4969, 4294901760
      %4971 = vmatmul.mubr.f32.gmra.mrb[0].mxu0 %v4970
      %v4972 = vpop.f32.mrb[0].mxu0
      %v4973 = vadd.f32 %v4862, %v4972
      %v4974 = vpop.f32.mrb[0].mxu0
      %v4975 = vand.u32 %v4866, 4294901760
      %v4976 = vsub.f32 %v4866, %v4975
      %v4977 = vand.u32 %v4976, 4294901760
      %v4978 = vsub.f32 %v4976, %v4977
      %v4979 = vand.u32 %v4978, 4294901760
      %4980 = vmatprep.mubr.f32.mxu0 %v4979
      %v4981 = vand.u32 %v4830, 4294901760
      %v4982 = vsub.f32 %v4830, %v4981
      %v4983 = vand.u32 %v4982, 4294901760
      %v4984 = vsub.f32 %v4982, %v4983
      %v4985 = vand.u32 %v4984, 4294901760
      %4986 = vmatmul.mubr.f32.gmra.mrb[0].mxu0 %v4985
      %v4987 = vpop.f32.mrb[0].mxu0
      %v4988 = vadd.f32 %v4862, %v4987
      %v4989 = vpop.f32.mrb[0].mxu0
      %v4990 = vand.u32 %v4868, 4294901760
      %v4991 = vsub.f32 %v4868, %v4990
      %v4992 = vand.u32 %v4991, 4294901760
      %v4993 = vsub.f32 %v4991, %v4992
      %v4994 = vand.u32 %v4993, 4294901760
      %4995 = vmatprep.mubr.f32.mxu0 %v4994
      %v4996 = vand.u32 %v4831, 4294901760
      %v4997 = vsub.f32 %v4831, %v4996
      %v4998 = vand.u32 %v4997, 4294901760
      %v4999 = vsub.f32 %v4997, %v4998
      %v5000 = vand.u32 %v4999, 4294901760
      %5001 = vmatmul.mubr.f32.gmra.mrb[0].mxu0 %v5000
      %v5002 = vpop.f32.mrb[0].mxu0
      %v5003 = vadd.f32 %v4862, %v5002
      %v5004 = vpop.f32.mrb[0].mxu0
      %v5005 = vand.u32 %v4870, 4294901760
      %v5006 = vsub.f32 %v4870, %v5005
      %v5007 = vand.u32 %v5006, 4294901760
      %v5008 = vsub.f32 %v5006, %v5007
      %v5009 = vand.u32 %v5008, 4294901760
      %5010 = vmatprep.mubr.f32.mxu0 %v5009
      %v5011 = vand.u32 %v4832, 4294901760
      %v5012 = vsub.f32 %v4832, %v5011
      %v5013 = vand.u32 %v5012, 4294901760
      %v5014 = vsub.f32 %v5012, %v5013
      %v5015 = vand.u32 %v5014, 4294901760
      %5016 = vmatmul.mubr.f32.gmra.mrb[0].mxu0 %v5015
      %v5017 = vpop.f32.mrb[0].mxu0
      %v5018 = vadd.f32 %v4862, %v5017
      %v5019 = vpop.f32.mrb[0].mxu0
      %5020 = vdwg.mxu0
      %5021 = vmatprep.subr.mxu0 0.0
      %v5022 = vand.u32 %v4833, 4294901760
      %v5023 = vsub.f32 %v4833, %v5022
      %v5024 = vand.u32 %v5023, 4294901760
      %v5025 = vsub.f32 %v5023, %v5024
      %v5026 = vand.u32 %v5025, 4294901760
      %5027 = vmatpush1.msra.mxu0 %v5026
      %5028 = vmatprep.subr.mxu0 0.0
      %v5029 = vand.u32 %v4834, 4294901760
      %v5030 = vsub.f32 %v4834, %v5029
      %v5031 = vand.u32 %v5030, 4294901760
      %v5032 = vsub.f32 %v5030, %v5031
      %v5033 = vand.u32 %v5032, 4294901760
      %5034 = vmatpush1.msra.mxu0 %v5033
      %5035 = vmatprep.subr.mxu0 0.0
      %v5036 = vand.u32 %v4835, 4294901760
      %v5037 = vsub.f32 %v4835, %v5036
      %v5038 = vand.u32 %v5037, 4294901760
      %v5039 = vsub.f32 %v5037, %v5038
      %v5040 = vand.u32 %v5039, 4294901760
      %5041 = vmatpush1.msra.mxu0 %v5040
      %5042 = vmatprep.subr.mxu0 0.0
      %v5043 = vand.u32 %v4836, 4294901760
      %v5044 = vsub.f32 %v4836, %v5043
      %v5045 = vand.u32 %v5044, 4294901760
      %v5046 = vsub.f32 %v5044, %v5045
      %v5047 = vand.u32 %v5046, 4294901760
      %5048 = vmatpush1.msra.mxu0 %v5047
      %5049 = vmatprep.subr.mxu0 0.0
      %v5050 = vand.u32 %v4837, 4294901760
      %v5051 = vsub.f32 %v4837, %v5050
      %v5052 = vand.u32 %v5051, 4294901760
      %v5053 = vsub.f32 %v5051, %v5052
      %v5054 = vand.u32 %v5053, 4294901760
      %5055 = vmatpush1.msra.mxu0 %v5054
      %5056 = vmatprep.subr.mxu0 0.0
      %v5057 = vand.u32 %v4838, 4294901760
      %v5058 = vsub.f32 %v4838, %v5057
      %v5059 = vand.u32 %v5058, 4294901760
      %v5060 = vsub.f32 %v5058, %v5059
      %v5061 = vand.u32 %v5060, 4294901760
      %5062 = vmatpush1.msra.mxu0 %v5061
      %5063 = vmatprep.subr.mxu0 0.0
      %v5064 = vand.u32 %v4839, 4294901760
      %v5065 = vsub.f32 %v4839, %v5064
      %v5066 = vand.u32 %v5065, 4294901760
      %v5067 = vsub.f32 %v5065, %v5066
      %v5068 = vand.u32 %v5067, 4294901760
      %5069 = vmatpush1.msra.mxu0 %v5068
      %5070 = vmatprep.subr.mxu0 0.0
      %v5071 = vand.u32 %v4840, 4294901760
      %v5072 = vsub.f32 %v4840, %v5071
      %v5073 = vand.u32 %v5072, 4294901760
      %v5074 = vsub.f32 %v5072, %v5073
      %v5075 = vand.u32 %v5074, 4294901760
      %5076 = vmatpush1.msra.mxu0 %v5075
      %5077 = vmatprep.subr.mxu0 0.0
      %v5078 = vand.u32 %v4841, 4294901760
      %v5079 = vsub.f32 %v4841, %v5078
      %v5080 = vand.u32 %v5079, 4294901760
      %v5081 = vsub.f32 %v5079, %v5080
      %v5082 = vand.u32 %v5081, 4294901760
      %5083 = vmatpush1.msra.mxu0 %v5082
      %5084 = vmatprep.subr.mxu0 0.0
      %v5085 = vand.u32 %v4842, 4294901760
      %v5086 = vsub.f32 %v4842, %v5085
      %v5087 = vand.u32 %v5086, 4294901760
      %v5088 = vsub.f32 %v5086, %v5087
      %v5089 = vand.u32 %v5088, 4294901760
      %5090 = vmatpush1.msra.mxu0 %v5089
      %5091 = vmatprep.subr.mxu0 0.0
      %v5092 = vand.u32 %v4843, 4294901760
      %v5093 = vsub.f32 %v4843, %v5092
      %v5094 = vand.u32 %v5093, 4294901760
      %v5095 = vsub.f32 %v5093, %v5094
      %v5096 = vand.u32 %v5095, 4294901760
      %5097 = vmatpush1.msra.mxu0 %v5096
      %5098 = vmatprep.subr.mxu0 0.0
      %v5099 = vand.u32 %v4844, 4294901760
      %v5100 = vsub.f32 %v4844, %v5099
      %v5101 = vand.u32 %v5100, 4294901760
      %v5102 = vsub.f32 %v5100, %v5101
      %v5103 = vand.u32 %v5102, 4294901760
      %5104 = vmatpush1.msra.mxu0 %v5103
      %5105 = vmatprep.subr.mxu0 0.0
      %v5106 = vand.u32 %v4845, 4294901760
      %v5107 = vsub.f32 %v4845, %v5106
      %v5108 = vand.u32 %v5107, 4294901760
      %v5109 = vsub.f32 %v5107, %v5108
      %v5110 = vand.u32 %v5109, 4294901760
      %5111 = vmatpush1.msra.mxu0 %v5110
      %5112 = vmatprep.subr.mxu0 0.0
      %v5113 = vand.u32 %v4846, 4294901760
      %v5114 = vsub.f32 %v4846, %v5113
      %v5115 = vand.u32 %v5114, 4294901760
      %v5116 = vsub.f32 %v5114, %v5115
      %v5117 = vand.u32 %v5116, 4294901760
      %5118 = vmatpush1.msra.mxu0 %v5117
      %5119 = vmatprep.subr.mxu0 0.0
      %v5120 = vand.u32 %v4847, 4294901760
      %v5121 = vsub.f32 %v4847, %v5120
      %v5122 = vand.u32 %v5121, 4294901760
      %v5123 = vsub.f32 %v5121, %v5122
      %v5124 = vand.u32 %v5123, 4294901760
      %5125 = vmatpush1.msra.mxu0 %v5124
      %5126 = vmatprep.subr.mxu0 0.0
      %v5127 = vand.u32 %v4848, 4294901760
      %v5128 = vsub.f32 %v4848, %v5127
      %v5129 = vand.u32 %v5128, 4294901760
      %v5130 = vsub.f32 %v5128, %v5129
      %v5131 = vand.u32 %v5130, 4294901760
      %5132 = vmatpush1.msra.mxu0 %v5131
      %5133 = vmatprep.subr.mxu0 0.0
      %v5134 = vand.u32 %v4849, 4294901760
      %v5135 = vsub.f32 %v4849, %v5134
      %v5136 = vand.u32 %v5135, 4294901760
      %v5137 = vsub.f32 %v5135, %v5136
      %v5138 = vand.u32 %v5137, 4294901760
      %5139 = vmatpush1.msra.mxu0 %v5138
      %5140 = vmatprep.subr.mxu0 0.0
      %v5141 = vand.u32 %v4850, 4294901760
      %v5142 = vsub.f32 %v4850, %v5141
      %v5143 = vand.u32 %v5142, 4294901760
      %v5144 = vsub.f32 %v5142, %v5143
      %v5145 = vand.u32 %v5144, 4294901760
      %5146 = vmatpush1.msra.mxu0 %v5145
      %5147 = vmatprep.subr.mxu0 0.0
      %v5148 = vand.u32 %v4851, 4294901760
      %v5149 = vsub.f32 %v4851, %v5148
      %v5150 = vand.u32 %v5149, 4294901760
      %v5151 = vsub.f32 %v5149, %v5150
      %v5152 = vand.u32 %v5151, 4294901760
      %5153 = vmatpush1.msra.mxu0 %v5152
      %5154 = vmatprep.subr.mxu0 0.0
      %v5155 = vand.u32 %v4852, 4294901760
      %v5156 = vsub.f32 %v4852, %v5155
      %v5157 = vand.u32 %v5156, 4294901760
      %v5158 = vsub.f32 %v5156, %v5157
      %v5159 = vand.u32 %v5158, 4294901760
      %5160 = vmatpush1.msra.mxu0 %v5159
      %5161 = vmatprep.subr.mxu0 0.0
      %v5162 = vand.u32 %v4853, 4294901760
      %v5163 = vsub.f32 %v4853, %v5162
      %v5164 = vand.u32 %v5163, 4294901760
      %v5165 = vsub.f32 %v5163, %v5164
      %v5166 = vand.u32 %v5165, 4294901760
      %5167 = vmatpush1.msra.mxu0 %v5166
      %5168 = vmatprep.subr.mxu0 0.0
      %v5169 = vand.u32 %v4854, 4294901760
      %v5170 = vsub.f32 %v4854, %v5169
      %v5171 = vand.u32 %v5170, 4294901760
      %v5172 = vsub.f32 %v5170, %v5171
      %v5173 = vand.u32 %v5172, 4294901760
      %5174 = vmatpush1.msra.mxu0 %v5173
      %5175 = vmatprep.subr.mxu0 0.0
      %v5176 = vand.u32 %v4855, 4294901760
      %v5177 = vsub.f32 %v4855, %v5176
      %v5178 = vand.u32 %v5177, 4294901760
      %v5179 = vsub.f32 %v5177, %v5178
      %v5180 = vand.u32 %v5179, 4294901760
      %5181 = vmatpush1.msra.mxu0 %v5180
      %5182 = vmatprep.subr.mxu0 0.0
      %v5183 = vand.u32 %v4856, 4294901760
      %v5184 = vsub.f32 %v4856, %v5183
      %v5185 = vand.u32 %v5184, 4294901760
      %v5186 = vsub.f32 %v5184, %v5185
      %v5187 = vand.u32 %v5186, 4294901760
      %5188 = vmatpush1.msra.mxu0 %v5187
      %5189 = vmatprep.subr.mxu0 0.0
      %5190 = vmatpush1.msra.mxu0 0.0
      %5191 = vmatprep.subr.mxu0 0.0
      %5192 = vmatpush1.msra.mxu0 0.0
      %5193 = vmatprep.subr.mxu0 0.0
      %5194 = vmatpush1.msra.mxu0 0.0
      %5195 = vmatprep.subr.mxu0 0.0
      %5196 = vmatpush1.msra.mxu0 0.0
      %5197 = vmatprep.subr.mxu0 0.0
      %5198 = vmatpush1.msra.mxu0 0.0
      %5199 = vmatprep.subr.mxu0 0.0
      %5200 = vmatpush1.msra.mxu0 0.0
      %5201 = vmatprep.subr.mxu0 0.0
      %5202 = vmatpush1.msra.mxu0 0.0
      %5203 = vmatprep.subr.mxu0 0.0
      %5204 = vmatpush1.msra.mxu0 0.0
      %v5205 = vand.u32 %v4864, 4294901760
      %5206 = vmatprep.mubr.f32.mxu0 %v5205
      %v5207 = vand.u32 %v4829, 4294901760
      %5208 = vmatmul.mubr.f32.gmra.mrb[0].mxu0 %v5207
      %v5209 = vpop.f32.mrb[0].mxu0
      %v5210 = vadd.f32 %v4973, %v5209
      %v5211 = vpop.f32.mrb[0].mxu0
      %v5212 = vand.u32 %v4866, 4294901760
      %5213 = vmatprep.mubr.f32.mxu0 %v5212
      %v5214 = vand.u32 %v4830, 4294901760
      %5215 = vmatmul.mubr.f32.gmra.mrb[0].mxu0 %v5214
      %v5216 = vpop.f32.mrb[0].mxu0
      %v5217 = vadd.f32 %v4988, %v5216
      %v5218 = vpop.f32.mrb[0].mxu0
      %v5219 = vand.u32 %v4868, 4294901760
      %5220 = vmatprep.mubr.f32.mxu0 %v5219
      %v5221 = vand.u32 %v4831, 4294901760
      %5222 = vmatmul.mubr.f32.gmra.mrb[0].mxu0 %v5221
      %v5223 = vpop.f32.mrb[0].mxu0
      %v5224 = vadd.f32 %v5003, %v5223
      %v5225 = vpop.f32.mrb[0].mxu0
      %v5226 = vand.u32 %v4870, 4294901760
      %5227 = vmatprep.mubr.f32.mxu0 %v5226
      %v5228 = vand.u32 %v4832, 4294901760
      %5229 = vmatmul.mubr.f32.gmra.mrb[0].mxu0 %v5228
      %v5230 = vpop.f32.mrb[0].mxu0
      %v5231 = vadd.f32 %v5018, %v5230
      %v5232 = vpop.f32.mrb[0].mxu0
      %5233 = vdwg.mxu0
      %5234 = vmatprep.subr.mxu0 0.0
      %v5235 = vand.u32 %v4833, 4294901760
      %v5236 = vsub.f32 %v4833, %v5235
      %5237 = vmatpush1.msra.mxu0 %v5236
      %5238 = vmatprep.subr.mxu0 0.0
      %v5239 = vand.u32 %v4834, 4294901760
      %v5240 = vsub.f32 %v4834, %v5239
      %5241 = vmatpush1.msra.mxu0 %v5240
      %5242 = vmatprep.subr.mxu0 0.0
      %v5243 = vand.u32 %v4835, 4294901760
      %v5244 = vsub.f32 %v4835, %v5243
      %5245 = vmatpush1.msra.mxu0 %v5244
      %5246 = vmatprep.subr.mxu0 0.0
      %v5247 = vand.u32 %v4836, 4294901760
      %v5248 = vsub.f32 %v4836, %v5247
      %5249 = vmatpush1.msra.mxu0 %v5248
      %5250 = vmatprep.subr.mxu0 0.0
      %v5251 = vand.u32 %v4837, 4294901760
      %v5252 = vsub.f32 %v4837, %v5251
      %5253 = vmatpush1.msra.mxu0 %v5252
      %5254 = vmatprep.subr.mxu0 0.0
      %v5255 = vand.u32 %v4838, 4294901760
      %v5256 = vsub.f32 %v4838, %v5255
      %5257 = vmatpush1.msra.mxu0 %v5256
      %5258 = vmatprep.subr.mxu0 0.0
      %v5259 = vand.u32 %v4839, 4294901760
      %v5260 = vsub.f32 %v4839, %v5259
      %5261 = vmatpush1.msra.mxu0 %v5260
      %5262 = vmatprep.subr.mxu0 0.0
      %v5263 = vand.u32 %v4840, 4294901760
      %v5264 = vsub.f32 %v4840, %v5263
      %5265 = vmatpush1.msra.mxu0 %v5264
      %5266 = vmatprep.subr.mxu0 0.0
      %v5267 = vand.u32 %v4841, 4294901760
      %v5268 = vsub.f32 %v4841, %v5267
      %5269 = vmatpush1.msra.mxu0 %v5268
      %5270 = vmatprep.subr.mxu0 0.0
      %v5271 = vand.u32 %v4842, 4294901760
      %v5272 = vsub.f32 %v4842, %v5271
      %5273 = vmatpush1.msra.mxu0 %v5272
      %5274 = vmatprep.subr.mxu0 0.0
      %v5275 = vand.u32 %v4843, 4294901760
      %v5276 = vsub.f32 %v4843, %v5275
      %5277 = vmatpush1.msra.mxu0 %v5276
      %5278 = vmatprep.subr.mxu0 0.0
      %v5279 = vand.u32 %v4844, 4294901760
      %v5280 = vsub.f32 %v4844, %v5279
      %5281 = vmatpush1.msra.mxu0 %v5280
      %5282 = vmatprep.subr.mxu0 0.0
      %v5283 = vand.u32 %v4845, 4294901760
      %v5284 = vsub.f32 %v4845, %v5283
      %5285 = vmatpush1.msra.mxu0 %v5284
      %5286 = vmatprep.subr.mxu0 0.0
      %v5287 = vand.u32 %v4846, 4294901760
      %v5288 = vsub.f32 %v4846, %v5287
      %5289 = vmatpush1.msra.mxu0 %v5288
      %5290 = vmatprep.subr.mxu0 0.0
      %v5291 = vand.u32 %v4847, 4294901760
      %v5292 = vsub.f32 %v4847, %v5291
      %5293 = vmatpush1.msra.mxu0 %v5292
      %5294 = vmatprep.subr.mxu0 0.0
      %v5295 = vand.u32 %v4848, 4294901760
      %v5296 = vsub.f32 %v4848, %v5295
      %5297 = vmatpush1.msra.mxu0 %v5296
      %5298 = vmatprep.subr.mxu0 0.0
      %v5299 = vand.u32 %v4849, 4294901760
      %v5300 = vsub.f32 %v4849, %v5299
      %5301 = vmatpush1.msra.mxu0 %v5300
      %5302 = vmatprep.subr.mxu0 0.0
      %v5303 = vand.u32 %v4850, 4294901760
      %v5304 = vsub.f32 %v4850, %v5303
      %5305 = vmatpush1.msra.mxu0 %v5304
      %5306 = vmatprep.subr.mxu0 0.0
      %v5307 = vand.u32 %v4851, 4294901760
      %v5308 = vsub.f32 %v4851, %v5307
      %5309 = vmatpush1.msra.mxu0 %v5308
      %5310 = vmatprep.subr.mxu0 0.0
      %v5311 = vand.u32 %v4852, 4294901760
      %v5312 = vsub.f32 %v4852, %v5311
      %5313 = vmatpush1.msra.mxu0 %v5312
      %5314 = vmatprep.subr.mxu0 0.0
      %v5315 = vand.u32 %v4853, 4294901760
      %v5316 = vsub.f32 %v4853, %v5315
      %5317 = vmatpush1.msra.mxu0 %v5316
      %5318 = vmatprep.subr.mxu0 0.0
      %v5319 = vand.u32 %v4854, 4294901760
      %v5320 = vsub.f32 %v4854, %v5319
      %5321 = vmatpush1.msra.mxu0 %v5320
      %5322 = vmatprep.subr.mxu0 0.0
      %v5323 = vand.u32 %v4855, 4294901760
      %v5324 = vsub.f32 %v4855, %v5323
      %5325 = vmatpush1.msra.mxu0 %v5324
      %5326 = vmatprep.subr.mxu0 0.0
      %v5327 = vand.u32 %v4856, 4294901760
      %v5328 = vsub.f32 %v4856, %v5327
      %5329 = vmatpush1.msra.mxu0 %v5328
      %5330 = vmatprep.subr.mxu0 0.0
      %5331 = vmatpush1.msra.mxu0 0.0
      %5332 = vmatprep.subr.mxu0 0.0
      %5333 = vmatpush1.msra.mxu0 0.0
      %5334 = vmatprep.subr.mxu0 0.0
      %5335 = vmatpush1.msra.mxu0 0.0
      %5336 = vmatprep.subr.mxu0 0.0
      %5337 = vmatpush1.msra.mxu0 0.0
      %5338 = vmatprep.subr.mxu0 0.0
      %5339 = vmatpush1.msra.mxu0 0.0
      %5340 = vmatprep.subr.mxu0 0.0
      %5341 = vmatpush1.msra.mxu0 0.0
      %5342 = vmatprep.subr.mxu0 0.0
      %5343 = vmatpush1.msra.mxu0 0.0
      %5344 = vmatprep.subr.mxu0 0.0
      %5345 = vmatpush1.msra.mxu0 0.0
      %v5346 = vand.u32 %v4864, 4294901760
      %v5347 = vsub.f32 %v4864, %v5346
      %5348 = vmatprep.mubr.f32.mxu0 %v5347
      %v5349 = vand.u32 %v4829, 4294901760
      %v5350 = vsub.f32 %v4829, %v5349
      %5351 = vmatmul.mubr.f32.gmra.mrb[0].mxu0 %v5350
      %v5352 = vpop.f32.mrb[0].mxu0
      %v5353 = vadd.f32 %v5210, %v5352
      %v5354 = vpop.f32.mrb[0].mxu0
      %v5355 = vand.u32 %v4866, 4294901760
      %v5356 = vsub.f32 %v4866, %v5355
      %5357 = vmatprep.mubr.f32.mxu0 %v5356
      %v5358 = vand.u32 %v4830, 4294901760
      %v5359 = vsub.f32 %v4830, %v5358
      %5360 = vmatmul.mubr.f32.gmra.mrb[0].mxu0 %v5359
      %v5361 = vpop.f32.mrb[0].mxu0
      %v5362 = vadd.f32 %v5217, %v5361
      %v5363 = vpop.f32.mrb[0].mxu0
      %v5364 = vand.u32 %v4868, 4294901760
      %v5365 = vsub.f32 %v4868, %v5364
      %5366 = vmatprep.mubr.f32.mxu0 %v5365
      %v5367 = vand.u32 %v4831, 4294901760
      %v5368 = vsub.f32 %v4831, %v5367
      %5369 = vmatmul.mubr.f32.gmra.mrb[0].mxu0 %v5368
      %v5370 = vpop.f32.mrb[0].mxu0
      %v5371 = vadd.f32 %v5224, %v5370
      %v5372 = vpop.f32.mrb[0].mxu0
      %v5373 = vand.u32 %v4870, 4294901760
      %v5374 = vsub.f32 %v4870, %v5373
      %5375 = vmatprep.mubr.f32.mxu0 %v5374
      %v5376 = vand.u32 %v4832, 4294901760
      %v5377 = vsub.f32 %v4832, %v5376
      %5378 = vmatmul.mubr.f32.gmra.mrb[0].mxu0 %v5377
      %v5379 = vpop.f32.mrb[0].mxu0
      %v5380 = vadd.f32 %v5231, %v5379
      %v5381 = vpop.f32.mrb[0].mxu0
      %5382 = vdwg.mxu0
      %5383 = vmatprep.subr.mxu0 0.0
      %v5384 = vand.u32 %v4833, 4294901760
      %5385 = vmatpush1.msra.mxu0 %v5384
      %5386 = vmatprep.subr.mxu0 0.0
      %v5387 = vand.u32 %v4834, 4294901760
      %5388 = vmatpush1.msra.mxu0 %v5387
      %5389 = vmatprep.subr.mxu0 0.0
      %v5390 = vand.u32 %v4835, 4294901760
      %5391 = vmatpush1.msra.mxu0 %v5390
      %5392 = vmatprep.subr.mxu0 0.0
      %v5393 = vand.u32 %v4836, 4294901760
      %5394 = vmatpush1.msra.mxu0 %v5393
      %5395 = vmatprep.subr.mxu0 0.0
      %v5396 = vand.u32 %v4837, 4294901760
      %5397 = vmatpush1.msra.mxu0 %v5396
      %5398 = vmatprep.subr.mxu0 0.0
      %v5399 = vand.u32 %v4838, 4294901760
      %5400 = vmatpush1.msra.mxu0 %v5399
      %5401 = vmatprep.subr.mxu0 0.0
      %v5402 = vand.u32 %v4839, 4294901760
      %5403 = vmatpush1.msra.mxu0 %v5402
      %5404 = vmatprep.subr.mxu0 0.0
      %v5405 = vand.u32 %v4840, 4294901760
      %5406 = vmatpush1.msra.mxu0 %v5405
      %5407 = vmatprep.subr.mxu0 0.0
      %v5408 = vand.u32 %v4841, 4294901760
      %5409 = vmatpush1.msra.mxu0 %v5408
      %5410 = vmatprep.subr.mxu0 0.0
      %v5411 = vand.u32 %v4842, 4294901760
      %5412 = vmatpush1.msra.mxu0 %v5411
      %5413 = vmatprep.subr.mxu0 0.0
      %v5414 = vand.u32 %v4843, 4294901760
      %5415 = vmatpush1.msra.mxu0 %v5414
      %5416 = vmatprep.subr.mxu0 0.0
      %v5417 = vand.u32 %v4844, 4294901760
      %5418 = vmatpush1.msra.mxu0 %v5417
      %5419 = vmatprep.subr.mxu0 0.0
      %v5420 = vand.u32 %v4845, 4294901760
      %5421 = vmatpush1.msra.mxu0 %v5420
      %5422 = vmatprep.subr.mxu0 0.0
      %v5423 = vand.u32 %v4846, 4294901760
      %5424 = vmatpush1.msra.mxu0 %v5423
      %5425 = vmatprep.subr.mxu0 0.0
      %v5426 = vand.u32 %v4847, 4294901760
      %5427 = vmatpush1.msra.mxu0 %v5426
      %5428 = vmatprep.subr.mxu0 0.0
      %v5429 = vand.u32 %v4848, 4294901760
      %5430 = vmatpush1.msra.mxu0 %v5429
      %5431 = vmatprep.subr.mxu0 0.0
      %v5432 = vand.u32 %v4849, 4294901760
      %5433 = vmatpush1.msra.mxu0 %v5432
      %5434 = vmatprep.subr.mxu0 0.0
      %v5435 = vand.u32 %v4850, 4294901760
      %5436 = vmatpush1.msra.mxu0 %v5435
      %5437 = vmatprep.subr.mxu0 0.0
      %v5438 = vand.u32 %v4851, 4294901760
      %5439 = vmatpush1.msra.mxu0 %v5438
      %5440 = vmatprep.subr.mxu0 0.0
      %v5441 = vand.u32 %v4852, 4294901760
      %5442 = vmatpush1.msra.mxu0 %v5441
      %5443 = vmatprep.subr.mxu0 0.0
      %v5444 = vand.u32 %v4853, 4294901760
      %5445 = vmatpush1.msra.mxu0 %v5444
      %5446 = vmatprep.subr.mxu0 0.0
      %v5447 = vand.u32 %v4854, 4294901760
      %5448 = vmatpush1.msra.mxu0 %v5447
      %5449 = vmatprep.subr.mxu0 0.0
      %v5450 = vand.u32 %v4855, 4294901760
      %5451 = vmatpush1.msra.mxu0 %v5450
      %5452 = vmatprep.subr.mxu0 0.0
      %v5453 = vand.u32 %v4856, 4294901760
      %5454 = vmatpush1.msra.mxu0 %v5453
      %5455 = vmatprep.subr.mxu0 0.0
      %5456 = vmatpush1.msra.mxu0 0.0
      %5457 = vmatprep.subr.mxu0 0.0
      %5458 = vmatpush1.msra.mxu0 0.0
      %5459 = vmatprep.subr.mxu0 0.0
      %5460 = vmatpush1.msra.mxu0 0.0
      %5461 = vmatprep.subr.mxu0 0.0
      %5462 = vmatpush1.msra.mxu0 0.0
      %5463 = vmatprep.subr.mxu0 0.0
      %5464 = vmatpush1.msra.mxu0 0.0
      %5465 = vmatprep.subr.mxu0 0.0
      %5466 = vmatpush1.msra.mxu0 0.0
      %5467 = vmatprep.subr.mxu0 0.0
      %5468 = vmatpush1.msra.mxu0 0.0
      %5469 = vmatprep.subr.mxu0 0.0
      %5470 = vmatpush1.msra.mxu0 0.0
      %v5471 = vand.u32 %v4864, 4294901760
      %v5472 = vsub.f32 %v4864, %v5471
      %v5473 = vand.u32 %v5472, 4294901760
      %5474 = vmatprep.mubr.f32.mxu0 %v5473
      %v5475 = vand.u32 %v4829, 4294901760
      %v5476 = vsub.f32 %v4829, %v5475
      %v5477 = vand.u32 %v5476, 4294901760
      %5478 = vmatmul.mubr.f32.gmra.mrb[0].mxu0 %v5477
      %v5479 = vpop.f32.mrb[0].mxu0
      %v5480 = vadd.f32 %v5353, %v5479
      %v5481 = vpop.f32.mrb[0].mxu0
      %v5482 = vand.u32 %v4866, 4294901760
      %v5483 = vsub.f32 %v4866, %v5482
      %v5484 = vand.u32 %v5483, 4294901760
      %5485 = vmatprep.mubr.f32.mxu0 %v5484
      %v5486 = vand.u32 %v4830, 4294901760
      %v5487 = vsub.f32 %v4830, %v5486
      %v5488 = vand.u32 %v5487, 4294901760
      %5489 = vmatmul.mubr.f32.gmra.mrb[0].mxu0 %v5488
      %v5490 = vpop.f32.mrb[0].mxu0
      %v5491 = vadd.f32 %v5362, %v5490
      %v5492 = vpop.f32.mrb[0].mxu0
      %v5493 = vand.u32 %v4868, 4294901760
      %v5494 = vsub.f32 %v4868, %v5493
      %v5495 = vand.u32 %v5494, 4294901760
      %5496 = vmatprep.mubr.f32.mxu0 %v5495
      %v5497 = vand.u32 %v4831, 4294901760
      %v5498 = vsub.f32 %v4831, %v5497
      %v5499 = vand.u32 %v5498, 4294901760
      %5500 = vmatmul.mubr.f32.gmra.mrb[0].mxu0 %v5499
      %v5501 = vpop.f32.mrb[0].mxu0
      %v5502 = vadd.f32 %v5371, %v5501
      %v5503 = vpop.f32.mrb[0].mxu0
      %v5504 = vand.u32 %v4870, 4294901760
      %v5505 = vsub.f32 %v4870, %v5504
      %v5506 = vand.u32 %v5505, 4294901760
      %5507 = vmatprep.mubr.f32.mxu0 %v5506
      %v5508 = vand.u32 %v4832, 4294901760
      %v5509 = vsub.f32 %v4832, %v5508
      %v5510 = vand.u32 %v5509, 4294901760
      %5511 = vmatmul.mubr.f32.gmra.mrb[0].mxu0 %v5510
      %v5512 = vpop.f32.mrb[0].mxu0
      %v5513 = vadd.f32 %v5380, %v5512
      %v5514 = vpop.f32.mrb[0].mxu0
      %5515 = vdwg.mxu0
      %5516 = vmatprep.subr.mxu0 0.0
      %v5517 = vand.u32 %v4833, 4294901760
      %v5518 = vsub.f32 %v4833, %v5517
      %v5519 = vand.u32 %v5518, 4294901760
      %5520 = vmatpush1.msra.mxu0 %v5519
      %5521 = vmatprep.subr.mxu0 0.0
      %v5522 = vand.u32 %v4834, 4294901760
      %v5523 = vsub.f32 %v4834, %v5522
      %v5524 = vand.u32 %v5523, 4294901760
      %5525 = vmatpush1.msra.mxu0 %v5524
      %5526 = vmatprep.subr.mxu0 0.0
      %v5527 = vand.u32 %v4835, 4294901760
      %v5528 = vsub.f32 %v4835, %v5527
      %v5529 = vand.u32 %v5528, 4294901760
      %5530 = vmatpush1.msra.mxu0 %v5529
      %5531 = vmatprep.subr.mxu0 0.0
      %v5532 = vand.u32 %v4836, 4294901760
      %v5533 = vsub.f32 %v4836, %v5532
      %v5534 = vand.u32 %v5533, 4294901760
      %5535 = vmatpush1.msra.mxu0 %v5534
      %5536 = vmatprep.subr.mxu0 0.0
      %v5537 = vand.u32 %v4837, 4294901760
      %v5538 = vsub.f32 %v4837, %v5537
      %v5539 = vand.u32 %v5538, 4294901760
      %5540 = vmatpush1.msra.mxu0 %v5539
      %5541 = vmatprep.subr.mxu0 0.0
      %v5542 = vand.u32 %v4838, 4294901760
      %v5543 = vsub.f32 %v4838, %v5542
      %v5544 = vand.u32 %v5543, 4294901760
      %5545 = vmatpush1.msra.mxu0 %v5544
      %5546 = vmatprep.subr.mxu0 0.0
      %v5547 = vand.u32 %v4839, 4294901760
      %v5548 = vsub.f32 %v4839, %v5547
      %v5549 = vand.u32 %v5548, 4294901760
      %5550 = vmatpush1.msra.mxu0 %v5549
      %5551 = vmatprep.subr.mxu0 0.0
      %v5552 = vand.u32 %v4840, 4294901760
      %v5553 = vsub.f32 %v4840, %v5552
      %v5554 = vand.u32 %v5553, 4294901760
      %5555 = vmatpush1.msra.mxu0 %v5554
      %5556 = vmatprep.subr.mxu0 0.0
      %v5557 = vand.u32 %v4841, 4294901760
      %v5558 = vsub.f32 %v4841, %v5557
      %v5559 = vand.u32 %v5558, 4294901760
      %5560 = vmatpush1.msra.mxu0 %v5559
      %5561 = vmatprep.subr.mxu0 0.0
      %v5562 = vand.u32 %v4842, 4294901760
      %v5563 = vsub.f32 %v4842, %v5562
      %v5564 = vand.u32 %v5563, 4294901760
      %5565 = vmatpush1.msra.mxu0 %v5564
      %5566 = vmatprep.subr.mxu0 0.0
      %v5567 = vand.u32 %v4843, 4294901760
      %v5568 = vsub.f32 %v4843, %v5567
      %v5569 = vand.u32 %v5568, 4294901760
      %5570 = vmatpush1.msra.mxu0 %v5569
      %5571 = vmatprep.subr.mxu0 0.0
      %v5572 = vand.u32 %v4844, 4294901760
      %v5573 = vsub.f32 %v4844, %v5572
      %v5574 = vand.u32 %v5573, 4294901760
      %5575 = vmatpush1.msra.mxu0 %v5574
      %5576 = vmatprep.subr.mxu0 0.0
      %v5577 = vand.u32 %v4845, 4294901760
      %v5578 = vsub.f32 %v4845, %v5577
      %v5579 = vand.u32 %v5578, 4294901760
      %5580 = vmatpush1.msra.mxu0 %v5579
      %5581 = vmatprep.subr.mxu0 0.0
      %v5582 = vand.u32 %v4846, 4294901760
      %v5583 = vsub.f32 %v4846, %v5582
      %v5584 = vand.u32 %v5583, 4294901760
      %5585 = vmatpush1.msra.mxu0 %v5584
      %5586 = vmatprep.subr.mxu0 0.0
      %v5587 = vand.u32 %v4847, 4294901760
      %v5588 = vsub.f32 %v4847, %v5587
      %v5589 = vand.u32 %v5588, 4294901760
      %5590 = vmatpush1.msra.mxu0 %v5589
      %5591 = vmatprep.subr.mxu0 0.0
      %v5592 = vand.u32 %v4848, 4294901760
      %v5593 = vsub.f32 %v4848, %v5592
      %v5594 = vand.u32 %v5593, 4294901760
      %5595 = vmatpush1.msra.mxu0 %v5594
      %5596 = vmatprep.subr.mxu0 0.0
      %v5597 = vand.u32 %v4849, 4294901760
      %v5598 = vsub.f32 %v4849, %v5597
      %v5599 = vand.u32 %v5598, 4294901760
      %5600 = vmatpush1.msra.mxu0 %v5599
      %5601 = vmatprep.subr.mxu0 0.0
      %v5602 = vand.u32 %v4850, 4294901760
      %v5603 = vsub.f32 %v4850, %v5602
      %v5604 = vand.u32 %v5603, 4294901760
      %5605 = vmatpush1.msra.mxu0 %v5604
      %5606 = vmatprep.subr.mxu0 0.0
      %v5607 = vand.u32 %v4851, 4294901760
      %v5608 = vsub.f32 %v4851, %v5607
      %v5609 = vand.u32 %v5608, 4294901760
      %5610 = vmatpush1.msra.mxu0 %v5609
      %5611 = vmatprep.subr.mxu0 0.0
      %v5612 = vand.u32 %v4852, 4294901760
      %v5613 = vsub.f32 %v4852, %v5612
      %v5614 = vand.u32 %v5613, 4294901760
      %5615 = vmatpush1.msra.mxu0 %v5614
      %5616 = vmatprep.subr.mxu0 0.0
      %v5617 = vand.u32 %v4853, 4294901760
      %v5618 = vsub.f32 %v4853, %v5617
      %v5619 = vand.u32 %v5618, 4294901760
      %5620 = vmatpush1.msra.mxu0 %v5619
      %5621 = vmatprep.subr.mxu0 0.0
      %v5622 = vand.u32 %v4854, 4294901760
      %v5623 = vsub.f32 %v4854, %v5622
      %v5624 = vand.u32 %v5623, 4294901760
      %5625 = vmatpush1.msra.mxu0 %v5624
      %5626 = vmatprep.subr.mxu0 0.0
      %v5627 = vand.u32 %v4855, 4294901760
      %v5628 = vsub.f32 %v4855, %v5627
      %v5629 = vand.u32 %v5628, 4294901760
      %5630 = vmatpush1.msra.mxu0 %v5629
      %5631 = vmatprep.subr.mxu0 0.0
      %v5632 = vand.u32 %v4856, 4294901760
      %v5633 = vsub.f32 %v4856, %v5632
      %v5634 = vand.u32 %v5633, 4294901760
      %5635 = vmatpush1.msra.mxu0 %v5634
      %5636 = vmatprep.subr.mxu0 0.0
      %5637 = vmatpush1.msra.mxu0 0.0
      %5638 = vmatprep.subr.mxu0 0.0
      %5639 = vmatpush1.msra.mxu0 0.0
      %5640 = vmatprep.subr.mxu0 0.0
      %5641 = vmatpush1.msra.mxu0 0.0
      %5642 = vmatprep.subr.mxu0 0.0
      %5643 = vmatpush1.msra.mxu0 0.0
      %5644 = vmatprep.subr.mxu0 0.0
      %5645 = vmatpush1.msra.mxu0 0.0
      %5646 = vmatprep.subr.mxu0 0.0
      %5647 = vmatpush1.msra.mxu0 0.0
      %5648 = vmatprep.subr.mxu0 0.0
      %5649 = vmatpush1.msra.mxu0 0.0
      %5650 = vmatprep.subr.mxu0 0.0
      %5651 = vmatpush1.msra.mxu0 0.0
      %v5652 = vand.u32 %v4864, 4294901760
      %5653 = vmatprep.mubr.f32.mxu0 %v5652
      %v5654 = vand.u32 %v4829, 4294901760
      %5655 = vmatmul.mubr.f32.gmra.mrb[0].mxu0 %v5654
      %v5656 = vpop.f32.mrb[0].mxu0
      %v5657 = vadd.f32 %v5480, %v5656
      %v5658 = vpop.f32.mrb[0].mxu0
      %v5659 = vand.u32 %v4866, 4294901760
      %5660 = vmatprep.mubr.f32.mxu0 %v5659
      %v5661 = vand.u32 %v4830, 4294901760
      %5662 = vmatmul.mubr.f32.gmra.mrb[0].mxu0 %v5661
      %v5663 = vpop.f32.mrb[0].mxu0
      %v5664 = vadd.f32 %v5491, %v5663
      %v5665 = vpop.f32.mrb[0].mxu0
      %v5666 = vand.u32 %v4868, 4294901760
      %5667 = vmatprep.mubr.f32.mxu0 %v5666
      %v5668 = vand.u32 %v4831, 4294901760
      %5669 = vmatmul.mubr.f32.gmra.mrb[0].mxu0 %v5668
      %v5670 = vpop.f32.mrb[0].mxu0
      %v5671 = vadd.f32 %v5502, %v5670
      %v5672 = vpop.f32.mrb[0].mxu0
      %v5673 = vand.u32 %v4870, 4294901760
      %5674 = vmatprep.mubr.f32.mxu0 %v5673
      %v5675 = vand.u32 %v4832, 4294901760
      %5676 = vmatmul.mubr.f32.gmra.mrb[0].mxu0 %v5675
      %v5677 = vpop.f32.mrb[0].mxu0
      %v5678 = vadd.f32 %v5513, %v5677
      %v5679 = vpop.f32.mrb[0].mxu0
      %5680 = vdwg.mxu0
      %5681 = vmatprep.subr.mxu0 0.0
      %v5682 = vand.u32 %v4833, 4294901760
      %5683 = vmatpush1.msra.mxu0 %v5682
      %5684 = vmatprep.subr.mxu0 0.0
      %v5685 = vand.u32 %v4834, 4294901760
      %5686 = vmatpush1.msra.mxu0 %v5685
      %5687 = vmatprep.subr.mxu0 0.0
      %v5688 = vand.u32 %v4835, 4294901760
      %5689 = vmatpush1.msra.mxu0 %v5688
      %5690 = vmatprep.subr.mxu0 0.0
      %v5691 = vand.u32 %v4836, 4294901760
      %5692 = vmatpush1.msra.mxu0 %v5691
      %5693 = vmatprep.subr.mxu0 0.0
      %v5694 = vand.u32 %v4837, 4294901760
      %5695 = vmatpush1.msra.mxu0 %v5694
      %5696 = vmatprep.subr.mxu0 0.0
      %v5697 = vand.u32 %v4838, 4294901760
      %5698 = vmatpush1.msra.mxu0 %v5697
      %5699 = vmatprep.subr.mxu0 0.0
      %v5700 = vand.u32 %v4839, 4294901760
      %5701 = vmatpush1.msra.mxu0 %v5700
      %5702 = vmatprep.subr.mxu0 0.0
      %v5703 = vand.u32 %v4840, 4294901760
      %5704 = vmatpush1.msra.mxu0 %v5703
      %5705 = vmatprep.subr.mxu0 0.0
      %v5706 = vand.u32 %v4841, 4294901760
      %5707 = vmatpush1.msra.mxu0 %v5706
      %5708 = vmatprep.subr.mxu0 0.0
      %v5709 = vand.u32 %v4842, 4294901760
      %5710 = vmatpush1.msra.mxu0 %v5709
      %5711 = vmatprep.subr.mxu0 0.0
      %v5712 = vand.u32 %v4843, 4294901760
      %5713 = vmatpush1.msra.mxu0 %v5712
      %5714 = vmatprep.subr.mxu0 0.0
      %v5715 = vand.u32 %v4844, 4294901760
      %5716 = vmatpush1.msra.mxu0 %v5715
      %5717 = vmatprep.subr.mxu0 0.0
      %v5718 = vand.u32 %v4845, 4294901760
      %5719 = vmatpush1.msra.mxu0 %v5718
      %5720 = vmatprep.subr.mxu0 0.0
      %v5721 = vand.u32 %v4846, 4294901760
      %5722 = vmatpush1.msra.mxu0 %v5721
      %5723 = vmatprep.subr.mxu0 0.0
      %v5724 = vand.u32 %v4847, 4294901760
      %5725 = vmatpush1.msra.mxu0 %v5724
      %5726 = vmatprep.subr.mxu0 0.0
      %v5727 = vand.u32 %v4848, 4294901760
      %5728 = vmatpush1.msra.mxu0 %v5727
      %5729 = vmatprep.subr.mxu0 0.0
      %v5730 = vand.u32 %v4849, 4294901760
      %5731 = vmatpush1.msra.mxu0 %v5730
      %5732 = vmatprep.subr.mxu0 0.0
      %v5733 = vand.u32 %v4850, 4294901760
      %5734 = vmatpush1.msra.mxu0 %v5733
      %5735 = vmatprep.subr.mxu0 0.0
      %v5736 = vand.u32 %v4851, 4294901760
      %5737 = vmatpush1.msra.mxu0 %v5736
      %5738 = vmatprep.subr.mxu0 0.0
      %v5739 = vand.u32 %v4852, 4294901760
      %5740 = vmatpush1.msra.mxu0 %v5739
      %5741 = vmatprep.subr.mxu0 0.0
      %v5742 = vand.u32 %v4853, 4294901760
      %5743 = vmatpush1.msra.mxu0 %v5742
      %5744 = vmatprep.subr.mxu0 0.0
      %v5745 = vand.u32 %v4854, 4294901760
      %5746 = vmatpush1.msra.mxu0 %v5745
      %5747 = vmatprep.subr.mxu0 0.0
      %v5748 = vand.u32 %v4855, 4294901760
      %5749 = vmatpush1.msra.mxu0 %v5748
      %5750 = vmatprep.subr.mxu0 0.0
      %v5751 = vand.u32 %v4856, 4294901760
      %5752 = vmatpush1.msra.mxu0 %v5751
      %5753 = vmatprep.subr.mxu0 0.0
      %5754 = vmatpush1.msra.mxu0 0.0
      %5755 = vmatprep.subr.mxu0 0.0
      %5756 = vmatpush1.msra.mxu0 0.0
      %5757 = vmatprep.subr.mxu0 0.0
      %5758 = vmatpush1.msra.mxu0 0.0
      %5759 = vmatprep.subr.mxu0 0.0
      %5760 = vmatpush1.msra.mxu0 0.0
      %5761 = vmatprep.subr.mxu0 0.0
      %5762 = vmatpush1.msra.mxu0 0.0
      %5763 = vmatprep.subr.mxu0 0.0
      %5764 = vmatpush1.msra.mxu0 0.0
      %5765 = vmatprep.subr.mxu0 0.0
      %5766 = vmatpush1.msra.mxu0 0.0
      %5767 = vmatprep.subr.mxu0 0.0
      %5768 = vmatpush1.msra.mxu0 0.0
      %v5769 = vand.u32 %v4864, 4294901760
      %5770 = vmatprep.mubr.f32.mxu0 %v5769
      %v5771 = vand.u32 %v4829, 4294901760
      %5772 = vmatmul.mubr.f32.gmra.mrb[0].mxu0 %v5771
      %v5773 = vpop.f32.mrb[0].mxu0
      %v5774 = vadd.f32 %v5657, %v5773
      %v5775 = vpop.f32.mrb[0].mxu0
      %v5776 = vand.u32 %v4866, 4294901760
      %5777 = vmatprep.mubr.f32.mxu0 %v5776
      %v5778 = vand.u32 %v4830, 4294901760
      %5779 = vmatmul.mubr.f32.gmra.mrb[0].mxu0 %v5778
      %v5780 = vpop.f32.mrb[0].mxu0
      %v5781 = vadd.f32 %v5664, %v5780
      %v5782 = vpop.f32.mrb[0].mxu0
      %v5783 = vand.u32 %v4868, 4294901760
      %5784 = vmatprep.mubr.f32.mxu0 %v5783
      %v5785 = vand.u32 %v4831, 4294901760
      %5786 = vmatmul.mubr.f32.gmra.mrb[0].mxu0 %v5785
      %v5787 = vpop.f32.mrb[0].mxu0
      %v5788 = vadd.f32 %v5671, %v5787
      %v5789 = vpop.f32.mrb[0].mxu0
      %v5790 = vand.u32 %v4870, 4294901760
      %5791 = vmatprep.mubr.f32.mxu0 %v5790
      %v5792 = vand.u32 %v4832, 4294901760
      %5793 = vmatmul.mubr.f32.gmra.mrb[0].mxu0 %v5792
      %v5794 = vpop.f32.mrb[0].mxu0
      %v5795 = vadd.f32 %v5678, %v5794
      %v5796 = vpop.f32.mrb[0].mxu0
      %5797 = vdwg.mxu0
      %v5798 = vmax.f32 %v5774, 0.0
      %v5799 = vmax.f32 %v5781, 0.0
      %v5800 = vmax.f32 %v5788, 0.0
      %v5801 = vmax.f32 %v5795, 0.0
      %v5806 = vrot.slane %v5798, 7
      %v5807 = vrot.slane %v5799, 7
      %v5808 = vsel %vm361, %v5806, %v5807
      %v5809 = vrot.slane %v5800, 7
      %v5810 = vsel %vm361, %v5807, %v5809
      %v5811 = vrot.slane %v5801, 7
      %v5812 = vsel %vm361, %v5809, %v5811
      %v5817 = vsel %vm361, 0.0, %v5806
      %v5819 = vrot.slane %v5817, 1
      %v5820 = vrot.slane %v5808, 1
      %v5821 = vsel %vm410, %v5819, %v5820
      %v5822 = vrot.slane %v5810, 1
      %v5823 = vsel %vm410, %v5820, %v5822
      %v5824 = vrot.slane %v5812, 1
      %v5825 = vsel %vm410, %v5822, %v5824
      %v5830 = vmax.f32 %v5817, %v5821
      %v5831 = vmax.f32 %v5808, %v5823
      %v5832 = vmax.f32 %v5810, %v5825
      %v5833 = vmax.f32 %v5812, %v5824
      %vm5834 = vcmask 236544
      %v5835 = vsel %vm5834, %v2028, 0
      %v5837 = vsel %vm5834, %v2029, 0
      %v5840 = vsel %vm561, %v5833, 0
      %5842 = vmatprep.subr.mxu0 0.0
      %v5843 = vand.u32 %v5830, 4294901760
      %5844 = vmatpush1.msra.mxu0 %v5843
      %5845 = vmatprep.subr.mxu0 0.0
      %v5846 = vand.u32 %v5831, 4294901760
      %5847 = vmatpush1.msra.mxu0 %v5846
      %5848 = vmatprep.subr.mxu0 0.0
      %v5849 = vand.u32 %v5832, 4294901760
      %5850 = vmatpush1.msra.mxu0 %v5849
      %5851 = vmatprep.subr.mxu0 0.0
      %v5852 = vand.u32 %v5840, 4294901760
      %5853 = vmatpush1.msra.mxu0 %v5852
      %5854 = vmatprep.subr.mxu0 0.0
      %5855 = vmatpush1.msra.mxu0 0.0
      %5856 = vmatprep.subr.mxu0 0.0
      %5857 = vmatpush1.msra.mxu0 0.0
      %5858 = vmatprep.subr.mxu0 0.0
      %5859 = vmatpush1.msra.mxu0 0.0
      %5860 = vmatprep.subr.mxu0 0.0
      %5861 = vmatpush1.msra.mxu0 0.0
      %5862 = vmatprep.subr.mxu0 0.0
      %5863 = vmatpush1.msra.mxu0 0.0
      %5864 = vmatprep.subr.mxu0 0.0
      %5865 = vmatpush1.msra.mxu0 0.0
      %5866 = vmatprep.subr.mxu0 0.0
      %5867 = vmatpush1.msra.mxu0 0.0
      %5868 = vmatprep.subr.mxu0 0.0
      %5869 = vmatpush1.msra.mxu0 0.0
      %5870 = vmatprep.subr.mxu0 0.0
      %5871 = vmatpush1.msra.mxu0 0.0
      %5872 = vmatprep.subr.mxu0 0.0
      %5873 = vmatpush1.msra.mxu0 0.0
      %5874 = vmatprep.subr.mxu0 0.0
      %5875 = vmatpush1.msra.mxu0 0.0
      %5876 = vmatprep.subr.mxu0 0.0
      %5877 = vmatpush1.msra.mxu0 0.0
      %5878 = vmatprep.subr.mxu0 0.0
      %5879 = vmatpush1.msra.mxu0 0.0
      %5880 = vmatprep.subr.mxu0 0.0
      %5881 = vmatpush1.msra.mxu0 0.0
      %5882 = vmatprep.subr.mxu0 0.0
      %5883 = vmatpush1.msra.mxu0 0.0
      %5884 = vmatprep.subr.mxu0 0.0
      %5885 = vmatpush1.msra.mxu0 0.0
      %5886 = vmatprep.subr.mxu0 0.0
      %5887 = vmatpush1.msra.mxu0 0.0
      %5888 = vmatprep.subr.mxu0 0.0
      %5889 = vmatpush1.msra.mxu0 0.0
      %5890 = vmatprep.subr.mxu0 0.0
      %5891 = vmatpush1.msra.mxu0 0.0
      %5892 = vmatprep.subr.mxu0 0.0
      %5893 = vmatpush1.msra.mxu0 0.0
      %5894 = vmatprep.subr.mxu0 0.0
      %5895 = vmatpush1.msra.mxu0 0.0
      %5896 = vmatprep.subr.mxu0 0.0
      %5897 = vmatpush1.msra.mxu0 0.0
      %5898 = vmatprep.subr.mxu0 0.0
      %5899 = vmatpush1.msra.mxu0 0.0
      %5900 = vmatprep.subr.mxu0 0.0
      %5901 = vmatpush1.msra.mxu0 0.0
      %5902 = vmatprep.subr.mxu0 0.0
      %5903 = vmatpush1.msra.mxu0 0.0
      %5904 = vmatprep.subr.mxu0 0.0
      %5905 = vmatpush1.msra.mxu0 0.0
      %5906 = vmatprep.subr.mxu0 0.0
      %5907 = vmatpush1.msra.mxu0 0.0
      %5908 = vmatprep.subr.mxu0 0.0
      %5909 = vmatpush1.msra.mxu0 0.0
      %5910 = vmatprep.mubr.f32.mxu0 0.0
      %v5911 = vand.u32 %v5835, 4294901760
      %v5912 = vsub.f32 %v5835, %v5911
      %v5913 = vand.u32 %v5912, 4294901760
      %v5914 = vsub.f32 %v5912, %v5913
      %v5915 = vand.u32 %v5914, 4294901760
      %5916 = vmatmul.mubr.f32.gmra.mrb[0].mxu0 %v5915
      %v5917 = vpop.f32.mrb[0].mxu0
      %v5918 = vadd.f32 0.0, %v5917
      %v5919 = vpop.f32.mrb[0].mxu0
      %5920 = vmatprep.mubr.f32.mxu0 0.0
      %v5921 = vand.u32 %v5837, 4294901760
      %v5922 = vsub.f32 %v5837, %v5921
      %v5923 = vand.u32 %v5922, 4294901760
      %v5924 = vsub.f32 %v5922, %v5923
      %v5925 = vand.u32 %v5924, 4294901760
      %5926 = vmatmul.mubr.f32.gmra.mrb[0].mxu0 %v5925
      %v5927 = vpop.f32.mrb[0].mxu0
      %v5928 = vadd.f32 0.0, %v5927
      %v5929 = vpop.f32.mrb[0].mxu0
      %5930 = vdwg.mxu0
      %5931 = vmatprep.subr.mxu0 0.0
      %v5932 = vand.u32 %v5830, 4294901760
      %v5933 = vsub.f32 %v5830, %v5932
      %v5934 = vand.u32 %v5933, 4294901760
      %v5935 = vsub.f32 %v5933, %v5934
      %v5936 = vand.u32 %v5935, 4294901760
      %5937 = vmatpush1.msra.mxu0 %v5936
      %5938 = vmatprep.subr.mxu0 0.0
      %v5939 = vand.u32 %v5831, 4294901760
      %v5940 = vsub.f32 %v5831, %v5939
      %v5941 = vand.u32 %v5940, 4294901760
      %v5942 = vsub.f32 %v5940, %v5941
      %v5943 = vand.u32 %v5942, 4294901760
      %5944 = vmatpush1.msra.mxu0 %v5943
      %5945 = vmatprep.subr.mxu0 0.0
      %v5946 = vand.u32 %v5832, 4294901760
      %v5947 = vsub.f32 %v5832, %v5946
      %v5948 = vand.u32 %v5947, 4294901760
      %v5949 = vsub.f32 %v5947, %v5948
      %v5950 = vand.u32 %v5949, 4294901760
      %5951 = vmatpush1.msra.mxu0 %v5950
      %5952 = vmatprep.subr.mxu0 0.0
      %v5953 = vand.u32 %v5840, 4294901760
      %v5954 = vsub.f32 %v5840, %v5953
      %v5955 = vand.u32 %v5954, 4294901760
      %v5956 = vsub.f32 %v5954, %v5955
      %v5957 = vand.u32 %v5956, 4294901760
      %5958 = vmatpush1.msra.mxu0 %v5957
      %5959 = vmatprep.subr.mxu0 0.0
      %5960 = vmatpush1.msra.mxu0 0.0
      %5961 = vmatprep.subr.mxu0 0.0
      %5962 = vmatpush1.msra.mxu0 0.0
      %5963 = vmatprep.subr.mxu0 0.0
      %5964 = vmatpush1.msra.mxu0 0.0
      %5965 = vmatprep.subr.mxu0 0.0
      %5966 = vmatpush1.msra.mxu0 0.0
      %5967 = vmatprep.subr.mxu0 0.0
      %5968 = vmatpush1.msra.mxu0 0.0
      %5969 = vmatprep.subr.mxu0 0.0
      %5970 = vmatpush1.msra.mxu0 0.0
      %5971 = vmatprep.subr.mxu0 0.0
      %5972 = vmatpush1.msra.mxu0 0.0
      %5973 = vmatprep.subr.mxu0 0.0
      %5974 = vmatpush1.msra.mxu0 0.0
      %5975 = vmatprep.subr.mxu0 0.0
      %5976 = vmatpush1.msra.mxu0 0.0
      %5977 = vmatprep.subr.mxu0 0.0
      %5978 = vmatpush1.msra.mxu0 0.0
      %5979 = vmatprep.subr.mxu0 0.0
      %5980 = vmatpush1.msra.mxu0 0.0
      %5981 = vmatprep.subr.mxu0 0.0
      %5982 = vmatpush1.msra.mxu0 0.0
      %5983 = vmatprep.subr.mxu0 0.0
      %5984 = vmatpush1.msra.mxu0 0.0
      %5985 = vmatprep.subr.mxu0 0.0
      %5986 = vmatpush1.msra.mxu0 0.0
      %5987 = vmatprep.subr.mxu0 0.0
      %5988 = vmatpush1.msra.mxu0 0.0
      %5989 = vmatprep.subr.mxu0 0.0
      %5990 = vmatpush1.msra.mxu0 0.0
      %5991 = vmatprep.subr.mxu0 0.0
      %5992 = vmatpush1.msra.mxu0 0.0
      %5993 = vmatprep.subr.mxu0 0.0
      %5994 = vmatpush1.msra.mxu0 0.0
      %5995 = vmatprep.subr.mxu0 0.0
      %5996 = vmatpush1.msra.mxu0 0.0
      %5997 = vmatprep.subr.mxu0 0.0
      %5998 = vmatpush1.msra.mxu0 0.0
      %5999 = vmatprep.subr.mxu0 0.0
      %6000 = vmatpush1.msra.mxu0 0.0
      %6001 = vmatprep.subr.mxu0 0.0
      %6002 = vmatpush1.msra.mxu0 0.0
      %6003 = vmatprep.subr.mxu0 0.0
      %6004 = vmatpush1.msra.mxu0 0.0
      %6005 = vmatprep.subr.mxu0 0.0
      %6006 = vmatpush1.msra.mxu0 0.0
      %6007 = vmatprep.subr.mxu0 0.0
      %6008 = vmatpush1.msra.mxu0 0.0
      %6009 = vmatprep.subr.mxu0 0.0
      %6010 = vmatpush1.msra.mxu0 0.0
      %6011 = vmatprep.subr.mxu0 0.0
      %6012 = vmatpush1.msra.mxu0 0.0
      %6013 = vmatprep.subr.mxu0 0.0
      %6014 = vmatpush1.msra.mxu0 0.0
      %6015 = vmatprep.mubr.f32.mxu0 0.0
      %v6016 = vand.u32 %v5835, 4294901760
      %6017 = vmatmul.mubr.f32.gmra.mrb[0].mxu0 %v6016
      %v6018 = vpop.f32.mrb[0].mxu0
      %v6019 = vadd.f32 %v5918, %v6018
      %v6020 = vpop.f32.mrb[0].mxu0
      %6021 = vmatprep.mubr.f32.mxu0 0.0
      %v6022 = vand.u32 %v5837, 4294901760
      %6023 = vmatmul.mubr.f32.gmra.mrb[0].mxu0 %v6022
      %v6024 = vpop.f32.mrb[0].mxu0
      %v6025 = vadd.f32 %v5928, %v6024
      %v6026 = vpop.f32.mrb[0].mxu0
      %6027 = vdwg.mxu0
      %6028 = vmatprep.subr.mxu0 0.0
      %v6029 = vand.u32 %v5830, 4294901760
      %v6030 = vsub.f32 %v5830, %v6029
      %6031 = vmatpush1.msra.mxu0 %v6030
      %6032 = vmatprep.subr.mxu0 0.0
      %v6033 = vand.u32 %v5831, 4294901760
      %v6034 = vsub.f32 %v5831, %v6033
      %6035 = vmatpush1.msra.mxu0 %v6034
      %6036 = vmatprep.subr.mxu0 0.0
      %v6037 = vand.u32 %v5832, 4294901760
      %v6038 = vsub.f32 %v5832, %v6037
      %6039 = vmatpush1.msra.mxu0 %v6038
      %6040 = vmatprep.subr.mxu0 0.0
      %v6041 = vand.u32 %v5840, 4294901760
      %v6042 = vsub.f32 %v5840, %v6041
      %6043 = vmatpush1.msra.mxu0 %v6042
      %6044 = vmatprep.subr.mxu0 0.0
      %6045 = vmatpush1.msra.mxu0 0.0
      %6046 = vmatprep.subr.mxu0 0.0
      %6047 = vmatpush1.msra.mxu0 0.0
      %6048 = vmatprep.subr.mxu0 0.0
      %6049 = vmatpush1.msra.mxu0 0.0
      %6050 = vmatprep.subr.mxu0 0.0
      %6051 = vmatpush1.msra.mxu0 0.0
      %6052 = vmatprep.subr.mxu0 0.0
      %6053 = vmatpush1.msra.mxu0 0.0
      %6054 = vmatprep.subr.mxu0 0.0
      %6055 = vmatpush1.msra.mxu0 0.0
      %6056 = vmatprep.subr.mxu0 0.0
      %6057 = vmatpush1.msra.mxu0 0.0
      %6058 = vmatprep.subr.mxu0 0.0
      %6059 = vmatpush1.msra.mxu0 0.0
      %6060 = vmatprep.subr.mxu0 0.0
      %6061 = vmatpush1.msra.mxu0 0.0
      %6062 = vmatprep.subr.mxu0 0.0
      %6063 = vmatpush1.msra.mxu0 0.0
      %6064 = vmatprep.subr.mxu0 0.0
      %6065 = vmatpush1.msra.mxu0 0.0
      %6066 = vmatprep.subr.mxu0 0.0
      %6067 = vmatpush1.msra.mxu0 0.0
      %6068 = vmatprep.subr.mxu0 0.0
      %6069 = vmatpush1.msra.mxu0 0.0
      %6070 = vmatprep.subr.mxu0 0.0
      %6071 = vmatpush1.msra.mxu0 0.0
      %6072 = vmatprep.subr.mxu0 0.0
      %6073 = vmatpush1.msra.mxu0 0.0
      %6074 = vmatprep.subr.mxu0 0.0
      %6075 = vmatpush1.msra.mxu0 0.0
      %6076 = vmatprep.subr.mxu0 0.0
      %6077 = vmatpush1.msra.mxu0 0.0
      %6078 = vmatprep.subr.mxu0 0.0
      %6079 = vmatpush1.msra.mxu0 0.0
      %6080 = vmatprep.subr.mxu0 0.0
      %6081 = vmatpush1.msra.mxu0 0.0
      %6082 = vmatprep.subr.mxu0 0.0
      %6083 = vmatpush1.msra.mxu0 0.0
      %6084 = vmatprep.subr.mxu0 0.0
      %6085 = vmatpush1.msra.mxu0 0.0
      %6086 = vmatprep.subr.mxu0 0.0
      %6087 = vmatpush1.msra.mxu0 0.0
      %6088 = vmatprep.subr.mxu0 0.0
      %6089 = vmatpush1.msra.mxu0 0.0
      %6090 = vmatprep.subr.mxu0 0.0
      %6091 = vmatpush1.msra.mxu0 0.0
      %6092 = vmatprep.subr.mxu0 0.0
      %6093 = vmatpush1.msra.mxu0 0.0
      %6094 = vmatprep.subr.mxu0 0.0
      %6095 = vmatpush1.msra.mxu0 0.0
      %6096 = vmatprep.subr.mxu0 0.0
      %6097 = vmatpush1.msra.mxu0 0.0
      %6098 = vmatprep.subr.mxu0 0.0
      %6099 = vmatpush1.msra.mxu0 0.0
      %6100 = vmatprep.mubr.f32.mxu0 0.0
      %v6101 = vand.u32 %v5835, 4294901760
      %v6102 = vsub.f32 %v5835, %v6101
      %6103 = vmatmul.mubr.f32.gmra.mrb[0].mxu0 %v6102
      %v6104 = vpop.f32.mrb[0].mxu0
      %v6105 = vadd.f32 %v6019, %v6104
      %v6106 = vpop.f32.mrb[0].mxu0
      %6107 = vmatprep.mubr.f32.mxu0 0.0
      %v6108 = vand.u32 %v5837, 4294901760
      %v6109 = vsub.f32 %v5837, %v6108
      %6110 = vmatmul.mubr.f32.gmra.mrb[0].mxu0 %v6109
      %v6111 = vpop.f32.mrb[0].mxu0
      %v6112 = vadd.f32 %v6025, %v6111
      %v6113 = vpop.f32.mrb[0].mxu0
      %6114 = vdwg.mxu0
      %6115 = vmatprep.subr.mxu0 0.0
      %v6116 = vand.u32 %v5830, 4294901760
      %6117 = vmatpush1.msra.mxu0 %v6116
      %6118 = vmatprep.subr.mxu0 0.0
      %v6119 = vand.u32 %v5831, 4294901760
      %6120 = vmatpush1.msra.mxu0 %v6119
      %6121 = vmatprep.subr.mxu0 0.0
      %v6122 = vand.u32 %v5832, 4294901760
      %6123 = vmatpush1.msra.mxu0 %v6122
      %6124 = vmatprep.subr.mxu0 0.0
      %v6125 = vand.u32 %v5840, 4294901760
      %6126 = vmatpush1.msra.mxu0 %v6125
      %6127 = vmatprep.subr.mxu0 0.0
      %6128 = vmatpush1.msra.mxu0 0.0
      %6129 = vmatprep.subr.mxu0 0.0
      %6130 = vmatpush1.msra.mxu0 0.0
      %6131 = vmatprep.subr.mxu0 0.0
      %6132 = vmatpush1.msra.mxu0 0.0
      %6133 = vmatprep.subr.mxu0 0.0
      %6134 = vmatpush1.msra.mxu0 0.0
      %6135 = vmatprep.subr.mxu0 0.0
      %6136 = vmatpush1.msra.mxu0 0.0
      %6137 = vmatprep.subr.mxu0 0.0
      %6138 = vmatpush1.msra.mxu0 0.0
      %6139 = vmatprep.subr.mxu0 0.0
      %6140 = vmatpush1.msra.mxu0 0.0
      %6141 = vmatprep.subr.mxu0 0.0
      %6142 = vmatpush1.msra.mxu0 0.0
      %6143 = vmatprep.subr.mxu0 0.0
      %6144 = vmatpush1.msra.mxu0 0.0
      %6145 = vmatprep.subr.mxu0 0.0
      %6146 = vmatpush1.msra.mxu0 0.0
      %6147 = vmatprep.subr.mxu0 0.0
      %6148 = vmatpush1.msra.mxu0 0.0
      %6149 = vmatprep.subr.mxu0 0.0
      %6150 = vmatpush1.msra.mxu0 0.0
      %6151 = vmatprep.subr.mxu0 0.0
      %6152 = vmatpush1.msra.mxu0 0.0
      %6153 = vmatprep.subr.mxu0 0.0
      %6154 = vmatpush1.msra.mxu0 0.0
      %6155 = vmatprep.subr.mxu0 0.0
      %6156 = vmatpush1.msra.mxu0 0.0
      %6157 = vmatprep.subr.mxu0 0.0
      %6158 = vmatpush1.msra.mxu0 0.0
      %6159 = vmatprep.subr.mxu0 0.0
      %6160 = vmatpush1.msra.mxu0 0.0
      %6161 = vmatprep.subr.mxu0 0.0
      %6162 = vmatpush1.msra.mxu0 0.0
      %6163 = vmatprep.subr.mxu0 0.0
      %6164 = vmatpush1.msra.mxu0 0.0
      %6165 = vmatprep.subr.mxu0 0.0
      %6166 = vmatpush1.msra.mxu0 0.0
      %6167 = vmatprep.subr.mxu0 0.0
      %6168 = vmatpush1.msra.mxu0 0.0
      %6169 = vmatprep.subr.mxu0 0.0
      %6170 = vmatpush1.msra.mxu0 0.0
      %6171 = vmatprep.subr.mxu0 0.0
      %6172 = vmatpush1.msra.mxu0 0.0
      %6173 = vmatprep.subr.mxu0 0.0
      %6174 = vmatpush1.msra.mxu0 0.0
      %6175 = vmatprep.subr.mxu0 0.0
      %6176 = vmatpush1.msra.mxu0 0.0
      %6177 = vmatprep.subr.mxu0 0.0
      %6178 = vmatpush1.msra.mxu0 0.0
      %6179 = vmatprep.subr.mxu0 0.0
      %6180 = vmatpush1.msra.mxu0 0.0
      %6181 = vmatprep.subr.mxu0 0.0
      %6182 = vmatpush1.msra.mxu0 0.0
      %6183 = vmatprep.mubr.f32.mxu0 0.0
      %v6184 = vand.u32 %v5835, 4294901760
      %v6185 = vsub.f32 %v5835, %v6184
      %v6186 = vand.u32 %v6185, 4294901760
      %6187 = vmatmul.mubr.f32.gmra.mrb[0].mxu0 %v6186
      %v6188 = vpop.f32.mrb[0].mxu0
      %v6189 = vadd.f32 %v6105, %v6188
      %v6190 = vpop.f32.mrb[0].mxu0
      %6191 = vmatprep.mubr.f32.mxu0 0.0
      %v6192 = vand.u32 %v5837, 4294901760
      %v6193 = vsub.f32 %v5837, %v6192
      %v6194 = vand.u32 %v6193, 4294901760
      %6195 = vmatmul.mubr.f32.gmra.mrb[0].mxu0 %v6194
      %v6196 = vpop.f32.mrb[0].mxu0
      %v6197 = vadd.f32 %v6112, %v6196
      %v6198 = vpop.f32.mrb[0].mxu0
      %6199 = vdwg.mxu0
      %6200 = vmatprep.subr.mxu0 0.0
      %v6201 = vand.u32 %v5830, 4294901760
      %v6202 = vsub.f32 %v5830, %v6201
      %v6203 = vand.u32 %v6202, 4294901760
      %6204 = vmatpush1.msra.mxu0 %v6203
      %6205 = vmatprep.subr.mxu0 0.0
      %v6206 = vand.u32 %v5831, 4294901760
      %v6207 = vsub.f32 %v5831, %v6206
      %v6208 = vand.u32 %v6207, 4294901760
      %6209 = vmatpush1.msra.mxu0 %v6208
      %6210 = vmatprep.subr.mxu0 0.0
      %v6211 = vand.u32 %v5832, 4294901760
      %v6212 = vsub.f32 %v5832, %v6211
      %v6213 = vand.u32 %v6212, 4294901760
      %6214 = vmatpush1.msra.mxu0 %v6213
      %6215 = vmatprep.subr.mxu0 0.0
      %v6216 = vand.u32 %v5840, 4294901760
      %v6217 = vsub.f32 %v5840, %v6216
      %v6218 = vand.u32 %v6217, 4294901760
      %6219 = vmatpush1.msra.mxu0 %v6218
      %6220 = vmatprep.subr.mxu0 0.0
      %6221 = vmatpush1.msra.mxu0 0.0
      %6222 = vmatprep.subr.mxu0 0.0
      %6223 = vmatpush1.msra.mxu0 0.0
      %6224 = vmatprep.subr.mxu0 0.0
      %6225 = vmatpush1.msra.mxu0 0.0
      %6226 = vmatprep.subr.mxu0 0.0
      %6227 = vmatpush1.msra.mxu0 0.0
      %6228 = vmatprep.subr.mxu0 0.0
      %6229 = vmatpush1.msra.mxu0 0.0
      %6230 = vmatprep.subr.mxu0 0.0
      %6231 = vmatpush1.msra.mxu0 0.0
      %6232 = vmatprep.subr.mxu0 0.0
      %6233 = vmatpush1.msra.mxu0 0.0
      %6234 = vmatprep.subr.mxu0 0.0
      %6235 = vmatpush1.msra.mxu0 0.0
      %6236 = vmatprep.subr.mxu0 0.0
      %6237 = vmatpush1.msra.mxu0 0.0
      %6238 = vmatprep.subr.mxu0 0.0
      %6239 = vmatpush1.msra.mxu0 0.0
      %6240 = vmatprep.subr.mxu0 0.0
      %6241 = vmatpush1.msra.mxu0 0.0
      %6242 = vmatprep.subr.mxu0 0.0
      %6243 = vmatpush1.msra.mxu0 0.0
      %6244 = vmatprep.subr.mxu0 0.0
      %6245 = vmatpush1.msra.mxu0 0.0
      %6246 = vmatprep.subr.mxu0 0.0
      %6247 = vmatpush1.msra.mxu0 0.0
      %6248 = vmatprep.subr.mxu0 0.0
      %6249 = vmatpush1.msra.mxu0 0.0
      %6250 = vmatprep.subr.mxu0 0.0
      %6251 = vmatpush1.msra.mxu0 0.0
      %6252 = vmatprep.subr.mxu0 0.0
      %6253 = vmatpush1.msra.mxu0 0.0
      %6254 = vmatprep.subr.mxu0 0.0
      %6255 = vmatpush1.msra.mxu0 0.0
      %6256 = vmatprep.subr.mxu0 0.0
      %6257 = vmatpush1.msra.mxu0 0.0
      %6258 = vmatprep.subr.mxu0 0.0
      %6259 = vmatpush1.msra.mxu0 0.0
      %6260 = vmatprep.subr.mxu0 0.0
      %6261 = vmatpush1.msra.mxu0 0.0
      %6262 = vmatprep.subr.mxu0 0.0
      %6263 = vmatpush1.msra.mxu0 0.0
      %6264 = vmatprep.subr.mxu0 0.0
      %6265 = vmatpush1.msra.mxu0 0.0
      %6266 = vmatprep.subr.mxu0 0.0
      %6267 = vmatpush1.msra.mxu0 0.0
      %6268 = vmatprep.subr.mxu0 0.0
      %6269 = vmatpush1.msra.mxu0 0.0
      %6270 = vmatprep.subr.mxu0 0.0
      %6271 = vmatpush1.msra.mxu0 0.0
      %6272 = vmatprep.subr.mxu0 0.0
      %6273 = vmatpush1.msra.mxu0 0.0
      %6274 = vmatprep.subr.mxu0 0.0
      %6275 = vmatpush1.msra.mxu0 0.0
      %6276 = vmatprep.mubr.f32.mxu0 0.0
      %v6277 = vand.u32 %v5835, 4294901760
      %6278 = vmatmul.mubr.f32.gmra.mrb[0].mxu0 %v6277
      %v6279 = vpop.f32.mrb[0].mxu0
      %v6280 = vadd.f32 %v6189, %v6279
      %v6281 = vpop.f32.mrb[0].mxu0
      %6282 = vmatprep.mubr.f32.mxu0 0.0
      %v6283 = vand.u32 %v5837, 4294901760
      %6284 = vmatmul.mubr.f32.gmra.mrb[0].mxu0 %v6283
      %v6285 = vpop.f32.mrb[0].mxu0
      %v6286 = vadd.f32 %v6197, %v6285
      %v6287 = vpop.f32.mrb[0].mxu0
      %6288 = vdwg.mxu0
      %6289 = vmatprep.subr.mxu0 0.0
      %v6290 = vand.u32 %v5830, 4294901760
      %6291 = vmatpush1.msra.mxu0 %v6290
      %6292 = vmatprep.subr.mxu0 0.0
      %v6293 = vand.u32 %v5831, 4294901760
      %6294 = vmatpush1.msra.mxu0 %v6293
      %6295 = vmatprep.subr.mxu0 0.0
      %v6296 = vand.u32 %v5832, 4294901760
      %6297 = vmatpush1.msra.mxu0 %v6296
      %6298 = vmatprep.subr.mxu0 0.0
      %v6299 = vand.u32 %v5840, 4294901760
      %6300 = vmatpush1.msra.mxu0 %v6299
      %6301 = vmatprep.subr.mxu0 0.0
      %6302 = vmatpush1.msra.mxu0 0.0
      %6303 = vmatprep.subr.mxu0 0.0
      %6304 = vmatpush1.msra.mxu0 0.0
      %6305 = vmatprep.subr.mxu0 0.0
      %6306 = vmatpush1.msra.mxu0 0.0
      %6307 = vmatprep.subr.mxu0 0.0
      %6308 = vmatpush1.msra.mxu0 0.0
      %6309 = vmatprep.subr.mxu0 0.0
      %6310 = vmatpush1.msra.mxu0 0.0
      %6311 = vmatprep.subr.mxu0 0.0
      %6312 = vmatpush1.msra.mxu0 0.0
      %6313 = vmatprep.subr.mxu0 0.0
      %6314 = vmatpush1.msra.mxu0 0.0
      %6315 = vmatprep.subr.mxu0 0.0
      %6316 = vmatpush1.msra.mxu0 0.0
      %6317 = vmatprep.subr.mxu0 0.0
      %6318 = vmatpush1.msra.mxu0 0.0
      %6319 = vmatprep.subr.mxu0 0.0
      %6320 = vmatpush1.msra.mxu0 0.0
      %6321 = vmatprep.subr.mxu0 0.0
      %6322 = vmatpush1.msra.mxu0 0.0
      %6323 = vmatprep.subr.mxu0 0.0
      %6324 = vmatpush1.msra.mxu0 0.0
      %6325 = vmatprep.subr.mxu0 0.0
      %6326 = vmatpush1.msra.mxu0 0.0
      %6327 = vmatprep.subr.mxu0 0.0
      %6328 = vmatpush1.msra.mxu0 0.0
      %6329 = vmatprep.subr.mxu0 0.0
      %6330 = vmatpush1.msra.mxu0 0.0
      %6331 = vmatprep.subr.mxu0 0.0
      %6332 = vmatpush1.msra.mxu0 0.0
      %6333 = vmatprep.subr.mxu0 0.0
      %6334 = vmatpush1.msra.mxu0 0.0
      %6335 = vmatprep.subr.mxu0 0.0
      %6336 = vmatpush1.msra.mxu0 0.0
      %6337 = vmatprep.subr.mxu0 0.0
      %6338 = vmatpush1.msra.mxu0 0.0
      %6339 = vmatprep.subr.mxu0 0.0
      %6340 = vmatpush1.msra.mxu0 0.0
      %6341 = vmatprep.subr.mxu0 0.0
      %6342 = vmatpush1.msra.mxu0 0.0
      %6343 = vmatprep.subr.mxu0 0.0
      %6344 = vmatpush1.msra.mxu0 0.0
      %6345 = vmatprep.subr.mxu0 0.0
      %6346 = vmatpush1.msra.mxu0 0.0
      %6347 = vmatprep.subr.mxu0 0.0
      %6348 = vmatpush1.msra.mxu0 0.0
      %6349 = vmatprep.subr.mxu0 0.0
      %6350 = vmatpush1.msra.mxu0 0.0
      %6351 = vmatprep.subr.mxu0 0.0
      %6352 = vmatpush1.msra.mxu0 0.0
      %6353 = vmatprep.subr.mxu0 0.0
      %6354 = vmatpush1.msra.mxu0 0.0
      %6355 = vmatprep.subr.mxu0 0.0
      %6356 = vmatpush1.msra.mxu0 0.0
      %6357 = vmatprep.mubr.f32.mxu0 0.0
      %v6358 = vand.u32 %v5835, 4294901760
      %6359 = vmatmul.mubr.f32.gmra.mrb[0].mxu0 %v6358
      %v6360 = vpop.f32.mrb[0].mxu0
      %v6361 = vadd.f32 %v6280, %v6360
      %v6362 = vpop.f32.mrb[0].mxu0
      %6363 = vmatprep.mubr.f32.mxu0 0.0
      %v6364 = vand.u32 %v5837, 4294901760
      %6365 = vmatmul.mubr.f32.gmra.mrb[0].mxu0 %v6364
      %v6366 = vpop.f32.mrb[0].mxu0
      %v6367 = vadd.f32 %v6286, %v6366
      %v6368 = vpop.f32.mrb[0].mxu0
      %6369 = vdwg.mxu0
      %v6370 = vld [vmem:[%s7] sm:$0xff]
      %v6371 = vld [vmem:[%s7 + $0x8] sm:$0x7f]
      %v6372 = vmul.f32 %v6361, %v6370
      %v6373 = vmul.f32 %v6367, %v6371
      %v6374 = vsel %vm410, %v6373, 0.0
      %v6375 = vadd.f32 %v6372, %v6374
      %v6376 = vrot.slane %v6375, 4
      %v6377 = vadd.f32 %v6375, %v6376
      %v6378 = vrot.slane %v6377, 2
      %v6379 = vadd.f32 %v6377, %v6378
      %v6380 = vrot.slane %v6379, 1
      %v6381 = vadd.f32 %v6379, %v6380
      %6382 = vadd.xlane.f32.xlu0 %v6381
      %v6383 = vpop.xlane.xlu0 %6382
      %v6384 = vld [vmem:[#allocation2] sm:$0x1]
      %v6385 = vadd.f32 %v6383, %v6384
      %vm6386 = vcmask 0
      %6387 = vst.msk [vmem:[%s330] sm:$0x1] %vm6386, %v6385
      %p6388 = scmp.lt.s32.totalorder %s22, 1
      %s6389 = scalar_select %p6388, %s22, 1
      %s6390 = scalar_lea.vmem %s9, %s6389
      // Predicated region
      $region57: #{tpu_custom_call.1} parent=55 // pred_check
        %p6391 = pneg %p234
      $region58: #{tpu_custom_call.1} parent=55 // pred_check_branch
        %6393 = sbr.rel (%p6391) target = $region60
      $region59: #{tpu_custom_call.1} parent=55 // pred_region
        _
      $region60: #{tpu_custom_call.1} parent=55 // pred_fallthru
        _
    $region56: #{tpu_custom_call.1} parent=5 // pred_fallthru
      _
    %p6394 = scmp.le.s32.totalorder 2, %s17
    // Predicated region
    $region61: #{tpu_custom_call.1} parent=5 // pred_check
      %p6395 = pneg %p6394
    $region62: #{tpu_custom_call.1} parent=5 // pred_check_branch
      %6397 = sbr.rel (%p6395) target = $region64
    $region63: #{tpu_custom_call.1} parent=5 // pred_region
      %s6398 = ssub.s32 %s17, 2
      // Predicated region
      $region65: #{tpu_custom_call.1} parent=63 // pred_check
        %p6399 = pneg %p240
      $region66: #{tpu_custom_call.1} parent=63 // pred_check_branch
        %6401 = sbr.rel (%p6399) target = $region68
      $region67: #{tpu_custom_call.1} parent=63 // pred_region
        %p6402 = scmp.lt.s32.totalorder %s23, 1
        %s6403 = scalar_select %p6402, %s23, 1
        %s6404 = scalar_lea.vmem %s9, %s6403
      $region68: #{tpu_custom_call.1} parent=63 // pred_fallthru
        _
    $region64: #{tpu_custom_call.1} parent=5 // pred_fallthru
      _
  $region6: #{tpu_custom_call.1} parent=0 // loop_footer
    %s21 = sadd.s32 1, %s17
  $region7: #{tpu_custom_call.1} parent=0 // loop_footer_branch
    %16 = sbr.rel target = $region3
  $region8: #{tpu_custom_call.1} parent=0 // loop_exit
    _

</llo_original>
